<compile_context>
chip_gen: v6e
topology: v6e:2x2x1
jax: 0.10.0
libtpu: 0.0.40
codegen_flags: <defaults>
</compile_context>

<pallas_src>
import functools
import math

import jax
import jax.numpy as jnp
import numpy as np
from jax.experimental import pallas as pl
from jax.experimental.pallas import tpu as pltpu


_LN_EPS = 1e-6  # Annotated-Transformer LayerNorm eps.


def _layernorm(x, g, b, eps=_LN_EPS):
    mu = jnp.mean(x, axis=-1, keepdims=True)
    var = jnp.mean((x - mu) ** 2, axis=-1, keepdims=True)
    return (x - mu) * jax.lax.rsqrt(var + eps) * g + b


def _encoder_layer_kernel(
    x_ref, mask_ref, *refs,
    num_heads, apply_proj, q_tile, ffn_chunk, compute_dtype,
):
    if apply_proj:
        (ln1_g, ln1_b, wq, bq, wk, bk, wv, bv, wo, bo,
         ln2_g, ln2_b, w1, b1, w2, b2,
         o_ref, k_sc, v_sc) = refs
    else:
        (ln1_g, ln1_b, wq, bq, wk, bk, wv, bv,
         ln2_g, ln2_b, w1, b1, w2, b2,
         o_ref, k_sc, v_sc) = refs
        wo = bo = None

    H = num_heads
    _, S, D = x_ref.shape
    dh = D // H
    TQ = q_tile

    # ---- K/V cache: computed once per batch element.  The query axis is the
    # innermost ("arbitrary") grid axis, so the scratch persists across all
    # query tiles of this batch element.
    @pl.when(pl.program_id(1) == 0)
    def _compute_kv():
        xn_full = _layernorm(x_ref[0], ln1_g[...], ln1_b[...]).astype(compute_dtype)
        k = jnp.dot(xn_full, wk[...], preferred_element_type=jnp.float32) + bk[...]
        v = jnp.dot(xn_full, wv[...], preferred_element_type=jnp.float32) + bv[...]
        k_sc[...] = k.astype(compute_dtype)          # (S, D) lane-dense
        v_sc[...] = v.astype(compute_dtype)

    # ---- Query tile for this grid step, read straight from the ref.
    q_start = pl.multiple_of(pl.program_id(1) * TQ, TQ)
    x_q = x_ref[0, pl.ds(q_start, TQ), :]                         # (TQ, D) f32
    xn_q = _layernorm(x_q, ln1_g[...], ln1_b[...]).astype(compute_dtype)
    # 1/sqrt(dh) is already folded into wq / bq by the wrapper.
    q = (jnp.dot(xn_q, wq[...], preferred_element_type=jnp.float32)
         + bq[...]).astype(compute_dtype)                         # (TQ, D)

    # Additive padding mask, computed once per tile (broadcasts over rows).
    neg = jnp.where(mask_ref[0] == 0.0, jnp.float32(-1e9), jnp.float32(0.0))  # (1,S)

    # ---- Per-head attention: 2-D matmuls contracting on the last dims (no
    # 3-D relayouts); only one head's (TQ, S) logits are live at a time.
    attn_heads = []
    for h in range(H):
        sl = slice(h * dh, (h + 1) * dh)
        q_h = q[:, sl]                                            # (TQ, dh) bf16
        k_h = k_sc[:, sl]                                         # (S, dh)  bf16
        v_h = v_sc[:, sl]                                         # (S, dh)  bf16
        s = jax.lax.dot_general(q_h, k_h, (((1,), (1,)), ((), ())),
                                preferred_element_type=jnp.float32)  # (TQ, S)
        s = s + neg
        s = s - jnp.max(s, axis=-1, keepdims=True)
        p = jnp.exp(s)
        p = p * pl.reciprocal(jnp.sum(p, axis=-1, keepdims=True), approx=True)
        attn_heads.append(
            jnp.dot(p.astype(compute_dtype), v_h,
                    preferred_element_type=jnp.float32))          # (TQ, dh)
    attn = jnp.concatenate(attn_heads, axis=-1)                   # (TQ, D) f32

    if apply_proj:
        attn = jnp.dot(attn.astype(compute_dtype), wo[...],
                       preferred_element_type=jnp.float32) + bo[...]

    x1 = x_q + attn                                               # (TQ, D) f32

    # ---- sublayer 1: x1 + FFN(LayerNorm(x1)), d_ff chunked via fori_loop.
    xn2 = _layernorm(x1, ln2_g[...], ln2_b[...]).astype(compute_dtype)
    d_ff = w1.shape[1]
    if d_ff > ffn_chunk and d_ff % ffn_chunk == 0:
        def ffn_body(i, acc):
            c0 = pl.multiple_of(i * ffn_chunk, ffn_chunk)
            h1 = jnp.maximum(
                jnp.dot(xn2, w1[:, pl.ds(c0, ffn_chunk)],
                        preferred_element_type=jnp.float32)
                + b1[:, pl.ds(c0, ffn_chunk)], 0.0)
            return acc + jnp.dot(h1.astype(compute_dtype),
                                 w2[pl.ds(c0, ffn_chunk), :],
                                 preferred_element_type=jnp.float32)
        acc = jax.lax.fori_loop(0, d_ff // ffn_chunk, ffn_body,
                                jnp.zeros((TQ, D), jnp.float32))
    else:
        h1 = jnp.maximum(
            jnp.dot(xn2, w1[...], preferred_element_type=jnp.float32) + b1[...],
            0.0)
        acc = jnp.dot(h1.astype(compute_dtype), w2[...],
                      preferred_element_type=jnp.float32)
    ffn = acc + b2[...]

    o_ref[0] = (x1 + ffn).astype(o_ref.dtype)


def _vmem_capacity_bytes():
    try:
        info = pltpu.get_tpu_info()
        for name in ("vmem_capacity_bytes", "vmem_size_bytes", "vmem_bytes"):
            cap = getattr(info, name, None)
            if cap:
                return int(cap)
    except Exception:
        pass
    try:
        if "v7" in jax.devices()[0].device_kind.lower():
            return 64 * 1024 * 1024
    except Exception:
        pass
    return 128 * 1024 * 1024


def _choose_q_tile(S, *, score_budget_bytes, max_tq):
    """Largest power-of-two query tile (>=8, dividing S) whose per-head
    (TQ, S) logits (+ bf16 probs, x2 unroll-safety) fit the score budget."""
    def fits(t):
        return t * S * 6 * 2 <= score_budget_bytes
    if S <= max_tq and fits(S):
        return S
    best = None
    t = 8
    while t <= min(max_tq, S):
        if S % t == 0 and fits(t):
            best = t
        t *= 2
    # TODO(synk): fall back to a flash-style K-blocked online softmax when no
    # dividing query tile fits the score budget.
    return best if best is not None else S


def _build_call(x, mask, param_list, *, num_heads, apply_proj, TQ, ffn_chunk,
                compute_dtype, vmem_limit, single_buffer_weights):
    B, S, D = x.shape

    def weight_spec(arr):
        n = arr.ndim
        idx = lambda b, qi, _n=n: (0,) * _n
        if single_buffer_weights:
            try:
                # Grid-invariant inputs: no point double-buffering them.
                return pl.BlockSpec(arr.shape, idx, pipeline_mode=pl.Buffered(1))
            except Exception:
                pass
        return pl.BlockSpec(arr.shape, idx)

    grid_spec = pltpu.PrefetchScalarGridSpec(
        num_scalar_prefetch=0,
        grid=(B, S // TQ),
        in_specs=[pl.BlockSpec((1, S, D), lambda b, qi: (b, 0, 0)),
                  pl.BlockSpec((1, 1, S), lambda b, qi: (b, 0, 0))]
                 + [weight_spec(p) for p in param_list],
        out_specs=pl.BlockSpec((1, TQ, D), lambda b, qi: (b, qi, 0)),
        scratch_shapes=[pltpu.VMEM((S, D), compute_dtype),   # K cache
                        pltpu.VMEM((S, D), compute_dtype)])  # V cache
    kernel = functools.partial(
        _encoder_layer_kernel, num_heads=num_heads, apply_proj=apply_proj,
        q_tile=TQ, ffn_chunk=ffn_chunk, compute_dtype=compute_dtype)
    return pl.pallas_call(
        kernel,
        out_shape=jax.ShapeDtypeStruct((B, S, D), x.dtype),
        grid_spec=grid_spec,
        compiler_params=pltpu.CompilerParams(
            dimension_semantics=("parallel", "arbitrary"),
            vmem_limit_bytes=vmem_limit),
    )(x, mask, *param_list)


def encoder_layer(x, mask, params, *, num_heads, apply_proj=False,
                  compute_dtype=jnp.bfloat16, q_tile=None, d_ff_chunk=None):
    B, S, D = x.shape
    d_ff = params["w1"].shape[1]
    dh = D // num_heads

    # Generation-aware VMEM budget / tile sizing.
    cap = _vmem_capacity_bytes()
    if cap <= 64 * 1024 * 1024:            # v7x-class: 64 MiB physical VMEM
        vmem_limit = 46 * 1024 * 1024
        max_tq, default_ffn_chunk = 256, 256
        score_budget = 12 * 1024 * 1024
    else:                                   # v5e / v6e: 128 MiB physical VMEM
        vmem_limit = 96 * 1024 * 1024
        max_tq, default_ffn_chunk = 512, 512
        score_budget = 24 * 1024 * 1024

    if q_tile is None:
        TQ = _choose_q_tile(S, score_budget_bytes=score_budget, max_tq=max_tq)
    else:
        TQ = min(q_tile, S)
        if S % TQ != 0 or (TQ != S and TQ % 8 != 0):
            TQ = S

    if d_ff_chunk is None:
        d_ff_chunk = default_ffn_chunk
    ffn_chunk = min(d_ff_chunk, d_ff)
    if d_ff > ffn_chunk:
        ffn_chunk = max(128, (ffn_chunk // 128) * 128)   # 128-aligned lane slices

    # Fold the 1/sqrt(dh) softmax scale into the query projection.
    scale = 1.0 / math.sqrt(dh)
    params = dict(params)
    params["wq"] = params["wq"] * scale
    params["bq"] = params["bq"] * scale

    names = ["ln1_g", "ln1_b", "wq", "bq", "wk", "bk", "wv", "bv"]
    if apply_proj:
        names += ["wo", "bo"]
    names += ["ln2_g", "ln2_b", "w1", "b1", "w2", "b2"]
    matmul_weights = ("wq", "wk", "wv", "wo", "w1", "w2")

    def cast(name, arr):
        return arr.astype(compute_dtype if name in matmul_weights else jnp.float32)

    param_list = [cast(n, params[n]) for n in names]

    common = dict(num_heads=num_heads, apply_proj=apply_proj, TQ=TQ,
                  ffn_chunk=ffn_chunk, compute_dtype=compute_dtype,
                  vmem_limit=vmem_limit)
    try:
        return _build_call(x, mask, param_list, single_buffer_weights=True, **common)
    except Exception:
        # Fallback for Pallas versions that reject single-buffered BlockSpecs.
        return _build_call(x, mask, param_list, single_buffer_weights=False, **common)


def encoder_layer_ref(x, mask, params, *, num_heads, apply_proj=False):
    """Pure-JAX f32 reference (mirrors the PyTorch forward at eval time)."""
    def ln(t, g, b, eps=_LN_EPS):
        mu = t.mean(-1, keepdims=True)
        var = ((t - mu) ** 2).mean(-1, keepdims=True)
        return (t - mu) / jnp.sqrt(var + eps) * g + b

    B, S, D = x.shape
    dh = D // num_heads
    xn = ln(x, params["ln1_g"], params["ln1_b"])
    q = xn @ params["wq"] + params["bq"]
    k = xn @ params["wk"] + params["bk"]
    v = xn @ params["wv"] + params["bv"]

    def split(t):
        return t.reshape(B, S, num_heads, dh).transpose(0, 2, 1, 3)

    qh, kh, vh = split(q), split(k), split(v)
    s = jnp.einsum("bhqd,bhkd->bhqk", qh, kh) / math.sqrt(dh)
    s = jnp.where(mask[:, :, None, :] == 0.0, -1e9, s)
    p = jax.nn.softmax(s, axis=-1)
    o = jnp.einsum("bhqk,bhkd->bhqd", p, vh).transpose(0, 2, 1, 3).reshape(B, S, D)
    if apply_proj:
        o = o @ params["wo"] + params["bo"]
    x1 = x + o
    xn2 = ln(x1, params["ln2_g"], params["ln2_b"])
    ffn = (jnp.maximum(xn2 @ params["w1"] + params["b1"], 0.0)
           @ params["w2"] + params["b2"])
    return x1 + ffn


def init_params(key, d_model, d_ff):
    ks = jax.random.split(key, 12)
    w = lambda k, shp: 0.05 * jax.random.normal(k, shp, jnp.float32)
    return {
        "ln1_g": jnp.ones((1, d_model), jnp.float32),
        "ln1_b": jnp.zeros((1, d_model), jnp.float32),
        "wq": w(ks[0], (d_model, d_model)), "bq": w(ks[1], (1, d_model)),
        "wk": w(ks[2], (d_model, d_model)), "bk": w(ks[3], (1, d_model)),
        "wv": w(ks[4], (d_model, d_model)), "bv": w(ks[5], (1, d_model)),
        "wo": w(ks[6], (d_model, d_model)), "bo": w(ks[7], (1, d_model)),
        "ln2_g": jnp.ones((1, d_model), jnp.float32),
        "ln2_b": jnp.zeros((1, d_model), jnp.float32),
        "w1": w(ks[8], (d_model, d_ff)), "b1": w(ks[9], (1, d_ff)),
        "w2": w(ks[10], (d_ff, d_model)), "b2": w(ks[11], (1, d_model)),
    }


if __name__ == "__main__":
    key = jax.random.PRNGKey(0)

    # --- Case A: small shape, single query tile per batch element.
    B, S, D, H, DFF = 2, 8, 32, 4, 64
    kx, kp, key = jax.random.split(key, 3)
    x = jax.random.normal(kx, (B, S, D), jnp.float32)
    mask = jnp.ones((B, 1, S), jnp.float32).at[1, 0, S - 2:].set(0.0)
    params = init_params(kp, D, DFF)
    for proj in (False, True):
        out = jax.block_until_ready(
            encoder_layer(x, mask, params, num_heads=H, apply_proj=proj))
        ref = encoder_layer_ref(x, mask, params, num_heads=H, apply_proj=proj)
        np.testing.assert_allclose(np.asarray(out), np.asarray(ref),
                                   rtol=2e-2, atol=2e-2)

    # --- Case B: exercises K/V caching across query tiles (TQ < S) and the
    # chunked-FFN fori_loop path.
    B, S, D, H, DFF = 2, 16, 32, 4, 256
    kx, kp = jax.random.split(key)
    x = jax.random.normal(kx, (B, S, D), jnp.float32)
    mask = jnp.ones((B, 1, S), jnp.float32).at[0, 0, S - 3:].set(0.0)
    params = init_params(kp, D, DFF)
    out = jax.block_until_ready(
        encoder_layer(x, mask, params, num_heads=H, apply_proj=True,
                      q_tile=8, d_ff_chunk=128))
    ref = encoder_layer_ref(x, mask, params, num_heads=H, apply_proj=True)
    np.testing.assert_allclose(np.asarray(out), np.asarray(ref),
                               rtol=2e-2, atol=2e-2)

    print("KERNEL_OK")
</pallas_src>

<mosaic_0001>
module attributes {stable_mosaic.version = 11 : i64} {
  func.func @_encoder_layer_kernel(%arg0: i32, %arg1: i32, %arg2: memref<1x8x32xf32, #tpu.memory_space<vmem>>, %arg3: memref<1x1x8xf32, #tpu.memory_space<vmem>>, %arg4: memref<1x32xf32, #tpu.memory_space<vmem>>, %arg5: memref<1x32xf32, #tpu.memory_space<vmem>>, %arg6: memref<32x32xbf16, #tpu.memory_space<vmem>>, %arg7: memref<1x32xf32, #tpu.memory_space<vmem>>, %arg8: memref<32x32xbf16, #tpu.memory_space<vmem>>, %arg9: memref<1x32xf32, #tpu.memory_space<vmem>>, %arg10: memref<32x32xbf16, #tpu.memory_space<vmem>>, %arg11: memref<1x32xf32, #tpu.memory_space<vmem>>, %arg12: memref<1x32xf32, #tpu.memory_space<vmem>>, %arg13: memref<1x32xf32, #tpu.memory_space<vmem>>, %arg14: memref<32x64xbf16, #tpu.memory_space<vmem>>, %arg15: memref<1x64xf32, #tpu.memory_space<vmem>>, %arg16: memref<64x32xbf16, #tpu.memory_space<vmem>>, %arg17: memref<1x32xf32, #tpu.memory_space<vmem>>, %arg18: memref<1x8x32xf32, #tpu.memory_space<vmem>>, %arg19: memref<8x32xbf16, #tpu.memory_space<vmem>>, %arg20: memref<8x32xbf16, #tpu.memory_space<vmem>>) attributes {dimension_semantics = [#tpu.dimension_semantics<parallel>, #tpu.dimension_semantics<arbitrary>], iteration_bounds = array<i64: 2, 1>, scalar_prefetch = 0 : i64, scratch_operands = 2 : i64, tpu.core_type = #tpu.core_type<tc>, window_params = [{transform_indices = @transform_0, window_bounds = array<i64: 1, 8, 32>}, {transform_indices = @transform_1, window_bounds = array<i64: 1, 1, 8>}, {pipeline_mode = #tpu.pipeline_mode<synchronous>, transform_indices = @transform_2, window_bounds = array<i64: 1, 32>}, {pipeline_mode = #tpu.pipeline_mode<synchronous>, transform_indices = @transform_3, window_bounds = array<i64: 1, 32>}, {pipeline_mode = #tpu.pipeline_mode<synchronous>, transform_indices = @transform_4, window_bounds = array<i64: 32, 32>}, {pipeline_mode = #tpu.pipeline_mode<synchronous>, transform_indices = @transform_5, window_bounds = array<i64: 1, 32>}, {pipeline_mode = #tpu.pipeline_mode<synchronous>, transform_indices = @transform_6, window_bounds = array<i64: 32, 32>}, {pipeline_mode = #tpu.pipeline_mode<synchronous>, transform_indices = @transform_7, window_bounds = array<i64: 1, 32>}, {pipeline_mode = #tpu.pipeline_mode<synchronous>, transform_indices = @transform_8, window_bounds = array<i64: 32, 32>}, {pipeline_mode = #tpu.pipeline_mode<synchronous>, transform_indices = @transform_9, window_bounds = array<i64: 1, 32>}, {pipeline_mode = #tpu.pipeline_mode<synchronous>, transform_indices = @transform_10, window_bounds = array<i64: 1, 32>}, {pipeline_mode = #tpu.pipeline_mode<synchronous>, transform_indices = @transform_11, window_bounds = array<i64: 1, 32>}, {pipeline_mode = #tpu.pipeline_mode<synchronous>, transform_indices = @transform_12, window_bounds = array<i64: 32, 64>}, {pipeline_mode = #tpu.pipeline_mode<synchronous>, transform_indices = @transform_13, window_bounds = array<i64: 1, 64>}, {pipeline_mode = #tpu.pipeline_mode<synchronous>, transform_indices = @transform_14, window_bounds = array<i64: 64, 32>}, {pipeline_mode = #tpu.pipeline_mode<synchronous>, transform_indices = @transform_15, window_bounds = array<i64: 1, 32>}, {transform_indices = @transform_16, window_bounds = array<i64: 1, 8, 32>}]} {
    %c0_i32 = arith.constant 0 : i32
    %0 = arith.cmpi eq, %arg1, %c0_i32 : i32
    %1 = arith.extui %0 : i1 to i32
    %c0_i32_0 = arith.constant 0 : i32
    %2 = arith.cmpi ne, %1, %c0_i32_0 : i32
    scf.if %2 {
      %c0_73 = arith.constant 0 : index
      %c0_74 = arith.constant 0 : index
      %c0_75 = arith.constant 0 : index
      %162 = vector.load %arg2[%c0_73, %c0_74, %c0_75] : memref<1x8x32xf32, #tpu.memory_space<vmem>>, vector<1x8x32xf32>
      %163 = vector.shape_cast %162 : vector<1x8x32xf32> to vector<8x32xf32>
      %c0_76 = arith.constant 0 : index
      %c0_77 = arith.constant 0 : index
      %164 = vector.load %arg4[%c0_76, %c0_77] : memref<1x32xf32, #tpu.memory_space<vmem>>, vector<1x32xf32>
      %c0_78 = arith.constant 0 : index
      %c0_79 = arith.constant 0 : index
      %165 = vector.load %arg5[%c0_78, %c0_79] : memref<1x32xf32, #tpu.memory_space<vmem>>, vector<1x32xf32>
      %cst_80 = arith.constant dense<0.000000e+00> : vector<8xf32>
      %166 = vector.multi_reduction <add>, %163, %cst_80 [1] : vector<8x32xf32> to vector<8xf32>
      %167 = vector.shape_cast %166 : vector<8xf32> to vector<8x1xf32>
      %cst_81 = arith.constant 3.200000e+01 : f32
      %168 = vector.broadcast %cst_81 : f32 to vector<8x1xf32>
      %169 = arith.divf %167, %168 : vector<8x1xf32>
      %170 = vector.broadcast %169 : vector<8x1xf32> to vector<8x32xf32>
      %171 = arith.subf %163, %170 : vector<8x32xf32>
      %172 = arith.mulf %171, %171 : vector<8x32xf32>
      %cst_82 = arith.constant dense<0.000000e+00> : vector<8xf32>
      %173 = vector.multi_reduction <add>, %172, %cst_82 [1] : vector<8x32xf32> to vector<8xf32>
      %174 = vector.shape_cast %173 : vector<8xf32> to vector<8x1xf32>
      %cst_83 = arith.constant 3.200000e+01 : f32
      %175 = vector.broadcast %cst_83 : f32 to vector<8x1xf32>
      %176 = arith.divf %174, %175 : vector<8x1xf32>
      %177 = vector.broadcast %169 : vector<8x1xf32> to vector<8x32xf32>
      %178 = arith.subf %163, %177 : vector<8x32xf32>
      %cst_84 = arith.constant 9.99999997E-7 : f32
      %179 = vector.broadcast %cst_84 : f32 to vector<8x1xf32>
      %180 = arith.addf %176, %179 : vector<8x1xf32>
      %181 = math.rsqrt %180 : vector<8x1xf32>
      %182 = vector.broadcast %181 : vector<8x1xf32> to vector<8x32xf32>
      %183 = arith.mulf %178, %182 : vector<8x32xf32>
      %184 = vector.broadcast %164 : vector<1x32xf32> to vector<8x32xf32>
      %185 = arith.mulf %183, %184 : vector<8x32xf32>
      %186 = vector.broadcast %165 : vector<1x32xf32> to vector<8x32xf32>
      %187 = arith.addf %185, %186 : vector<8x32xf32>
      %188 = arith.truncf %187 : vector<8x32xf32> to vector<8x32xbf16>
      %c0_85 = arith.constant 0 : index
      %c0_86 = arith.constant 0 : index
      %189 = vector.load %arg8[%c0_85, %c0_86] : memref<32x32xbf16, #tpu.memory_space<vmem>>, vector<32x32xbf16>
      %cst_87 = arith.constant dense<0.000000e+00> : vector<8x32xf32>
      %190 = tpu.matmul %188, %189, %cst_87 {dimension_numbers = #tpu.dot_dimension_numbers<[1], [0], [0], [1], [0, 0, 1, 1], [], []>} : vector<8x32xbf16>, vector<32x32xbf16>, vector<8x32xf32> -> vector<8x32xf32>
      %c0_88 = arith.constant 0 : index
      %c0_89 = arith.constant 0 : index
      %191 = vector.load %arg9[%c0_88, %c0_89] : memref<1x32xf32, #tpu.memory_space<vmem>>, vector<1x32xf32>
      %192 = vector.broadcast %191 : vector<1x32xf32> to vector<8x32xf32>
      %193 = arith.addf %190, %192 : vector<8x32xf32>
      %c0_90 = arith.constant 0 : index
      %c0_91 = arith.constant 0 : index
      %194 = vector.load %arg10[%c0_90, %c0_91] : memref<32x32xbf16, #tpu.memory_space<vmem>>, vector<32x32xbf16>
      %cst_92 = arith.constant dense<0.000000e+00> : vector<8x32xf32>
      %195 = tpu.matmul %188, %194, %cst_92 {dimension_numbers = #tpu.dot_dimension_numbers<[1], [0], [0], [1], [0, 0, 1, 1], [], []>} : vector<8x32xbf16>, vector<32x32xbf16>, vector<8x32xf32> -> vector<8x32xf32>
      %c0_93 = arith.constant 0 : index
      %c0_94 = arith.constant 0 : index
      %196 = vector.load %arg11[%c0_93, %c0_94] : memref<1x32xf32, #tpu.memory_space<vmem>>, vector<1x32xf32>
      %197 = vector.broadcast %196 : vector<1x32xf32> to vector<8x32xf32>
      %198 = arith.addf %195, %197 : vector<8x32xf32>
      %199 = arith.truncf %193 : vector<8x32xf32> to vector<8x32xbf16>
      %c0_95 = arith.constant 0 : index
      %c0_96 = arith.constant 0 : index
      %200 = vector.load %arg19[%c0_95, %c0_96] : memref<8x32xbf16, #tpu.memory_space<vmem>>, vector<8x32xbf16>
      tpu.vector_store %arg19[%c0_95, %c0_96], %199 {strides = array<i32>} : memref<8x32xbf16, #tpu.memory_space<vmem>>, vector<8x32xbf16>,
      %201 = arith.truncf %198 : vector<8x32xf32> to vector<8x32xbf16>
      %c0_97 = arith.constant 0 : index
      %c0_98 = arith.constant 0 : index
      %202 = vector.load %arg20[%c0_97, %c0_98] : memref<8x32xbf16, #tpu.memory_space<vmem>>, vector<8x32xbf16>
      tpu.vector_store %arg20[%c0_97, %c0_98], %201 {strides = array<i32>} : memref<8x32xbf16, #tpu.memory_space<vmem>>, vector<8x32xbf16>,
    } else {
    }
    %c8_i32 = arith.constant 8 : i32
    %3 = arith.muli %arg1, %c8_i32 : i32
    %4 = tpu.assume_multiple %3, 8 : i32
    %c0 = arith.constant 0 : index
    %5 = arith.index_cast %4 : i32 to index
    %c0_1 = arith.constant 0 : index
    %6 = vector.load %arg2[%c0, %5, %c0_1] : memref<1x8x32xf32, #tpu.memory_space<vmem>>, vector<1x8x32xf32>
    %7 = vector.shape_cast %6 : vector<1x8x32xf32> to vector<8x32xf32>
    %c0_2 = arith.constant 0 : index
    %c0_3 = arith.constant 0 : index
    %8 = vector.load %arg4[%c0_2, %c0_3] : memref<1x32xf32, #tpu.memory_space<vmem>>, vector<1x32xf32>
    %c0_4 = arith.constant 0 : index
    %c0_5 = arith.constant 0 : index
    %9 = vector.load %arg5[%c0_4, %c0_5] : memref<1x32xf32, #tpu.memory_space<vmem>>, vector<1x32xf32>
    %cst = arith.constant dense<0.000000e+00> : vector<8xf32>
    %10 = vector.multi_reduction <add>, %7, %cst [1] : vector<8x32xf32> to vector<8xf32>
    %11 = vector.shape_cast %10 : vector<8xf32> to vector<8x1xf32>
    %cst_6 = arith.constant 3.200000e+01 : f32
    %12 = vector.broadcast %cst_6 : f32 to vector<8x1xf32>
    %13 = arith.divf %11, %12 : vector<8x1xf32>
    %14 = vector.broadcast %13 : vector<8x1xf32> to vector<8x32xf32>
    %15 = arith.subf %7, %14 : vector<8x32xf32>
    %16 = arith.mulf %15, %15 : vector<8x32xf32>
    %cst_7 = arith.constant dense<0.000000e+00> : vector<8xf32>
    %17 = vector.multi_reduction <add>, %16, %cst_7 [1] : vector<8x32xf32> to vector<8xf32>
    %18 = vector.shape_cast %17 : vector<8xf32> to vector<8x1xf32>
    %cst_8 = arith.constant 3.200000e+01 : f32
    %19 = vector.broadcast %cst_8 : f32 to vector<8x1xf32>
    %20 = arith.divf %18, %19 : vector<8x1xf32>
    %21 = vector.broadcast %13 : vector<8x1xf32> to vector<8x32xf32>
    %22 = arith.subf %7, %21 : vector<8x32xf32>
    %cst_9 = arith.constant 9.99999997E-7 : f32
    %23 = vector.broadcast %cst_9 : f32 to vector<8x1xf32>
    %24 = arith.addf %20, %23 : vector<8x1xf32>
    %25 = math.rsqrt %24 : vector<8x1xf32>
    %26 = vector.broadcast %25 : vector<8x1xf32> to vector<8x32xf32>
    %27 = arith.mulf %22, %26 : vector<8x32xf32>
    %28 = vector.broadcast %8 : vector<1x32xf32> to vector<8x32xf32>
    %29 = arith.mulf %27, %28 : vector<8x32xf32>
    %30 = vector.broadcast %9 : vector<1x32xf32> to vector<8x32xf32>
    %31 = arith.addf %29, %30 : vector<8x32xf32>
    %32 = arith.truncf %31 : vector<8x32xf32> to vector<8x32xbf16>
    %c0_10 = arith.constant 0 : index
    %c0_11 = arith.constant 0 : index
    %33 = vector.load %arg6[%c0_10, %c0_11] : memref<32x32xbf16, #tpu.memory_space<vmem>>, vector<32x32xbf16>
    %cst_12 = arith.constant dense<0.000000e+00> : vector<8x32xf32>
    %34 = tpu.matmul %32, %33, %cst_12 {dimension_numbers = #tpu.dot_dimension_numbers<[1], [0], [0], [1], [0, 0, 1, 1], [], []>} : vector<8x32xbf16>, vector<32x32xbf16>, vector<8x32xf32> -> vector<8x32xf32>
    %c0_13 = arith.constant 0 : index
    %c0_14 = arith.constant 0 : index
    %35 = vector.load %arg7[%c0_13, %c0_14] : memref<1x32xf32, #tpu.memory_space<vmem>>, vector<1x32xf32>
    %36 = vector.broadcast %35 : vector<1x32xf32> to vector<8x32xf32>
    %37 = arith.addf %34, %36 : vector<8x32xf32>
    %38 = arith.truncf %37 : vector<8x32xf32> to vector<8x32xbf16>
    %c0_15 = arith.constant 0 : index
    %c0_16 = arith.constant 0 : index
    %c0_17 = arith.constant 0 : index
    %39 = vector.load %arg3[%c0_15, %c0_16, %c0_17] : memref<1x1x8xf32, #tpu.memory_space<vmem>>, vector<1x1x8xf32>
    %40 = vector.shape_cast %39 : vector<1x1x8xf32> to vector<1x8xf32>
    %cst_18 = arith.constant 0.000000e+00 : f32
    %41 = vector.broadcast %cst_18 : f32 to vector<1x8xf32>
    %42 = arith.cmpf oeq, %40, %41 : vector<1x8xf32>
    %cst_19 = arith.constant -1.000000e+09 : f32
    %cst_20 = arith.constant 0.000000e+00 : f32
    %43 = vector.broadcast %cst_19 : f32 to vector<1x8xf32>
    %44 = vector.broadcast %cst_20 : f32 to vector<1x8xf32>
    %45 = arith.select %42, %43, %44 : vector<1x8xi1>, vector<1x8xf32>
    %46 = vector.extract_strided_slice %38 {offsets = [0, 0], sizes = [8, 8], strides = [1, 1]} : vector<8x32xbf16> to vector<8x8xbf16>
    %c0_21 = arith.constant 0 : index
    %c0_22 = arith.constant 0 : index
    %47 = vector.load %arg19[%c0_21, %c0_22] : memref<8x32xbf16, #tpu.memory_space<vmem>>, vector<8x8xbf16>
    %c0_23 = arith.constant 0 : index
    %c0_24 = arith.constant 0 : index
    %48 = vector.load %arg20[%c0_23, %c0_24] : memref<8x32xbf16, #tpu.memory_space<vmem>>, vector<8x8xbf16>
    %cst_25 = arith.constant dense<0.000000e+00> : vector<8x8xf32>
    %49 = tpu.matmul %46, %47, %cst_25 {dimension_numbers = #tpu.dot_dimension_numbers<[1], [1], [0], [0], [0, 0, 1, 0], [], []>} : vector<8x8xbf16>, vector<8x8xbf16>, vector<8x8xf32> -> vector<8x8xf32>
    %50 = vector.broadcast %45 : vector<1x8xf32> to vector<8x8xf32>
    %51 = arith.addf %49, %50 : vector<8x8xf32>
    %cst_26 = arith.constant dense<0xFF800000> : vector<8xf32>
    %52 = vector.multi_reduction <maximumf>, %51, %cst_26 [1] : vector<8x8xf32> to vector<8xf32>
    %53 = vector.shape_cast %52 : vector<8xf32> to vector<8x1xf32>
    %54 = vector.broadcast %53 : vector<8x1xf32> to vector<8x8xf32>
    %55 = arith.subf %51, %54 : vector<8x8xf32>
    %56 = math.exp %55 : vector<8x8xf32>
    %cst_27 = arith.constant dense<0.000000e+00> : vector<8xf32>
    %57 = vector.multi_reduction <add>, %56, %cst_27 [1] : vector<8x8xf32> to vector<8xf32>
    %58 = vector.shape_cast %57 : vector<8xf32> to vector<8x1xf32>
    %59 = tpu.reciprocal %58 {approx = true} : vector<8x1xf32> -> vector<8x1xf32>
    %60 = vector.broadcast %59 : vector<8x1xf32> to vector<8x8xf32>
    %61 = arith.mulf %56, %60 : vector<8x8xf32>
    %62 = arith.truncf %61 : vector<8x8xf32> to vector<8x8xbf16>
    %cst_28 = arith.constant dense<0.000000e+00> : vector<8x8xf32>
    %63 = tpu.matmul %62, %48, %cst_28 {dimension_numbers = #tpu.dot_dimension_numbers<[1], [0], [0], [1], [0, 0, 1, 1], [], []>} : vector<8x8xbf16>, vector<8x8xbf16>, vector<8x8xf32> -> vector<8x8xf32>
    %64 = vector.extract_strided_slice %38 {offsets = [0, 8], sizes = [8, 8], strides = [1, 1]} : vector<8x32xbf16> to vector<8x8xbf16>
    %c0_29 = arith.constant 0 : index
    %c8 = arith.constant 8 : index
    %65 = vector.load %arg19[%c0_29, %c8] : memref<8x32xbf16, #tpu.memory_space<vmem>>, vector<8x8xbf16>
    %c0_30 = arith.constant 0 : index
    %c8_31 = arith.constant 8 : index
    %66 = vector.load %arg20[%c0_30, %c8_31] : memref<8x32xbf16, #tpu.memory_space<vmem>>, vector<8x8xbf16>
    %cst_32 = arith.constant dense<0.000000e+00> : vector<8x8xf32>
    %67 = tpu.matmul %64, %65, %cst_32 {dimension_numbers = #tpu.dot_dimension_numbers<[1], [1], [0], [0], [0, 0, 1, 0], [], []>} : vector<8x8xbf16>, vector<8x8xbf16>, vector<8x8xf32> -> vector<8x8xf32>
    %68 = vector.broadcast %45 : vector<1x8xf32> to vector<8x8xf32>
    %69 = arith.addf %67, %68 : vector<8x8xf32>
    %cst_33 = arith.constant dense<0xFF800000> : vector<8xf32>
    %70 = vector.multi_reduction <maximumf>, %69, %cst_33 [1] : vector<8x8xf32> to vector<8xf32>
    %71 = vector.shape_cast %70 : vector<8xf32> to vector<8x1xf32>
    %72 = vector.broadcast %71 : vector<8x1xf32> to vector<8x8xf32>
    %73 = arith.subf %69, %72 : vector<8x8xf32>
    %74 = math.exp %73 : vector<8x8xf32>
    %cst_34 = arith.constant dense<0.000000e+00> : vector<8xf32>
    %75 = vector.multi_reduction <add>, %74, %cst_34 [1] : vector<8x8xf32> to vector<8xf32>
    %76 = vector.shape_cast %75 : vector<8xf32> to vector<8x1xf32>
    %77 = tpu.reciprocal %76 {approx = true} : vector<8x1xf32> -> vector<8x1xf32>
    %78 = vector.broadcast %77 : vector<8x1xf32> to vector<8x8xf32>
    %79 = arith.mulf %74, %78 : vector<8x8xf32>
    %80 = arith.truncf %79 : vector<8x8xf32> to vector<8x8xbf16>
    %cst_35 = arith.constant dense<0.000000e+00> : vector<8x8xf32>
    %81 = tpu.matmul %80, %66, %cst_35 {dimension_numbers = #tpu.dot_dimension_numbers<[1], [0], [0], [1], [0, 0, 1, 1], [], []>} : vector<8x8xbf16>, vector<8x8xbf16>, vector<8x8xf32> -> vector<8x8xf32>
    %82 = vector.extract_strided_slice %38 {offsets = [0, 16], sizes = [8, 8], strides = [1, 1]} : vector<8x32xbf16> to vector<8x8xbf16>
    %c0_36 = arith.constant 0 : index
    %c16 = arith.constant 16 : index
    %83 = vector.load %arg19[%c0_36, %c16] : memref<8x32xbf16, #tpu.memory_space<vmem>>, vector<8x8xbf16>
    %c0_37 = arith.constant 0 : index
    %c16_38 = arith.constant 16 : index
    %84 = vector.load %arg20[%c0_37, %c16_38] : memref<8x32xbf16, #tpu.memory_space<vmem>>, vector<8x8xbf16>
    %cst_39 = arith.constant dense<0.000000e+00> : vector<8x8xf32>
    %85 = tpu.matmul %82, %83, %cst_39 {dimension_numbers = #tpu.dot_dimension_numbers<[1], [1], [0], [0], [0, 0, 1, 0], [], []>} : vector<8x8xbf16>, vector<8x8xbf16>, vector<8x8xf32> -> vector<8x8xf32>
    %86 = vector.broadcast %45 : vector<1x8xf32> to vector<8x8xf32>
    %87 = arith.addf %85, %86 : vector<8x8xf32>
    %cst_40 = arith.constant dense<0xFF800000> : vector<8xf32>
    %88 = vector.multi_reduction <maximumf>, %87, %cst_40 [1] : vector<8x8xf32> to vector<8xf32>
    %89 = vector.shape_cast %88 : vector<8xf32> to vector<8x1xf32>
    %90 = vector.broadcast %89 : vector<8x1xf32> to vector<8x8xf32>
    %91 = arith.subf %87, %90 : vector<8x8xf32>
    %92 = math.exp %91 : vector<8x8xf32>
    %cst_41 = arith.constant dense<0.000000e+00> : vector<8xf32>
    %93 = vector.multi_reduction <add>, %92, %cst_41 [1] : vector<8x8xf32> to vector<8xf32>
    %94 = vector.shape_cast %93 : vector<8xf32> to vector<8x1xf32>
    %95 = tpu.reciprocal %94 {approx = true} : vector<8x1xf32> -> vector<8x1xf32>
    %96 = vector.broadcast %95 : vector<8x1xf32> to vector<8x8xf32>
    %97 = arith.mulf %92, %96 : vector<8x8xf32>
    %98 = arith.truncf %97 : vector<8x8xf32> to vector<8x8xbf16>
    %cst_42 = arith.constant dense<0.000000e+00> : vector<8x8xf32>
    %99 = tpu.matmul %98, %84, %cst_42 {dimension_numbers = #tpu.dot_dimension_numbers<[1], [0], [0], [1], [0, 0, 1, 1], [], []>} : vector<8x8xbf16>, vector<8x8xbf16>, vector<8x8xf32> -> vector<8x8xf32>
    %100 = vector.extract_strided_slice %38 {offsets = [0, 24], sizes = [8, 8], strides = [1, 1]} : vector<8x32xbf16> to vector<8x8xbf16>
    %c0_43 = arith.constant 0 : index
    %c24 = arith.constant 24 : index
    %101 = vector.load %arg19[%c0_43, %c24] : memref<8x32xbf16, #tpu.memory_space<vmem>>, vector<8x8xbf16>
    %c0_44 = arith.constant 0 : index
    %c24_45 = arith.constant 24 : index
    %102 = vector.load %arg20[%c0_44, %c24_45] : memref<8x32xbf16, #tpu.memory_space<vmem>>, vector<8x8xbf16>
    %cst_46 = arith.constant dense<0.000000e+00> : vector<8x8xf32>
    %103 = tpu.matmul %100, %101, %cst_46 {dimension_numbers = #tpu.dot_dimension_numbers<[1], [1], [0], [0], [0, 0, 1, 0], [], []>} : vector<8x8xbf16>, vector<8x8xbf16>, vector<8x8xf32> -> vector<8x8xf32>
    %104 = vector.broadcast %45 : vector<1x8xf32> to vector<8x8xf32>
    %105 = arith.addf %103, %104 : vector<8x8xf32>
    %cst_47 = arith.constant dense<0xFF800000> : vector<8xf32>
    %106 = vector.multi_reduction <maximumf>, %105, %cst_47 [1] : vector<8x8xf32> to vector<8xf32>
    %107 = vector.shape_cast %106 : vector<8xf32> to vector<8x1xf32>
    %108 = vector.broadcast %107 : vector<8x1xf32> to vector<8x8xf32>
    %109 = arith.subf %105, %108 : vector<8x8xf32>
    %110 = math.exp %109 : vector<8x8xf32>
    %cst_48 = arith.constant dense<0.000000e+00> : vector<8xf32>
    %111 = vector.multi_reduction <add>, %110, %cst_48 [1] : vector<8x8xf32> to vector<8xf32>
    %112 = vector.shape_cast %111 : vector<8xf32> to vector<8x1xf32>
    %113 = tpu.reciprocal %112 {approx = true} : vector<8x1xf32> -> vector<8x1xf32>
    %114 = vector.broadcast %113 : vector<8x1xf32> to vector<8x8xf32>
    %115 = arith.mulf %110, %114 : vector<8x8xf32>
    %116 = arith.truncf %115 : vector<8x8xf32> to vector<8x8xbf16>
    %cst_49 = arith.constant dense<0.000000e+00> : vector<8x8xf32>
    %117 = tpu.matmul %116, %102, %cst_49 {dimension_numbers = #tpu.dot_dimension_numbers<[1], [0], [0], [1], [0, 0, 1, 1], [], []>} : vector<8x8xbf16>, vector<8x8xbf16>, vector<8x8xf32> -> vector<8x8xf32>
    %118 = tpu.concatenate %63, %81, %99, %117 in 1 : vector<8x8xf32>, vector<8x8xf32>, vector<8x8xf32>, vector<8x8xf32> -> vector<8x32xf32>
    %119 = arith.addf %7, %118 : vector<8x32xf32>
    %c0_50 = arith.constant 0 : index
    %c0_51 = arith.constant 0 : index
    %120 = vector.load %arg12[%c0_50, %c0_51] : memref<1x32xf32, #tpu.memory_space<vmem>>, vector<1x32xf32>
    %c0_52 = arith.constant 0 : index
    %c0_53 = arith.constant 0 : index
    %121 = vector.load %arg13[%c0_52, %c0_53] : memref<1x32xf32, #tpu.memory_space<vmem>>, vector<1x32xf32>
    %cst_54 = arith.constant dense<0.000000e+00> : vector<8xf32>
    %122 = vector.multi_reduction <add>, %119, %cst_54 [1] : vector<8x32xf32> to vector<8xf32>
    %123 = vector.shape_cast %122 : vector<8xf32> to vector<8x1xf32>
    %cst_55 = arith.constant 3.200000e+01 : f32
    %124 = vector.broadcast %cst_55 : f32 to vector<8x1xf32>
    %125 = arith.divf %123, %124 : vector<8x1xf32>
    %126 = vector.broadcast %125 : vector<8x1xf32> to vector<8x32xf32>
    %127 = arith.subf %119, %126 : vector<8x32xf32>
    %128 = arith.mulf %127, %127 : vector<8x32xf32>
    %cst_56 = arith.constant dense<0.000000e+00> : vector<8xf32>
    %129 = vector.multi_reduction <add>, %128, %cst_56 [1] : vector<8x32xf32> to vector<8xf32>
    %130 = vector.shape_cast %129 : vector<8xf32> to vector<8x1xf32>
    %cst_57 = arith.constant 3.200000e+01 : f32
    %131 = vector.broadcast %cst_57 : f32 to vector<8x1xf32>
    %132 = arith.divf %130, %131 : vector<8x1xf32>
    %133 = vector.broadcast %125 : vector<8x1xf32> to vector<8x32xf32>
    %134 = arith.subf %119, %133 : vector<8x32xf32>
    %cst_58 = arith.constant 9.99999997E-7 : f32
    %135 = vector.broadcast %cst_58 : f32 to vector<8x1xf32>
    %136 = arith.addf %132, %135 : vector<8x1xf32>
    %137 = math.rsqrt %136 : vector<8x1xf32>
    %138 = vector.broadcast %137 : vector<8x1xf32> to vector<8x32xf32>
    %139 = arith.mulf %134, %138 : vector<8x32xf32>
    %140 = vector.broadcast %120 : vector<1x32xf32> to vector<8x32xf32>
    %141 = arith.mulf %139, %140 : vector<8x32xf32>
    %142 = vector.broadcast %121 : vector<1x32xf32> to vector<8x32xf32>
    %143 = arith.addf %141, %142 : vector<8x32xf32>
    %144 = arith.truncf %143 : vector<8x32xf32> to vector<8x32xbf16>
    %c0_59 = arith.constant 0 : index
    %c0_60 = arith.constant 0 : index
    %145 = vector.load %arg14[%c0_59, %c0_60] : memref<32x64xbf16, #tpu.memory_space<vmem>>, vector<32x64xbf16>
    %cst_61 = arith.constant dense<0.000000e+00> : vector<8x64xf32>
    %146 = tpu.matmul %144, %145, %cst_61 {dimension_numbers = #tpu.dot_dimension_numbers<[1], [0], [0], [1], [0, 0, 1, 1], [], []>} : vector<8x32xbf16>, vector<32x64xbf16>, vector<8x64xf32> -> vector<8x64xf32>
    %c0_62 = arith.constant 0 : index
    %c0_63 = arith.constant 0 : index
    %147 = vector.load %arg15[%c0_62, %c0_63] : memref<1x64xf32, #tpu.memory_space<vmem>>, vector<1x64xf32>
    %148 = vector.broadcast %147 : vector<1x64xf32> to vector<8x64xf32>
    %149 = arith.addf %146, %148 : vector<8x64xf32>
    %cst_64 = arith.constant 0.000000e+00 : f32
    %150 = vector.broadcast %cst_64 : f32 to vector<8x64xf32>
    %151 = arith.maximumf %149, %150 : vector<8x64xf32>
    %152 = arith.truncf %151 : vector<8x64xf32> to vector<8x64xbf16>
    %c0_65 = arith.constant 0 : index
    %c0_66 = arith.constant 0 : index
    %153 = vector.load %arg16[%c0_65, %c0_66] : memref<64x32xbf16, #tpu.memory_space<vmem>>, vector<64x32xbf16>
    %cst_67 = arith.constant dense<0.000000e+00> : vector<8x32xf32>
    %154 = tpu.matmul %152, %153, %cst_67 {dimension_numbers = #tpu.dot_dimension_numbers<[1], [0], [0], [1], [0, 0, 1, 1], [], []>} : vector<8x64xbf16>, vector<64x32xbf16>, vector<8x32xf32> -> vector<8x32xf32>
    %c0_68 = arith.constant 0 : index
    %c0_69 = arith.constant 0 : index
    %155 = vector.load %arg17[%c0_68, %c0_69] : memref<1x32xf32, #tpu.memory_space<vmem>>, vector<1x32xf32>
    %156 = vector.broadcast %155 : vector<1x32xf32> to vector<8x32xf32>
    %157 = arith.addf %154, %156 : vector<8x32xf32>
    %158 = arith.addf %119, %157 : vector<8x32xf32>
    %c0_70 = arith.constant 0 : index
    %c0_71 = arith.constant 0 : index
    %c0_72 = arith.constant 0 : index
    %159 = vector.load %arg18[%c0_70, %c0_71, %c0_72] : memref<1x8x32xf32, #tpu.memory_space<vmem>>, vector<1x8x32xf32>
    %160 = vector.shape_cast %159 : vector<1x8x32xf32> to vector<8x32xf32>
    %161 = vector.shape_cast %158 : vector<8x32xf32> to vector<1x8x32xf32>
    tpu.vector_store %arg18[%c0_70, %c0_71, %c0_72], %161 {strides = array<i32>} : memref<1x8x32xf32, #tpu.memory_space<vmem>>, vector<1x8x32xf32>,
    return
  }
  func.func @transform_0(%arg0: i32, %arg1: i32) -> (i32, i32, i32) {
    %c0_i32 = arith.constant 0 : i32
    %c0_i32_0 = arith.constant 0 : i32
    %c0_i32_1 = arith.constant 0 : i32
    return %arg0, %c0_i32, %c0_i32_0 : i32, i32, i32
  }
  func.func @transform_1(%arg0: i32, %arg1: i32) -> (i32, i32, i32) {
    %c0_i32 = arith.constant 0 : i32
    %c0_i32_0 = arith.constant 0 : i32
    %c0_i32_1 = arith.constant 0 : i32
    return %arg0, %c0_i32, %c0_i32_0 : i32, i32, i32
  }
  func.func @transform_2(%arg0: i32, %arg1: i32) -> (i32, i32) {
    %c0_i32 = arith.constant 0 : i32
    %c0_i32_0 = arith.constant 0 : i32
    %c0_i32_1 = arith.constant 0 : i32
    return %c0_i32, %c0_i32_0 : i32, i32
  }
  func.func @transform_3(%arg0: i32, %arg1: i32) -> (i32, i32) {
    %c0_i32 = arith.constant 0 : i32
    %c0_i32_0 = arith.constant 0 : i32
    %c0_i32_1 = arith.constant 0 : i32
    return %c0_i32, %c0_i32_0 : i32, i32
  }
  func.func @transform_4(%arg0: i32, %arg1: i32) -> (i32, i32) {
    %c0_i32 = arith.constant 0 : i32
    %c0_i32_0 = arith.constant 0 : i32
    %c0_i32_1 = arith.constant 0 : i32
    return %c0_i32, %c0_i32_0 : i32, i32
  }
  func.func @transform_5(%arg0: i32, %arg1: i32) -> (i32, i32) {
    %c0_i32 = arith.constant 0 : i32
    %c0_i32_0 = arith.constant 0 : i32
    %c0_i32_1 = arith.constant 0 : i32
    return %c0_i32, %c0_i32_0 : i32, i32
  }
  func.func @transform_6(%arg0: i32, %arg1: i32) -> (i32, i32) {
    %c0_i32 = arith.constant 0 : i32
    %c0_i32_0 = arith.constant 0 : i32
    %c0_i32_1 = arith.constant 0 : i32
    return %c0_i32, %c0_i32_0 : i32, i32
  }
  func.func @transform_7(%arg0: i32, %arg1: i32) -> (i32, i32) {
    %c0_i32 = arith.constant 0 : i32
    %c0_i32_0 = arith.constant 0 : i32
    %c0_i32_1 = arith.constant 0 : i32
    return %c0_i32, %c0_i32_0 : i32, i32
  }
  func.func @transform_8(%arg0: i32, %arg1: i32) -> (i32, i32) {
    %c0_i32 = arith.constant 0 : i32
    %c0_i32_0 = arith.constant 0 : i32
    %c0_i32_1 = arith.constant 0 : i32
    return %c0_i32, %c0_i32_0 : i32, i32
  }
  func.func @transform_9(%arg0: i32, %arg1: i32) -> (i32, i32) {
    %c0_i32 = arith.constant 0 : i32
    %c0_i32_0 = arith.constant 0 : i32
    %c0_i32_1 = arith.constant 0 : i32
    return %c0_i32, %c0_i32_0 : i32, i32
  }
  func.func @transform_10(%arg0: i32, %arg1: i32) -> (i32, i32) {
    %c0_i32 = arith.constant 0 : i32
    %c0_i32_0 = arith.constant 0 : i32
    %c0_i32_1 = arith.constant 0 : i32
    return %c0_i32, %c0_i32_0 : i32, i32
  }
  func.func @transform_11(%arg0: i32, %arg1: i32) -> (i32, i32) {
    %c0_i32 = arith.constant 0 : i32
    %c0_i32_0 = arith.constant 0 : i32
    %c0_i32_1 = arith.constant 0 : i32
    return %c0_i32, %c0_i32_0 : i32, i32
  }
  func.func @transform_12(%arg0: i32, %arg1: i32) -> (i32, i32) {
    %c0_i32 = arith.constant 0 : i32
    %c0_i32_0 = arith.constant 0 : i32
    %c0_i32_1 = arith.constant 0 : i32
    return %c0_i32, %c0_i32_0 : i32, i32
  }
  func.func @transform_13(%arg0: i32, %arg1: i32) -> (i32, i32) {
    %c0_i32 = arith.constant 0 : i32
    %c0_i32_0 = arith.constant 0 : i32
    %c0_i32_1 = arith.constant 0 : i32
    return %c0_i32, %c0_i32_0 : i32, i32
  }
  func.func @transform_14(%arg0: i32, %arg1: i32) -> (i32, i32) {
    %c0_i32 = arith.constant 0 : i32
    %c0_i32_0 = arith.constant 0 : i32
    %c0_i32_1 = arith.constant 0 : i32
    return %c0_i32, %c0_i32_0 : i32, i32
  }
  func.func @transform_15(%arg0: i32, %arg1: i32) -> (i32, i32) {
    %c0_i32 = arith.constant 0 : i32
    %c0_i32_0 = arith.constant 0 : i32
    %c0_i32_1 = arith.constant 0 : i32
    return %c0_i32, %c0_i32_0 : i32, i32
  }
  func.func @transform_16(%arg0: i32, %arg1: i32) -> (i32, i32, i32) {
    %c0_i32 = arith.constant 0 : i32
    %c0_i32_0 = arith.constant 0 : i32
    return %arg0, %arg1, %c0_i32 : i32, i32, i32
  }
}

module attributes {stable_mosaic.version = 11 : i64} {
  func.func @_encoder_layer_kernel(%arg0: i32, %arg1: i32, %arg2: memref<1x8x32xf32, #tpu.memory_space<vmem>>, %arg3: memref<1x1x8xf32, #tpu.memory_space<vmem>>, %arg4: memref<1x32xf32, #tpu.memory_space<vmem>>, %arg5: memref<1x32xf32, #tpu.memory_space<vmem>>, %arg6: memref<32x32xbf16, #tpu.memory_space<vmem>>, %arg7: memref<1x32xf32, #tpu.memory_space<vmem>>, %arg8: memref<32x32xbf16, #tpu.memory_space<vmem>>, %arg9: memref<1x32xf32, #tpu.memory_space<vmem>>, %arg10: memref<32x32xbf16, #tpu.memory_space<vmem>>, %arg11: memref<1x32xf32, #tpu.memory_space<vmem>>, %arg12: memref<1x32xf32, #tpu.memory_space<vmem>>, %arg13: memref<1x32xf32, #tpu.memory_space<vmem>>, %arg14: memref<32x64xbf16, #tpu.memory_space<vmem>>, %arg15: memref<1x64xf32, #tpu.memory_space<vmem>>, %arg16: memref<64x32xbf16, #tpu.memory_space<vmem>>, %arg17: memref<1x32xf32, #tpu.memory_space<vmem>>, %arg18: memref<1x8x32xf32, #tpu.memory_space<vmem>>, %arg19: memref<8x32xbf16, #tpu.memory_space<vmem>>, %arg20: memref<8x32xbf16, #tpu.memory_space<vmem>>) attributes {dimension_semantics = [#tpu.dimension_semantics<parallel>, #tpu.dimension_semantics<arbitrary>], iteration_bounds = array<i64: 2, 1>, scalar_prefetch = 0 : i64, scratch_operands = 2 : i64, tpu.core_type = #tpu.core_type<tc>, window_params = [{transform_indices = @transform_0, window_bounds = array<i64: 1, 8, 32>}, {transform_indices = @transform_1, window_bounds = array<i64: 1, 1, 8>}, {pipeline_mode = #tpu.pipeline_mode<synchronous>, transform_indices = @transform_2, window_bounds = array<i64: 1, 32>}, {pipeline_mode = #tpu.pipeline_mode<synchronous>, transform_indices = @transform_3, window_bounds = array<i64: 1, 32>}, {pipeline_mode = #tpu.pipeline_mode<synchronous>, transform_indices = @transform_4, window_bounds = array<i64: 32, 32>}, {pipeline_mode = #tpu.pipeline_mode<synchronous>, transform_indices = @transform_5, window_bounds = array<i64: 1, 32>}, {pipeline_mode = #tpu.pipeline_mode<synchronous>, transform_indices = @transform_6, window_bounds = array<i64: 32, 32>}, {pipeline_mode = #tpu.pipeline_mode<synchronous>, transform_indices = @transform_7, window_bounds = array<i64: 1, 32>}, {pipeline_mode = #tpu.pipeline_mode<synchronous>, transform_indices = @transform_8, window_bounds = array<i64: 32, 32>}, {pipeline_mode = #tpu.pipeline_mode<synchronous>, transform_indices = @transform_9, window_bounds = array<i64: 1, 32>}, {pipeline_mode = #tpu.pipeline_mode<synchronous>, transform_indices = @transform_10, window_bounds = array<i64: 1, 32>}, {pipeline_mode = #tpu.pipeline_mode<synchronous>, transform_indices = @transform_11, window_bounds = array<i64: 1, 32>}, {pipeline_mode = #tpu.pipeline_mode<synchronous>, transform_indices = @transform_12, window_bounds = array<i64: 32, 64>}, {pipeline_mode = #tpu.pipeline_mode<synchronous>, transform_indices = @transform_13, window_bounds = array<i64: 1, 64>}, {pipeline_mode = #tpu.pipeline_mode<synchronous>, transform_indices = @transform_14, window_bounds = array<i64: 64, 32>}, {pipeline_mode = #tpu.pipeline_mode<synchronous>, transform_indices = @transform_15, window_bounds = array<i64: 1, 32>}, {transform_indices = @transform_16, window_bounds = array<i64: 1, 8, 32>}]} {
    %c0_i32 = arith.constant 0 : i32
    %0 = arith.cmpi eq, %arg1, %c0_i32 : i32
    %1 = arith.extui %0 : i1 to i32
    %c0_i32_0 = arith.constant 0 : i32
    %2 = arith.cmpi ne, %1, %c0_i32_0 : i32
    scf.if %2 {
      %c0_73 = arith.constant 0 : index
      %c0_74 = arith.constant 0 : index
      %c0_75 = arith.constant 0 : index
      %162 = vector.load %arg2[%c0_73, %c0_74, %c0_75] : memref<1x8x32xf32, #tpu.memory_space<vmem>>, vector<1x8x32xf32>
      %163 = vector.shape_cast %162 : vector<1x8x32xf32> to vector<8x32xf32>
      %c0_76 = arith.constant 0 : index
      %c0_77 = arith.constant 0 : index
      %164 = vector.load %arg4[%c0_76, %c0_77] : memref<1x32xf32, #tpu.memory_space<vmem>>, vector<1x32xf32>
      %c0_78 = arith.constant 0 : index
      %c0_79 = arith.constant 0 : index
      %165 = vector.load %arg5[%c0_78, %c0_79] : memref<1x32xf32, #tpu.memory_space<vmem>>, vector<1x32xf32>
      %cst_80 = arith.constant dense<0.000000e+00> : vector<8xf32>
      %166 = vector.multi_reduction <add>, %163, %cst_80 [1] : vector<8x32xf32> to vector<8xf32>
      %167 = vector.shape_cast %166 : vector<8xf32> to vector<8x1xf32>
      %cst_81 = arith.constant 3.200000e+01 : f32
      %168 = vector.broadcast %cst_81 : f32 to vector<8x1xf32>
      %169 = arith.divf %167, %168 : vector<8x1xf32>
      %170 = vector.broadcast %169 : vector<8x1xf32> to vector<8x32xf32>
      %171 = arith.subf %163, %170 : vector<8x32xf32>
      %172 = arith.mulf %171, %171 : vector<8x32xf32>
      %cst_82 = arith.constant dense<0.000000e+00> : vector<8xf32>
      %173 = vector.multi_reduction <add>, %172, %cst_82 [1] : vector<8x32xf32> to vector<8xf32>
      %174 = vector.shape_cast %173 : vector<8xf32> to vector<8x1xf32>
      %cst_83 = arith.constant 3.200000e+01 : f32
      %175 = vector.broadcast %cst_83 : f32 to vector<8x1xf32>
      %176 = arith.divf %174, %175 : vector<8x1xf32>
      %177 = vector.broadcast %169 : vector<8x1xf32> to vector<8x32xf32>
      %178 = arith.subf %163, %177 : vector<8x32xf32>
      %cst_84 = arith.constant 9.99999997E-7 : f32
      %179 = vector.broadcast %cst_84 : f32 to vector<8x1xf32>
      %180 = arith.addf %176, %179 : vector<8x1xf32>
      %181 = math.rsqrt %180 : vector<8x1xf32>
      %182 = vector.broadcast %181 : vector<8x1xf32> to vector<8x32xf32>
      %183 = arith.mulf %178, %182 : vector<8x32xf32>
      %184 = vector.broadcast %164 : vector<1x32xf32> to vector<8x32xf32>
      %185 = arith.mulf %183, %184 : vector<8x32xf32>
      %186 = vector.broadcast %165 : vector<1x32xf32> to vector<8x32xf32>
      %187 = arith.addf %185, %186 : vector<8x32xf32>
      %188 = arith.truncf %187 : vector<8x32xf32> to vector<8x32xbf16>
      %c0_85 = arith.constant 0 : index
      %c0_86 = arith.constant 0 : index
      %189 = vector.load %arg8[%c0_85, %c0_86] : memref<32x32xbf16, #tpu.memory_space<vmem>>, vector<32x32xbf16>
      %cst_87 = arith.constant dense<0.000000e+00> : vector<8x32xf32>
      %190 = tpu.matmul %188, %189, %cst_87 {dimension_numbers = #tpu.dot_dimension_numbers<[1], [0], [0], [1], [0, 0, 1, 1], [], []>} : vector<8x32xbf16>, vector<32x32xbf16>, vector<8x32xf32> -> vector<8x32xf32>
      %c0_88 = arith.constant 0 : index
      %c0_89 = arith.constant 0 : index
      %191 = vector.load %arg9[%c0_88, %c0_89] : memref<1x32xf32, #tpu.memory_space<vmem>>, vector<1x32xf32>
      %192 = vector.broadcast %191 : vector<1x32xf32> to vector<8x32xf32>
      %193 = arith.addf %190, %192 : vector<8x32xf32>
      %c0_90 = arith.constant 0 : index
      %c0_91 = arith.constant 0 : index
      %194 = vector.load %arg10[%c0_90, %c0_91] : memref<32x32xbf16, #tpu.memory_space<vmem>>, vector<32x32xbf16>
      %cst_92 = arith.constant dense<0.000000e+00> : vector<8x32xf32>
      %195 = tpu.matmul %188, %194, %cst_92 {dimension_numbers = #tpu.dot_dimension_numbers<[1], [0], [0], [1], [0, 0, 1, 1], [], []>} : vector<8x32xbf16>, vector<32x32xbf16>, vector<8x32xf32> -> vector<8x32xf32>
      %c0_93 = arith.constant 0 : index
      %c0_94 = arith.constant 0 : index
      %196 = vector.load %arg11[%c0_93, %c0_94] : memref<1x32xf32, #tpu.memory_space<vmem>>, vector<1x32xf32>
      %197 = vector.broadcast %196 : vector<1x32xf32> to vector<8x32xf32>
      %198 = arith.addf %195, %197 : vector<8x32xf32>
      %199 = arith.truncf %193 : vector<8x32xf32> to vector<8x32xbf16>
      %c0_95 = arith.constant 0 : index
      %c0_96 = arith.constant 0 : index
      %200 = vector.load %arg19[%c0_95, %c0_96] : memref<8x32xbf16, #tpu.memory_space<vmem>>, vector<8x32xbf16>
      tpu.vector_store %arg19[%c0_95, %c0_96], %199 {strides = array<i32>} : memref<8x32xbf16, #tpu.memory_space<vmem>>, vector<8x32xbf16>,
      %201 = arith.truncf %198 : vector<8x32xf32> to vector<8x32xbf16>
      %c0_97 = arith.constant 0 : index
      %c0_98 = arith.constant 0 : index
      %202 = vector.load %arg20[%c0_97, %c0_98] : memref<8x32xbf16, #tpu.memory_space<vmem>>, vector<8x32xbf16>
      tpu.vector_store %arg20[%c0_97, %c0_98], %201 {strides = array<i32>} : memref<8x32xbf16, #tpu.memory_space<vmem>>, vector<8x32xbf16>,
    } else {
    }
    %c8_i32 = arith.constant 8 : i32
    %3 = arith.muli %arg1, %c8_i32 : i32
    %4 = tpu.assume_multiple %3, 8 : i32
    %c0 = arith.constant 0 : index
    %5 = arith.index_cast %4 : i32 to index
    %c0_1 = arith.constant 0 : index
    %6 = vector.load %arg2[%c0, %5, %c0_1] : memref<1x8x32xf32, #tpu.memory_space<vmem>>, vector<1x8x32xf32>
    %7 = vector.shape_cast %6 : vector<1x8x32xf32> to vector<8x32xf32>
    %c0_2 = arith.constant 0 : index
    %c0_3 = arith.constant 0 : index
    %8 = vector.load %arg4[%c0_2, %c0_3] : memref<1x32xf32, #tpu.memory_space<vmem>>, vector<1x32xf32>
    %c0_4 = arith.constant 0 : index
    %c0_5 = arith.constant 0 : index
    %9 = vector.load %arg5[%c0_4, %c0_5] : memref<1x32xf32, #tpu.memory_space<vmem>>, vector<1x32xf32>
    %cst = arith.constant dense<0.000000e+00> : vector<8xf32>
    %10 = vector.multi_reduction <add>, %7, %cst [1] : vector<8x32xf32> to vector<8xf32>
    %11 = vector.shape_cast %10 : vector<8xf32> to vector<8x1xf32>
    %cst_6 = arith.constant 3.200000e+01 : f32
    %12 = vector.broadcast %cst_6 : f32 to vector<8x1xf32>
    %13 = arith.divf %11, %12 : vector<8x1xf32>
    %14 = vector.broadcast %13 : vector<8x1xf32> to vector<8x32xf32>
    %15 = arith.subf %7, %14 : vector<8x32xf32>
    %16 = arith.mulf %15, %15 : vector<8x32xf32>
    %cst_7 = arith.constant dense<0.000000e+00> : vector<8xf32>
    %17 = vector.multi_reduction <add>, %16, %cst_7 [1] : vector<8x32xf32> to vector<8xf32>
    %18 = vector.shape_cast %17 : vector<8xf32> to vector<8x1xf32>
    %cst_8 = arith.constant 3.200000e+01 : f32
    %19 = vector.broadcast %cst_8 : f32 to vector<8x1xf32>
    %20 = arith.divf %18, %19 : vector<8x1xf32>
    %21 = vector.broadcast %13 : vector<8x1xf32> to vector<8x32xf32>
    %22 = arith.subf %7, %21 : vector<8x32xf32>
    %cst_9 = arith.constant 9.99999997E-7 : f32
    %23 = vector.broadcast %cst_9 : f32 to vector<8x1xf32>
    %24 = arith.addf %20, %23 : vector<8x1xf32>
    %25 = math.rsqrt %24 : vector<8x1xf32>
    %26 = vector.broadcast %25 : vector<8x1xf32> to vector<8x32xf32>
    %27 = arith.mulf %22, %26 : vector<8x32xf32>
    %28 = vector.broadcast %8 : vector<1x32xf32> to vector<8x32xf32>
    %29 = arith.mulf %27, %28 : vector<8x32xf32>
    %30 = vector.broadcast %9 : vector<1x32xf32> to vector<8x32xf32>
    %31 = arith.addf %29, %30 : vector<8x32xf32>
    %32 = arith.truncf %31 : vector<8x32xf32> to vector<8x32xbf16>
    %c0_10 = arith.constant 0 : index
    %c0_11 = arith.constant 0 : index
    %33 = vector.load %arg6[%c0_10, %c0_11] : memref<32x32xbf16, #tpu.memory_space<vmem>>, vector<32x32xbf16>
    %cst_12 = arith.constant dense<0.000000e+00> : vector<8x32xf32>
    %34 = tpu.matmul %32, %33, %cst_12 {dimension_numbers = #tpu.dot_dimension_numbers<[1], [0], [0], [1], [0, 0, 1, 1], [], []>} : vector<8x32xbf16>, vector<32x32xbf16>, vector<8x32xf32> -> vector<8x32xf32>
    %c0_13 = arith.constant 0 : index
    %c0_14 = arith.constant 0 : index
    %35 = vector.load %arg7[%c0_13, %c0_14] : memref<1x32xf32, #tpu.memory_space<vmem>>, vector<1x32xf32>
    %36 = vector.broadcast %35 : vector<1x32xf32> to vector<8x32xf32>
    %37 = arith.addf %34, %36 : vector<8x32xf32>
    %38 = arith.truncf %37 : vector<8x32xf32> to vector<8x32xbf16>
    %c0_15 = arith.constant 0 : index
    %c0_16 = arith.constant 0 : index
    %c0_17 = arith.constant 0 : index
    %39 = vector.load %arg3[%c0_15, %c0_16, %c0_17] : memref<1x1x8xf32, #tpu.memory_space<vmem>>, vector<1x1x8xf32>
    %40 = vector.shape_cast %39 : vector<1x1x8xf32> to vector<1x8xf32>
    %cst_18 = arith.constant 0.000000e+00 : f32
    %41 = vector.broadcast %cst_18 : f32 to vector<1x8xf32>
    %42 = arith.cmpf oeq, %40, %41 : vector<1x8xf32>
    %cst_19 = arith.constant -1.000000e+09 : f32
    %cst_20 = arith.constant 0.000000e+00 : f32
    %43 = vector.broadcast %cst_19 : f32 to vector<1x8xf32>
    %44 = vector.broadcast %cst_20 : f32 to vector<1x8xf32>
    %45 = arith.select %42, %43, %44 : vector<1x8xi1>, vector<1x8xf32>
    %46 = vector.extract_strided_slice %38 {offsets = [0, 0], sizes = [8, 8], strides = [1, 1]} : vector<8x32xbf16> to vector<8x8xbf16>
    %c0_21 = arith.constant 0 : index
    %c0_22 = arith.constant 0 : index
    %47 = vector.load %arg19[%c0_21, %c0_22] : memref<8x32xbf16, #tpu.memory_space<vmem>>, vector<8x8xbf16>
    %c0_23 = arith.constant 0 : index
    %c0_24 = arith.constant 0 : index
    %48 = vector.load %arg20[%c0_23, %c0_24] : memref<8x32xbf16, #tpu.memory_space<vmem>>, vector<8x8xbf16>
    %cst_25 = arith.constant dense<0.000000e+00> : vector<8x8xf32>
    %49 = tpu.matmul %46, %47, %cst_25 {dimension_numbers = #tpu.dot_dimension_numbers<[1], [1], [0], [0], [0, 0, 1, 0], [], []>} : vector<8x8xbf16>, vector<8x8xbf16>, vector<8x8xf32> -> vector<8x8xf32>
    %50 = vector.broadcast %45 : vector<1x8xf32> to vector<8x8xf32>
    %51 = arith.addf %49, %50 : vector<8x8xf32>
    %cst_26 = arith.constant dense<0xFF800000> : vector<8xf32>
    %52 = vector.multi_reduction <maximumf>, %51, %cst_26 [1] : vector<8x8xf32> to vector<8xf32>
    %53 = vector.shape_cast %52 : vector<8xf32> to vector<8x1xf32>
    %54 = vector.broadcast %53 : vector<8x1xf32> to vector<8x8xf32>
    %55 = arith.subf %51, %54 : vector<8x8xf32>
    %56 = math.exp %55 : vector<8x8xf32>
    %cst_27 = arith.constant dense<0.000000e+00> : vector<8xf32>
    %57 = vector.multi_reduction <add>, %56, %cst_27 [1] : vector<8x8xf32> to vector<8xf32>
    %58 = vector.shape_cast %57 : vector<8xf32> to vector<8x1xf32>
    %59 = tpu.reciprocal %58 {approx = true} : vector<8x1xf32> -> vector<8x1xf32>
    %60 = vector.broadcast %59 : vector<8x1xf32> to vector<8x8xf32>
    %61 = arith.mulf %56, %60 : vector<8x8xf32>
    %62 = arith.truncf %61 : vector<8x8xf32> to vector<8x8xbf16>
    %cst_28 = arith.constant dense<0.000000e+00> : vector<8x8xf32>
    %63 = tpu.matmul %62, %48, %cst_28 {dimension_numbers = #tpu.dot_dimension_numbers<[1], [0], [0], [1], [0, 0, 1, 1], [], []>} : vector<8x8xbf16>, vector<8x8xbf16>, vector<8x8xf32> -> vector<8x8xf32>
    %64 = vector.extract_strided_slice %38 {offsets = [0, 8], sizes = [8, 8], strides = [1, 1]} : vector<8x32xbf16> to vector<8x8xbf16>
    %c0_29 = arith.constant 0 : index
    %c8 = arith.constant 8 : index
    %65 = vector.load %arg19[%c0_29, %c8] : memref<8x32xbf16, #tpu.memory_space<vmem>>, vector<8x8xbf16>
    %c0_30 = arith.constant 0 : index
    %c8_31 = arith.constant 8 : index
    %66 = vector.load %arg20[%c0_30, %c8_31] : memref<8x32xbf16, #tpu.memory_space<vmem>>, vector<8x8xbf16>
    %cst_32 = arith.constant dense<0.000000e+00> : vector<8x8xf32>
    %67 = tpu.matmul %64, %65, %cst_32 {dimension_numbers = #tpu.dot_dimension_numbers<[1], [1], [0], [0], [0, 0, 1, 0], [], []>} : vector<8x8xbf16>, vector<8x8xbf16>, vector<8x8xf32> -> vector<8x8xf32>
    %68 = vector.broadcast %45 : vector<1x8xf32> to vector<8x8xf32>
    %69 = arith.addf %67, %68 : vector<8x8xf32>
    %cst_33 = arith.constant dense<0xFF800000> : vector<8xf32>
    %70 = vector.multi_reduction <maximumf>, %69, %cst_33 [1] : vector<8x8xf32> to vector<8xf32>
    %71 = vector.shape_cast %70 : vector<8xf32> to vector<8x1xf32>
    %72 = vector.broadcast %71 : vector<8x1xf32> to vector<8x8xf32>
    %73 = arith.subf %69, %72 : vector<8x8xf32>
    %74 = math.exp %73 : vector<8x8xf32>
    %cst_34 = arith.constant dense<0.000000e+00> : vector<8xf32>
    %75 = vector.multi_reduction <add>, %74, %cst_34 [1] : vector<8x8xf32> to vector<8xf32>
    %76 = vector.shape_cast %75 : vector<8xf32> to vector<8x1xf32>
    %77 = tpu.reciprocal %76 {approx = true} : vector<8x1xf32> -> vector<8x1xf32>
    %78 = vector.broadcast %77 : vector<8x1xf32> to vector<8x8xf32>
    %79 = arith.mulf %74, %78 : vector<8x8xf32>
    %80 = arith.truncf %79 : vector<8x8xf32> to vector<8x8xbf16>
    %cst_35 = arith.constant dense<0.000000e+00> : vector<8x8xf32>
    %81 = tpu.matmul %80, %66, %cst_35 {dimension_numbers = #tpu.dot_dimension_numbers<[1], [0], [0], [1], [0, 0, 1, 1], [], []>} : vector<8x8xbf16>, vector<8x8xbf16>, vector<8x8xf32> -> vector<8x8xf32>
    %82 = vector.extract_strided_slice %38 {offsets = [0, 16], sizes = [8, 8], strides = [1, 1]} : vector<8x32xbf16> to vector<8x8xbf16>
    %c0_36 = arith.constant 0 : index
    %c16 = arith.constant 16 : index
    %83 = vector.load %arg19[%c0_36, %c16] : memref<8x32xbf16, #tpu.memory_space<vmem>>, vector<8x8xbf16>
    %c0_37 = arith.constant 0 : index
    %c16_38 = arith.constant 16 : index
    %84 = vector.load %arg20[%c0_37, %c16_38] : memref<8x32xbf16, #tpu.memory_space<vmem>>, vector<8x8xbf16>
    %cst_39 = arith.constant dense<0.000000e+00> : vector<8x8xf32>
    %85 = tpu.matmul %82, %83, %cst_39 {dimension_numbers = #tpu.dot_dimension_numbers<[1], [1], [0], [0], [0, 0, 1, 0], [], []>} : vector<8x8xbf16>, vector<8x8xbf16>, vector<8x8xf32> -> vector<8x8xf32>
    %86 = vector.broadcast %45 : vector<1x8xf32> to vector<8x8xf32>
    %87 = arith.addf %85, %86 : vector<8x8xf32>
    %cst_40 = arith.constant dense<0xFF800000> : vector<8xf32>
    %88 = vector.multi_reduction <maximumf>, %87, %cst_40 [1] : vector<8x8xf32> to vector<8xf32>
    %89 = vector.shape_cast %88 : vector<8xf32> to vector<8x1xf32>
    %90 = vector.broadcast %89 : vector<8x1xf32> to vector<8x8xf32>
    %91 = arith.subf %87, %90 : vector<8x8xf32>
    %92 = math.exp %91 : vector<8x8xf32>
    %cst_41 = arith.constant dense<0.000000e+00> : vector<8xf32>
    %93 = vector.multi_reduction <add>, %92, %cst_41 [1] : vector<8x8xf32> to vector<8xf32>
    %94 = vector.shape_cast %93 : vector<8xf32> to vector<8x1xf32>
    %95 = tpu.reciprocal %94 {approx = true} : vector<8x1xf32> -> vector<8x1xf32>
    %96 = vector.broadcast %95 : vector<8x1xf32> to vector<8x8xf32>
    %97 = arith.mulf %92, %96 : vector<8x8xf32>
    %98 = arith.truncf %97 : vector<8x8xf32> to vector<8x8xbf16>
    %cst_42 = arith.constant dense<0.000000e+00> : vector<8x8xf32>
    %99 = tpu.matmul %98, %84, %cst_42 {dimension_numbers = #tpu.dot_dimension_numbers<[1], [0], [0], [1], [0, 0, 1, 1], [], []>} : vector<8x8xbf16>, vector<8x8xbf16>, vector<8x8xf32> -> vector<8x8xf32>
    %100 = vector.extract_strided_slice %38 {offsets = [0, 24], sizes = [8, 8], strides = [1, 1]} : vector<8x32xbf16> to vector<8x8xbf16>
    %c0_43 = arith.constant 0 : index
    %c24 = arith.constant 24 : index
    %101 = vector.load %arg19[%c0_43, %c24] : memref<8x32xbf16, #tpu.memory_space<vmem>>, vector<8x8xbf16>
    %c0_44 = arith.constant 0 : index
    %c24_45 = arith.constant 24 : index
    %102 = vector.load %arg20[%c0_44, %c24_45] : memref<8x32xbf16, #tpu.memory_space<vmem>>, vector<8x8xbf16>
    %cst_46 = arith.constant dense<0.000000e+00> : vector<8x8xf32>
    %103 = tpu.matmul %100, %101, %cst_46 {dimension_numbers = #tpu.dot_dimension_numbers<[1], [1], [0], [0], [0, 0, 1, 0], [], []>} : vector<8x8xbf16>, vector<8x8xbf16>, vector<8x8xf32> -> vector<8x8xf32>
    %104 = vector.broadcast %45 : vector<1x8xf32> to vector<8x8xf32>
    %105 = arith.addf %103, %104 : vector<8x8xf32>
    %cst_47 = arith.constant dense<0xFF800000> : vector<8xf32>
    %106 = vector.multi_reduction <maximumf>, %105, %cst_47 [1] : vector<8x8xf32> to vector<8xf32>
    %107 = vector.shape_cast %106 : vector<8xf32> to vector<8x1xf32>
    %108 = vector.broadcast %107 : vector<8x1xf32> to vector<8x8xf32>
    %109 = arith.subf %105, %108 : vector<8x8xf32>
    %110 = math.exp %109 : vector<8x8xf32>
    %cst_48 = arith.constant dense<0.000000e+00> : vector<8xf32>
    %111 = vector.multi_reduction <add>, %110, %cst_48 [1] : vector<8x8xf32> to vector<8xf32>
    %112 = vector.shape_cast %111 : vector<8xf32> to vector<8x1xf32>
    %113 = tpu.reciprocal %112 {approx = true} : vector<8x1xf32> -> vector<8x1xf32>
    %114 = vector.broadcast %113 : vector<8x1xf32> to vector<8x8xf32>
    %115 = arith.mulf %110, %114 : vector<8x8xf32>
    %116 = arith.truncf %115 : vector<8x8xf32> to vector<8x8xbf16>
    %cst_49 = arith.constant dense<0.000000e+00> : vector<8x8xf32>
    %117 = tpu.matmul %116, %102, %cst_49 {dimension_numbers = #tpu.dot_dimension_numbers<[1], [0], [0], [1], [0, 0, 1, 1], [], []>} : vector<8x8xbf16>, vector<8x8xbf16>, vector<8x8xf32> -> vector<8x8xf32>
    %118 = tpu.concatenate %63, %81, %99, %117 in 1 : vector<8x8xf32>, vector<8x8xf32>, vector<8x8xf32>, vector<8x8xf32> -> vector<8x32xf32>
    %119 = arith.addf %7, %118 : vector<8x32xf32>
    %c0_50 = arith.constant 0 : index
    %c0_51 = arith.constant 0 : index
    %120 = vector.load %arg12[%c0_50, %c0_51] : memref<1x32xf32, #tpu.memory_space<vmem>>, vector<1x32xf32>
    %c0_52 = arith.constant 0 : index
    %c0_53 = arith.constant 0 : index
    %121 = vector.load %arg13[%c0_52, %c0_53] : memref<1x32xf32, #tpu.memory_space<vmem>>, vector<1x32xf32>
    %cst_54 = arith.constant dense<0.000000e+00> : vector<8xf32>
    %122 = vector.multi_reduction <add>, %119, %cst_54 [1] : vector<8x32xf32> to vector<8xf32>
    %123 = vector.shape_cast %122 : vector<8xf32> to vector<8x1xf32>
    %cst_55 = arith.constant 3.200000e+01 : f32
    %124 = vector.broadcast %cst_55 : f32 to vector<8x1xf32>
    %125 = arith.divf %123, %124 : vector<8x1xf32>
    %126 = vector.broadcast %125 : vector<8x1xf32> to vector<8x32xf32>
    %127 = arith.subf %119, %126 : vector<8x32xf32>
    %128 = arith.mulf %127, %127 : vector<8x32xf32>
    %cst_56 = arith.constant dense<0.000000e+00> : vector<8xf32>
    %129 = vector.multi_reduction <add>, %128, %cst_56 [1] : vector<8x32xf32> to vector<8xf32>
    %130 = vector.shape_cast %129 : vector<8xf32> to vector<8x1xf32>
    %cst_57 = arith.constant 3.200000e+01 : f32
    %131 = vector.broadcast %cst_57 : f32 to vector<8x1xf32>
    %132 = arith.divf %130, %131 : vector<8x1xf32>
    %133 = vector.broadcast %125 : vector<8x1xf32> to vector<8x32xf32>
    %134 = arith.subf %119, %133 : vector<8x32xf32>
    %cst_58 = arith.constant 9.99999997E-7 : f32
    %135 = vector.broadcast %cst_58 : f32 to vector<8x1xf32>
    %136 = arith.addf %132, %135 : vector<8x1xf32>
    %137 = math.rsqrt %136 : vector<8x1xf32>
    %138 = vector.broadcast %137 : vector<8x1xf32> to vector<8x32xf32>
    %139 = arith.mulf %134, %138 : vector<8x32xf32>
    %140 = vector.broadcast %120 : vector<1x32xf32> to vector<8x32xf32>
    %141 = arith.mulf %139, %140 : vector<8x32xf32>
    %142 = vector.broadcast %121 : vector<1x32xf32> to vector<8x32xf32>
    %143 = arith.addf %141, %142 : vector<8x32xf32>
    %144 = arith.truncf %143 : vector<8x32xf32> to vector<8x32xbf16>
    %c0_59 = arith.constant 0 : index
    %c0_60 = arith.constant 0 : index
    %145 = vector.load %arg14[%c0_59, %c0_60] : memref<32x64xbf16, #tpu.memory_space<vmem>>, vector<32x64xbf16>
    %cst_61 = arith.constant dense<0.000000e+00> : vector<8x64xf32>
    %146 = tpu.matmul %144, %145, %cst_61 {dimension_numbers = #tpu.dot_dimension_numbers<[1], [0], [0], [1], [0, 0, 1, 1], [], []>} : vector<8x32xbf16>, vector<32x64xbf16>, vector<8x64xf32> -> vector<8x64xf32>
    %c0_62 = arith.constant 0 : index
    %c0_63 = arith.constant 0 : index
    %147 = vector.load %arg15[%c0_62, %c0_63] : memref<1x64xf32, #tpu.memory_space<vmem>>, vector<1x64xf32>
    %148 = vector.broadcast %147 : vector<1x64xf32> to vector<8x64xf32>
    %149 = arith.addf %146, %148 : vector<8x64xf32>
    %cst_64 = arith.constant 0.000000e+00 : f32
    %150 = vector.broadcast %cst_64 : f32 to vector<8x64xf32>
    %151 = arith.maximumf %149, %150 : vector<8x64xf32>
    %152 = arith.truncf %151 : vector<8x64xf32> to vector<8x64xbf16>
    %c0_65 = arith.constant 0 : index
    %c0_66 = arith.constant 0 : index
    %153 = vector.load %arg16[%c0_65, %c0_66] : memref<64x32xbf16, #tpu.memory_space<vmem>>, vector<64x32xbf16>
    %cst_67 = arith.constant dense<0.000000e+00> : vector<8x32xf32>
    %154 = tpu.matmul %152, %153, %cst_67 {dimension_numbers = #tpu.dot_dimension_numbers<[1], [0], [0], [1], [0, 0, 1, 1], [], []>} : vector<8x64xbf16>, vector<64x32xbf16>, vector<8x32xf32> -> vector<8x32xf32>
    %c0_68 = arith.constant 0 : index
    %c0_69 = arith.constant 0 : index
    %155 = vector.load %arg17[%c0_68, %c0_69] : memref<1x32xf32, #tpu.memory_space<vmem>>, vector<1x32xf32>
    %156 = vector.broadcast %155 : vector<1x32xf32> to vector<8x32xf32>
    %157 = arith.addf %154, %156 : vector<8x32xf32>
    %158 = arith.addf %119, %157 : vector<8x32xf32>
    %c0_70 = arith.constant 0 : index
    %c0_71 = arith.constant 0 : index
    %c0_72 = arith.constant 0 : index
    %159 = vector.load %arg18[%c0_70, %c0_71, %c0_72] : memref<1x8x32xf32, #tpu.memory_space<vmem>>, vector<1x8x32xf32>
    %160 = vector.shape_cast %159 : vector<1x8x32xf32> to vector<8x32xf32>
    %161 = vector.shape_cast %158 : vector<8x32xf32> to vector<1x8x32xf32>
    tpu.vector_store %arg18[%c0_70, %c0_71, %c0_72], %161 {strides = array<i32>} : memref<1x8x32xf32, #tpu.memory_space<vmem>>, vector<1x8x32xf32>,
    return
  }
  func.func @transform_0(%arg0: i32, %arg1: i32) -> (i32, i32, i32) {
    %c0_i32 = arith.constant 0 : i32
    %c0_i32_0 = arith.constant 0 : i32
    %c0_i32_1 = arith.constant 0 : i32
    return %arg0, %c0_i32, %c0_i32_0 : i32, i32, i32
  }
  func.func @transform_1(%arg0: i32, %arg1: i32) -> (i32, i32, i32) {
    %c0_i32 = arith.constant 0 : i32
    %c0_i32_0 = arith.constant 0 : i32
    %c0_i32_1 = arith.constant 0 : i32
    return %arg0, %c0_i32, %c0_i32_0 : i32, i32, i32
  }
  func.func @transform_2(%arg0: i32, %arg1: i32) -> (i32, i32) {
    %c0_i32 = arith.constant 0 : i32
    %c0_i32_0 = arith.constant 0 : i32
    %c0_i32_1 = arith.constant 0 : i32
    return %c0_i32, %c0_i32_0 : i32, i32
  }
  func.func @transform_3(%arg0: i32, %arg1: i32) -> (i32, i32) {
    %c0_i32 = arith.constant 0 : i32
    %c0_i32_0 = arith.constant 0 : i32
    %c0_i32_1 = arith.constant 0 : i32
    return %c0_i32, %c0_i32_0 : i32, i32
  }
  func.func @transform_4(%arg0: i32, %arg1: i32) -> (i32, i32) {
    %c0_i32 = arith.constant 0 : i32
    %c0_i32_0 = arith.constant 0 : i32
    %c0_i32_1 = arith.constant 0 : i32
    return %c0_i32, %c0_i32_0 : i32, i32
  }
  func.func @transform_5(%arg0: i32, %arg1: i32) -> (i32, i32) {
    %c0_i32 = arith.constant 0 : i32
    %c0_i32_0 = arith.constant 0 : i32
    %c0_i32_1 = arith.constant 0 : i32
    return %c0_i32, %c0_i32_0 : i32, i32
  }
  func.func @transform_6(%arg0: i32, %arg1: i32) -> (i32, i32) {
    %c0_i32 = arith.constant 0 : i32
    %c0_i32_0 = arith.constant 0 : i32
    %c0_i32_1 = arith.constant 0 : i32
    return %c0_i32, %c0_i32_0 : i32, i32
  }
  func.func @transform_7(%arg0: i32, %arg1: i32) -> (i32, i32) {
    %c0_i32 = arith.constant 0 : i32
    %c0_i32_0 = arith.constant 0 : i32
    %c0_i32_1 = arith.constant 0 : i32
    return %c0_i32, %c0_i32_0 : i32, i32
  }
  func.func @transform_8(%arg0: i32, %arg1: i32) -> (i32, i32) {
    %c0_i32 = arith.constant 0 : i32
    %c0_i32_0 = arith.constant 0 : i32
    %c0_i32_1 = arith.constant 0 : i32
    return %c0_i32, %c0_i32_0 : i32, i32
  }
  func.func @transform_9(%arg0: i32, %arg1: i32) -> (i32, i32) {
    %c0_i32 = arith.constant 0 : i32
    %c0_i32_0 = arith.constant 0 : i32
    %c0_i32_1 = arith.constant 0 : i32
    return %c0_i32, %c0_i32_0 : i32, i32
  }
  func.func @transform_10(%arg0: i32, %arg1: i32) -> (i32, i32) {
    %c0_i32 = arith.constant 0 : i32
    %c0_i32_0 = arith.constant 0 : i32
    %c0_i32_1 = arith.constant 0 : i32
    return %c0_i32, %c0_i32_0 : i32, i32
  }
  func.func @transform_11(%arg0: i32, %arg1: i32) -> (i32, i32) {
    %c0_i32 = arith.constant 0 : i32
    %c0_i32_0 = arith.constant 0 : i32
    %c0_i32_1 = arith.constant 0 : i32
    return %c0_i32, %c0_i32_0 : i32, i32
  }
  func.func @transform_12(%arg0: i32, %arg1: i32) -> (i32, i32) {
    %c0_i32 = arith.constant 0 : i32
    %c0_i32_0 = arith.constant 0 : i32
    %c0_i32_1 = arith.constant 0 : i32
    return %c0_i32, %c0_i32_0 : i32, i32
  }
  func.func @transform_13(%arg0: i32, %arg1: i32) -> (i32, i32) {
    %c0_i32 = arith.constant 0 : i32
    %c0_i32_0 = arith.constant 0 : i32
    %c0_i32_1 = arith.constant 0 : i32
    return %c0_i32, %c0_i32_0 : i32, i32
  }
  func.func @transform_14(%arg0: i32, %arg1: i32) -> (i32, i32) {
    %c0_i32 = arith.constant 0 : i32
    %c0_i32_0 = arith.constant 0 : i32
    %c0_i32_1 = arith.constant 0 : i32
    return %c0_i32, %c0_i32_0 : i32, i32
  }
  func.func @transform_15(%arg0: i32, %arg1: i32) -> (i32, i32) {
    %c0_i32 = arith.constant 0 : i32
    %c0_i32_0 = arith.constant 0 : i32
    %c0_i32_1 = arith.constant 0 : i32
    return %c0_i32, %c0_i32_0 : i32, i32
  }
  func.func @transform_16(%arg0: i32, %arg1: i32) -> (i32, i32, i32) {
    %c0_i32 = arith.constant 0 : i32
    %c0_i32_0 = arith.constant 0 : i32
    return %arg0, %arg1, %c0_i32 : i32, i32, i32
  }
}

</mosaic_0001>

<llo_original>
// kernel: tpu_custom_call.1
$region0: #{tpu_custom_call.1}
  #allocation0 [shape = 'u32[]', space=smem, size = 0x4, offset = 0x4, fixed_abs, tag = 'smem constant byte address 0x4 - core index']
  #allocation1 [shape = 'u32[144,128]{1,0:T(1,128)}', space=vmem, size = 0x12000, scoped, tag = 'internal scratch']
  #allocation2 [shape = 'bf16[8,32]{1,0:T(8,128)(2,1)}', space=vmem, size = 0x800, scoped, tag = 'scratch operand']
  #allocation3 [shape = 'bf16[8,32]{1,0:T(8,128)(2,1)}', space=vmem, size = 0x800, scoped, tag = 'scratch operand']
  %s0 = inlined_call_operand.vmem [shape: f32[2,8,32], index: 0, kind: input, shape index: {}]
  %s1 = inlined_call_operand.hbm [shape: f32[2,1,8], index: 1, kind: input, shape index: {}]
  %s2 = inlined_call_operand.hbm [shape: f32[1,32], index: 2, kind: input, shape index: {}]
  %s3 = inlined_call_operand.hbm [shape: f32[1,32], index: 3, kind: input, shape index: {}]
  %s4 = inlined_call_operand.vmem [shape: bf16[32,32], index: 4, kind: input, shape index: {}]
  %s5 = inlined_call_operand.hbm [shape: f32[1,32], index: 5, kind: input, shape index: {}]
  %s6 = inlined_call_operand.vmem [shape: bf16[32,32], index: 6, kind: input, shape index: {}]
  %s7 = inlined_call_operand.hbm [shape: f32[1,32], index: 7, kind: input, shape index: {}]
  %s8 = inlined_call_operand.hbm [shape: bf16[32,32], index: 8, kind: input, shape index: {}]
  %s9 = inlined_call_operand.hbm [shape: f32[1,32], index: 9, kind: input, shape index: {}]
  %s10 = inlined_call_operand.vmem [shape: f32[1,32], index: 10, kind: input, shape index: {}]
  %s11 = inlined_call_operand.vmem [shape: f32[1,32], index: 11, kind: input, shape index: {}]
  %s12 = inlined_call_operand.vmem [shape: bf16[32,64], index: 12, kind: input, shape index: {}]
  %s13 = inlined_call_operand.vmem [shape: f32[1,64], index: 13, kind: input, shape index: {}]
  %s14 = inlined_call_operand.vmem [shape: bf16[64,32], index: 14, kind: input, shape index: {}]
  %s15 = inlined_call_operand.vmem [shape: f32[1,32], index: 15, kind: input, shape index: {}]
  %s16 = inlined_call_operand.hbm [shape: f32[2,8,32], index: 16, kind: output, shape index: {}]
  %s17 = sld [smem:[#allocation0]]
  $region129: #{tpu_custom_call.1} parent=0
    _
  %s19 = ssub.s32 1, %s17
  %s20 = scalar_select 0, %s19, %s17
  $region1: #{tpu_custom_call.1} parent=0
    #allocation4 [shape = 'u8[1024]{0}', space=vmem, size = 0x400, scoped, tag = 'input window, operand 1']
    #allocation5 [shape = 's32[2]{0}', space=sflag, size = 0x8, scoped, tag = 'scoped memory for tpu_custom_call.1']
    #allocation6 [shape = 's32[2]{0}', space=sflag, size = 0x8, scoped, tag = 'scoped memory for tpu_custom_call.1']
    #allocation7 [shape = 'u8[512]{0}', space=vmem, size = 0x400, scoped, tag = 'input window, operand 2, single buffered']
    #allocation8 [shape = 's32[1]{0}', space=sflag, size = 0x4, scoped, tag = 'scoped memory for tpu_custom_call.1']
    #allocation9 [shape = 'u8[512]{0}', space=vmem, size = 0x400, scoped, tag = 'input window, operand 3, single buffered']
    #allocation10 [shape = 'u8[512]{0}', space=vmem, size = 0x400, scoped, tag = 'input window, operand 5, single buffered']
    #allocation11 [shape = 's32[1]{0}', space=sflag, size = 0x4, scoped, tag = 'scoped memory for tpu_custom_call.1']
    #allocation12 [shape = 'u8[512]{0}', space=vmem, size = 0x400, scoped, tag = 'input window, operand 7, single buffered']
    #allocation13 [shape = 'u8[8192]{0}', space=vmem, size = 0x2000, scoped, tag = 'input window, operand 8, single buffered']
    #allocation14 [shape = 's32[1]{0}', space=sflag, size = 0x4, scoped, tag = 'scoped memory for tpu_custom_call.1']
    #allocation15 [shape = 'u8[512]{0}', space=vmem, size = 0x400, scoped, tag = 'input window, operand 9, single buffered']
    #allocation16 [shape = 'u8[8192]{0}', space=vmem, size = 0x2000, scoped, tag = 'output window, operand 0']
    %21 = vsyncpa [#allocation5], 0
    %s22 = scalar_lea.sflag [#allocation5], 1
    %23 = vsyncpa %s22, 0
    %24 = vsyncpa [#allocation8], 0
    %25 = vsyncpa [#allocation11], 0
    %26 = vsyncpa [#allocation14], 0
    %27 = vsyncpa [#allocation6], 0
    %s28 = scalar_lea.sflag [#allocation6], 1
    %29 = vsyncpa %s28, 0
    loop: start=0, step=1, limit=4
    $region2: #{tpu_custom_call.1} parent=1 // loop_pre_header
      _
    $region3: #{tpu_custom_call.1} parent=1 // loop_header
      %s31 = sphi 0, %s35
      %p32 = scmp.ge.s32.totalorder %s31, 4
      %s38 = sphi 0, %s50
      %s39 = sphi 0, %s46
      %s40 = sphi 0, %s38
      %s41 = sphi 0, %s39
      %s42 = sphi 0, %s40
      %s43 = sphi 0, %s41
      %s53 = sphi 0, %s55
      %s56 = sphi 0, %s53
      %s57 = sphi 0, %s56
      %s73 = sphi 0, %s57
      %s79 = sphi 0, %s81
      %s82 = sphi 0, %s79
      %s83 = sphi 0, %s82
      %s99 = sphi 0, %s83
      %s103 = sphi 0, %s103
      %s105 = sphi 0, %s103
      %s106 = sphi 0, %s105
      %s120 = sphi 0, %s106
      %s124 = sphi 0, %s124
      %s126 = sphi 0, %s124
      %s127 = sphi 0, %s126
      %s141 = sphi 0, %s127
      %s145 = sphi 0, %s145
      %s147 = sphi 0, %s145
      %s148 = sphi 0, %s147
      %s162 = sphi 0, %s148
      %s166 = sphi 0, %s166
      %s168 = sphi 0, %s166
      %s169 = sphi 0, %s168
      %s183 = sphi 0, %s169
      %s187 = sphi 0, %s187
      %s189 = sphi 0, %s187
      %s190 = sphi 0, %s189
      %s204 = sphi 0, %s190
      %s208 = sphi 0, %s208
      %s210 = sphi 0, %s208
      %s211 = sphi 0, %s210
      %s225 = sphi 0, %s211
      %s229 = sphi 0, %s229
      %s231 = sphi 0, %s229
      %s232 = sphi 0, %s231
      %s246 = sphi 0, %s232
      %s250 = sphi 0, %s250
      %s252 = sphi 0, %s250
      %s253 = sphi 0, %s252
      %s267 = sphi 0, %s253
      %s271 = sphi 0, %s271
      %s273 = sphi 0, %s271
      %s274 = sphi 0, %s273
      %s288 = sphi 0, %s274
      %s292 = sphi 0, %s292
      %s294 = sphi 0, %s292
      %s295 = sphi 0, %s294
      %s309 = sphi 0, %s295
      %s313 = sphi 0, %s313
      %s315 = sphi 0, %s313
      %s316 = sphi 0, %s315
      %s330 = sphi 0, %s316
      %s334 = sphi 0, %s334
      %s336 = sphi 0, %s334
      %s337 = sphi 0, %s336
      %s351 = sphi 0, %s337
      %s355 = sphi 0, %s355
      %s357 = sphi 0, %s355
      %s358 = sphi 0, %s357
      %s372 = sphi 0, %s358
      %s376 = sphi 0, %s376
      %s378 = sphi 0, %s376
      %s379 = sphi 0, %s378
      %s393 = sphi 0, %s379
      %s401 = sphi 0, %s403
      %s404 = sphi 0, %s401
      %s405 = sphi 0, %s404
      %s421 = sphi 0, %s405
    $region4: #{tpu_custom_call.1} parent=1 // loop_header_branch
      %34 = sbr.rel (%p32) target = $region8
    $region5: #{tpu_custom_call.1} parent=1 // loop_body
      %s36 = ssub.s32 %s31, 1
      %s37 = ssub.s32 %s31, 2
      %s44 = sadd.s32 1, %s39
      %p45 = scmp.ge.s32.totalorder %s44, 1
      %s46 = scalar_select %p45, 0, %s44
      %s47 = sadd.s32 1, %s38
      %s48 = scalar_select %p45, %s47, %s38
      %p49 = scmp.ge.s32.totalorder %s48, 2
      %s50 = scalar_select %p49, 0, %s48
      %s51 = ssub.s32 %s38, %s50
      %p52 = scmp.eq.s32.totalorder %s51, 0
      %s54 = sadd.s32 %s53, 1
      %s55 = scalar_select %p52, %s53, %s54
      %p58 = pneg %p52
      %p59 = scmp.eq.s32.totalorder %s31, 1
      %p60 = por %p58, %p59
      %p61 = scmp.ne.s32.totalorder %s53, %s56
      %p62 = scmp.eq.s32.totalorder %s31, 0
      %p63 = por %p61, %p62
      %p64 = scmp.ne.s32.totalorder %s53, %s56
      %p65 = scmp.eq.s32.totalorder %s36, 1
      %p66 = por %p64, %p65
      %p67 = scmp.ne.s32.totalorder %s56, %s57
      %p68 = scmp.eq.s32.totalorder %s36, 0
      %p69 = por %p67, %p68
      %p70 = scmp.ne.s32.totalorder %s56, %s57
      %p71 = scmp.eq.s32.totalorder %s37, 1
      %p72 = por %p70, %p71
      %p74 = scmp.ne.s32.totalorder %s57, %s73
      %p75 = scmp.eq.s32.totalorder %s37, 0
      %p76 = por %p74, %p75
      %s77 = ssub.s32 %s38, %s50
      %p78 = scmp.eq.s32.totalorder %s77, 0
      %s80 = sadd.s32 %s79, 1
      %s81 = scalar_select %p78, %s79, %s80
      %p84 = pneg %p78
      %p85 = scmp.eq.s32.totalorder %s31, 1
      %p86 = por %p84, %p85
      %p87 = scmp.ne.s32.totalorder %s79, %s82
      %p88 = scmp.eq.s32.totalorder %s31, 0
      %p89 = por %p87, %p88
      %p90 = scmp.ne.s32.totalorder %s79, %s82
      %p91 = scmp.eq.s32.totalorder %s36, 1
      %p92 = por %p90, %p91
      %p93 = scmp.ne.s32.totalorder %s82, %s83
      %p94 = scmp.eq.s32.totalorder %s36, 0
      %p95 = por %p93, %p94
      %p96 = scmp.ne.s32.totalorder %s82, %s83
      %p97 = scmp.eq.s32.totalorder %s37, 1
      %p98 = por %p96, %p97
      %p100 = scmp.ne.s32.totalorder %s83, %s99
      %p101 = scmp.eq.s32.totalorder %s37, 0
      %p102 = por %p100, %p101
      %s104 = sadd.s32 %s103, 1
      %p107 = scmp.eq.s32.totalorder %s31, 1
      %p108 = scmp.ne.s32.totalorder %s103, %s105
      %p109 = scmp.eq.s32.totalorder %s31, 0
      %p110 = por %p108, %p109
      %p111 = scmp.ne.s32.totalorder %s103, %s105
      %p112 = scmp.eq.s32.totalorder %s36, 1
      %p113 = por %p111, %p112
      %p114 = scmp.ne.s32.totalorder %s105, %s106
      %p115 = scmp.eq.s32.totalorder %s36, 0
      %p116 = por %p114, %p115
      %p117 = scmp.ne.s32.totalorder %s105, %s106
      %p118 = scmp.eq.s32.totalorder %s37, 1
      %p119 = por %p117, %p118
      %p121 = scmp.ne.s32.totalorder %s106, %s120
      %p122 = scmp.eq.s32.totalorder %s37, 0
      %p123 = por %p121, %p122
      %s125 = sadd.s32 %s124, 1
      %p128 = scmp.eq.s32.totalorder %s31, 1
      %p129 = scmp.ne.s32.totalorder %s124, %s126
      %p130 = scmp.eq.s32.totalorder %s31, 0
      %p131 = por %p129, %p130
      %p132 = scmp.ne.s32.totalorder %s124, %s126
      %p133 = scmp.eq.s32.totalorder %s36, 1
      %p134 = por %p132, %p133
      %p135 = scmp.ne.s32.totalorder %s126, %s127
      %p136 = scmp.eq.s32.totalorder %s36, 0
      %p137 = por %p135, %p136
      %p138 = scmp.ne.s32.totalorder %s126, %s127
      %p139 = scmp.eq.s32.totalorder %s37, 1
      %p140 = por %p138, %p139
      %p142 = scmp.ne.s32.totalorder %s127, %s141
      %p143 = scmp.eq.s32.totalorder %s37, 0
      %p144 = por %p142, %p143
      %s146 = sadd.s32 %s145, 1
      %p149 = scmp.eq.s32.totalorder %s31, 1
      %p150 = scmp.ne.s32.totalorder %s145, %s147
      %p151 = scmp.eq.s32.totalorder %s31, 0
      %p152 = por %p150, %p151
      %p153 = scmp.ne.s32.totalorder %s145, %s147
      %p154 = scmp.eq.s32.totalorder %s36, 1
      %p155 = por %p153, %p154
      %p156 = scmp.ne.s32.totalorder %s147, %s148
      %p157 = scmp.eq.s32.totalorder %s36, 0
      %p158 = por %p156, %p157
      %p159 = scmp.ne.s32.totalorder %s147, %s148
      %p160 = scmp.eq.s32.totalorder %s37, 1
      %p161 = por %p159, %p160
      %p163 = scmp.ne.s32.totalorder %s148, %s162
      %p164 = scmp.eq.s32.totalorder %s37, 0
      %p165 = por %p163, %p164
      %s167 = sadd.s32 %s166, 1
      %p170 = scmp.eq.s32.totalorder %s31, 1
      %p171 = scmp.ne.s32.totalorder %s166, %s168
      %p172 = scmp.eq.s32.totalorder %s31, 0
      %p173 = por %p171, %p172
      %p174 = scmp.ne.s32.totalorder %s166, %s168
      %p175 = scmp.eq.s32.totalorder %s36, 1
      %p176 = por %p174, %p175
      %p177 = scmp.ne.s32.totalorder %s168, %s169
      %p178 = scmp.eq.s32.totalorder %s36, 0
      %p179 = por %p177, %p178
      %p180 = scmp.ne.s32.totalorder %s168, %s169
      %p181 = scmp.eq.s32.totalorder %s37, 1
      %p182 = por %p180, %p181
      %p184 = scmp.ne.s32.totalorder %s169, %s183
      %p185 = scmp.eq.s32.totalorder %s37, 0
      %p186 = por %p184, %p185
      %s188 = sadd.s32 %s187, 1
      %p191 = scmp.eq.s32.totalorder %s31, 1
      %p192 = scmp.ne.s32.totalorder %s187, %s189
      %p193 = scmp.eq.s32.totalorder %s31, 0
      %p194 = por %p192, %p193
      %p195 = scmp.ne.s32.totalorder %s187, %s189
      %p196 = scmp.eq.s32.totalorder %s36, 1
      %p197 = por %p195, %p196
      %p198 = scmp.ne.s32.totalorder %s189, %s190
      %p199 = scmp.eq.s32.totalorder %s36, 0
      %p200 = por %p198, %p199
      %p201 = scmp.ne.s32.totalorder %s189, %s190
      %p202 = scmp.eq.s32.totalorder %s37, 1
      %p203 = por %p201, %p202
      %p205 = scmp.ne.s32.totalorder %s190, %s204
      %p206 = scmp.eq.s32.totalorder %s37, 0
      %p207 = por %p205, %p206
      %s209 = sadd.s32 %s208, 1
      %p212 = scmp.eq.s32.totalorder %s31, 1
      %p213 = scmp.ne.s32.totalorder %s208, %s210
      %p214 = scmp.eq.s32.totalorder %s31, 0
      %p215 = por %p213, %p214
      %p216 = scmp.ne.s32.totalorder %s208, %s210
      %p217 = scmp.eq.s32.totalorder %s36, 1
      %p218 = por %p216, %p217
      %p219 = scmp.ne.s32.totalorder %s210, %s211
      %p220 = scmp.eq.s32.totalorder %s36, 0
      %p221 = por %p219, %p220
      %p222 = scmp.ne.s32.totalorder %s210, %s211
      %p223 = scmp.eq.s32.totalorder %s37, 1
      %p224 = por %p222, %p223
      %p226 = scmp.ne.s32.totalorder %s211, %s225
      %p227 = scmp.eq.s32.totalorder %s37, 0
      %p228 = por %p226, %p227
      %s230 = sadd.s32 %s229, 1
      %p233 = scmp.eq.s32.totalorder %s31, 1
      %p234 = scmp.ne.s32.totalorder %s229, %s231
      %p235 = scmp.eq.s32.totalorder %s31, 0
      %p236 = por %p234, %p235
      %p237 = scmp.ne.s32.totalorder %s229, %s231
      %p238 = scmp.eq.s32.totalorder %s36, 1
      %p239 = por %p237, %p238
      %p240 = scmp.ne.s32.totalorder %s231, %s232
      %p241 = scmp.eq.s32.totalorder %s36, 0
      %p242 = por %p240, %p241
      %p243 = scmp.ne.s32.totalorder %s231, %s232
      %p244 = scmp.eq.s32.totalorder %s37, 1
      %p245 = por %p243, %p244
      %p247 = scmp.ne.s32.totalorder %s232, %s246
      %p248 = scmp.eq.s32.totalorder %s37, 0
      %p249 = por %p247, %p248
      %s251 = sadd.s32 %s250, 1
      %p254 = scmp.eq.s32.totalorder %s31, 1
      %p255 = scmp.ne.s32.totalorder %s250, %s252
      %p256 = scmp.eq.s32.totalorder %s31, 0
      %p257 = por %p255, %p256
      %p258 = scmp.ne.s32.totalorder %s250, %s252
      %p259 = scmp.eq.s32.totalorder %s36, 1
      %p260 = por %p258, %p259
      %p261 = scmp.ne.s32.totalorder %s252, %s253
      %p262 = scmp.eq.s32.totalorder %s36, 0
      %p263 = por %p261, %p262
      %p264 = scmp.ne.s32.totalorder %s252, %s253
      %p265 = scmp.eq.s32.totalorder %s37, 1
      %p266 = por %p264, %p265
      %p268 = scmp.ne.s32.totalorder %s253, %s267
      %p269 = scmp.eq.s32.totalorder %s37, 0
      %p270 = por %p268, %p269
      %s272 = sadd.s32 %s271, 1
      %p275 = scmp.eq.s32.totalorder %s31, 1
      %p276 = scmp.ne.s32.totalorder %s271, %s273
      %p277 = scmp.eq.s32.totalorder %s31, 0
      %p278 = por %p276, %p277
      %p279 = scmp.ne.s32.totalorder %s271, %s273
      %p280 = scmp.eq.s32.totalorder %s36, 1
      %p281 = por %p279, %p280
      %p282 = scmp.ne.s32.totalorder %s273, %s274
      %p283 = scmp.eq.s32.totalorder %s36, 0
      %p284 = por %p282, %p283
      %p285 = scmp.ne.s32.totalorder %s273, %s274
      %p286 = scmp.eq.s32.totalorder %s37, 1
      %p287 = por %p285, %p286
      %p289 = scmp.ne.s32.totalorder %s274, %s288
      %p290 = scmp.eq.s32.totalorder %s37, 0
      %p291 = por %p289, %p290
      %s293 = sadd.s32 %s292, 1
      %p296 = scmp.eq.s32.totalorder %s31, 1
      %p297 = scmp.ne.s32.totalorder %s292, %s294
      %p298 = scmp.eq.s32.totalorder %s31, 0
      %p299 = por %p297, %p298
      %p300 = scmp.ne.s32.totalorder %s292, %s294
      %p301 = scmp.eq.s32.totalorder %s36, 1
      %p302 = por %p300, %p301
      %p303 = scmp.ne.s32.totalorder %s294, %s295
      %p304 = scmp.eq.s32.totalorder %s36, 0
      %p305 = por %p303, %p304
      %p306 = scmp.ne.s32.totalorder %s294, %s295
      %p307 = scmp.eq.s32.totalorder %s37, 1
      %p308 = por %p306, %p307
      %p310 = scmp.ne.s32.totalorder %s295, %s309
      %p311 = scmp.eq.s32.totalorder %s37, 0
      %p312 = por %p310, %p311
      %s314 = sadd.s32 %s313, 1
      %p317 = scmp.eq.s32.totalorder %s31, 1
      %p318 = scmp.ne.s32.totalorder %s313, %s315
      %p319 = scmp.eq.s32.totalorder %s31, 0
      %p320 = por %p318, %p319
      %p321 = scmp.ne.s32.totalorder %s313, %s315
      %p322 = scmp.eq.s32.totalorder %s36, 1
      %p323 = por %p321, %p322
      %p324 = scmp.ne.s32.totalorder %s315, %s316
      %p325 = scmp.eq.s32.totalorder %s36, 0
      %p326 = por %p324, %p325
      %p327 = scmp.ne.s32.totalorder %s315, %s316
      %p328 = scmp.eq.s32.totalorder %s37, 1
      %p329 = por %p327, %p328
      %p331 = scmp.ne.s32.totalorder %s316, %s330
      %p332 = scmp.eq.s32.totalorder %s37, 0
      %p333 = por %p331, %p332
      %s335 = sadd.s32 %s334, 1
      %p338 = scmp.eq.s32.totalorder %s31, 1
      %p339 = scmp.ne.s32.totalorder %s334, %s336
      %p340 = scmp.eq.s32.totalorder %s31, 0
      %p341 = por %p339, %p340
      %p342 = scmp.ne.s32.totalorder %s334, %s336
      %p343 = scmp.eq.s32.totalorder %s36, 1
      %p344 = por %p342, %p343
      %p345 = scmp.ne.s32.totalorder %s336, %s337
      %p346 = scmp.eq.s32.totalorder %s36, 0
      %p347 = por %p345, %p346
      %p348 = scmp.ne.s32.totalorder %s336, %s337
      %p349 = scmp.eq.s32.totalorder %s37, 1
      %p350 = por %p348, %p349
      %p352 = scmp.ne.s32.totalorder %s337, %s351
      %p353 = scmp.eq.s32.totalorder %s37, 0
      %p354 = por %p352, %p353
      %s356 = sadd.s32 %s355, 1
      %p359 = scmp.eq.s32.totalorder %s31, 1
      %p360 = scmp.ne.s32.totalorder %s355, %s357
      %p361 = scmp.eq.s32.totalorder %s31, 0
      %p362 = por %p360, %p361
      %p363 = scmp.ne.s32.totalorder %s355, %s357
      %p364 = scmp.eq.s32.totalorder %s36, 1
      %p365 = por %p363, %p364
      %p366 = scmp.ne.s32.totalorder %s357, %s358
      %p367 = scmp.eq.s32.totalorder %s36, 0
      %p368 = por %p366, %p367
      %p369 = scmp.ne.s32.totalorder %s357, %s358
      %p370 = scmp.eq.s32.totalorder %s37, 1
      %p371 = por %p369, %p370
      %p373 = scmp.ne.s32.totalorder %s358, %s372
      %p374 = scmp.eq.s32.totalorder %s37, 0
      %p375 = por %p373, %p374
      %s377 = sadd.s32 %s376, 1
      %p380 = scmp.eq.s32.totalorder %s31, 1
      %p381 = scmp.ne.s32.totalorder %s376, %s378
      %p382 = scmp.eq.s32.totalorder %s31, 0
      %p383 = por %p381, %p382
      %p384 = scmp.ne.s32.totalorder %s376, %s378
      %p385 = scmp.eq.s32.totalorder %s36, 1
      %p386 = por %p384, %p385
      %p387 = scmp.ne.s32.totalorder %s378, %s379
      %p388 = scmp.eq.s32.totalorder %s36, 0
      %p389 = por %p387, %p388
      %p390 = scmp.ne.s32.totalorder %s378, %s379
      %p391 = scmp.eq.s32.totalorder %s37, 1
      %p392 = por %p390, %p391
      %p394 = scmp.ne.s32.totalorder %s379, %s393
      %p395 = scmp.eq.s32.totalorder %s37, 0
      %p396 = por %p394, %p395
      %s397 = ssub.s32 %s38, %s50
      %s398 = ssub.s32 %s39, %s46
      %s399 = sor.u32 %s397, %s398
      %p400 = scmp.eq.s32.totalorder %s399, 0
      %s402 = sadd.s32 %s401, 1
      %s403 = scalar_select %p400, %s401, %s402
      %p406 = pneg %p400
      %p407 = scmp.eq.s32.totalorder %s31, 1
      %p408 = por %p406, %p407
      %p409 = scmp.ne.s32.totalorder %s401, %s404
      %p410 = scmp.eq.s32.totalorder %s31, 0
      %p411 = por %p409, %p410
      %p412 = scmp.ne.s32.totalorder %s401, %s404
      %p413 = scmp.eq.s32.totalorder %s36, 1
      %p414 = por %p412, %p413
      %p415 = scmp.ne.s32.totalorder %s404, %s405
      %p416 = scmp.eq.s32.totalorder %s36, 0
      %p417 = por %p415, %p416
      %p418 = scmp.ne.s32.totalorder %s404, %s405
      %p419 = scmp.eq.s32.totalorder %s37, 1
      %p420 = por %p418, %p419
      %p422 = scmp.ne.s32.totalorder %s405, %s421
      %p423 = scmp.eq.s32.totalorder %s37, 0
      %p424 = por %p422, %p423
      %p425 = scmp.le.s32.totalorder 1, %s31
      %p426 = scmp.lt.s32.totalorder %s31, 3
      %p427 = pnand %p425, %p426
      %p428 = pneg %p427
      // Predicated region
      $region9: #{tpu_custom_call.1} parent=5 // pred_check
        _
      $region10: #{tpu_custom_call.1} parent=5 // pred_check_branch
        %430 = sbr.rel (%p427) target = $region12
      $region11: #{tpu_custom_call.1} parent=5 // pred_region
        %s431 = ssub.s32 %s31, 1
        // Predicated region
        $region13: #{tpu_custom_call.1} parent=11 // pred_check
          %p432 = pneg %p116
        $region14: #{tpu_custom_call.1} parent=11 // pred_check_branch
          %434 = sbr.rel (%p432) target = $region16
        $region15: #{tpu_custom_call.1} parent=11 // pred_region
          %s436 = ssub.s32 16, 16
          %437 = vsyncadd [#allocation8], %s436
          %s439 = sshll.u32 [#allocation7], 4
          %s440 = int_to_ptr.vmem [resolvable:$true] %s439
          %442 = dma.hbm_to_vmem [thread:$0]  %s2, 16, %s440, [#allocation8]
        $region16: #{tpu_custom_call.1} parent=11 // pred_fallthru
          _
        // Predicated region
        $region17: #{tpu_custom_call.1} parent=11 // pred_check
          %p443 = pneg %p137
        $region18: #{tpu_custom_call.1} parent=11 // pred_check_branch
          %445 = sbr.rel (%p443) target = $region20
        $region19: #{tpu_custom_call.1} parent=11 // pred_region
          %s447 = ssub.s32 16, 16
          %448 = vsyncadd [#allocation8], %s447
          %s450 = sshll.u32 [#allocation9], 4
          %s451 = int_to_ptr.vmem [resolvable:$true] %s450
          %453 = dma.hbm_to_vmem [thread:$0]  %s3, 16, %s451, [#allocation8]
        $region20: #{tpu_custom_call.1} parent=11 // pred_fallthru
          _
        // Predicated region
        $region21: #{tpu_custom_call.1} parent=11 // pred_check
          %p454 = pneg %p158
        $region22: #{tpu_custom_call.1} parent=11 // pred_check_branch
          %456 = sbr.rel (%p454) target = $region24
        $region23: #{tpu_custom_call.1} parent=11 // pred_region
          _
        $region24: #{tpu_custom_call.1} parent=11 // pred_fallthru
          _
        // Predicated region
        $region25: #{tpu_custom_call.1} parent=11 // pred_check
          %p457 = pneg %p179
        $region26: #{tpu_custom_call.1} parent=11 // pred_check_branch
          %459 = sbr.rel (%p457) target = $region28
        $region27: #{tpu_custom_call.1} parent=11 // pred_region
          %s461 = ssub.s32 16, 16
          %462 = vsyncadd [#allocation11], %s461
          %s464 = sshll.u32 [#allocation10], 4
          %s465 = int_to_ptr.vmem [resolvable:$true] %s464
          %467 = dma.hbm_to_vmem [thread:$0]  %s5, 16, %s465, [#allocation11]
        $region28: #{tpu_custom_call.1} parent=11 // pred_fallthru
          _
        // Predicated region
        $region29: #{tpu_custom_call.1} parent=11 // pred_check
          %p468 = pneg %p200
        $region30: #{tpu_custom_call.1} parent=11 // pred_check_branch
          %470 = sbr.rel (%p468) target = $region32
        $region31: #{tpu_custom_call.1} parent=11 // pred_region
          _
        $region32: #{tpu_custom_call.1} parent=11 // pred_fallthru
          _
        // Predicated region
        $region33: #{tpu_custom_call.1} parent=11 // pred_check
          %p471 = pneg %p221
        $region34: #{tpu_custom_call.1} parent=11 // pred_check_branch
          %473 = sbr.rel (%p471) target = $region36
        $region35: #{tpu_custom_call.1} parent=11 // pred_region
          %s475 = ssub.s32 16, 16
          %476 = vsyncadd [#allocation11], %s475
          %s478 = sshll.u32 [#allocation12], 4
          %s479 = int_to_ptr.vmem [resolvable:$true] %s478
          %481 = dma.hbm_to_vmem [thread:$0]  %s7, 16, %s479, [#allocation11]
        $region36: #{tpu_custom_call.1} parent=11 // pred_fallthru
          _
        // Predicated region
        $region37: #{tpu_custom_call.1} parent=11 // pred_check
          %p482 = pneg %p242
        $region38: #{tpu_custom_call.1} parent=11 // pred_check_branch
          %484 = sbr.rel (%p482) target = $region40
        $region39: #{tpu_custom_call.1} parent=11 // pred_region
          %s486 = ssub.s32 256, 256
          %487 = vsyncadd [#allocation14], %s486
          %s488 = sshll.u32 [#allocation13], 4
          %s489 = int_to_ptr.vmem [resolvable:$true] %s488
          %494 = dma.hbm_to_vmem [thread:$0]  %s8, 256, %s489, [#allocation14], 64, 64, 4
        $region40: #{tpu_custom_call.1} parent=11 // pred_fallthru
          _
        // Predicated region
        $region41: #{tpu_custom_call.1} parent=11 // pred_check
          %p495 = pneg %p263
        $region42: #{tpu_custom_call.1} parent=11 // pred_check_branch
          %497 = sbr.rel (%p495) target = $region44
        $region43: #{tpu_custom_call.1} parent=11 // pred_region
          %s499 = ssub.s32 16, 16
          %500 = vsyncadd [#allocation14], %s499
          %s502 = sshll.u32 [#allocation15], 4
          %s503 = int_to_ptr.vmem [resolvable:$true] %s502
          %505 = dma.hbm_to_vmem [thread:$0]  %s9, 16, %s503, [#allocation14]
        $region44: #{tpu_custom_call.1} parent=11 // pred_fallthru
          _
        // Predicated region
        $region45: #{tpu_custom_call.1} parent=11 // pred_check
          %p506 = pneg %p284
        $region46: #{tpu_custom_call.1} parent=11 // pred_check_branch
          %508 = sbr.rel (%p506) target = $region48
        $region47: #{tpu_custom_call.1} parent=11 // pred_region
          _
        $region48: #{tpu_custom_call.1} parent=11 // pred_fallthru
          _
        // Predicated region
        $region49: #{tpu_custom_call.1} parent=11 // pred_check
          %p509 = pneg %p305
        $region50: #{tpu_custom_call.1} parent=11 // pred_check_branch
          %511 = sbr.rel (%p509) target = $region52
        $region51: #{tpu_custom_call.1} parent=11 // pred_region
          _
        $region52: #{tpu_custom_call.1} parent=11 // pred_fallthru
          _
        // Predicated region
        $region53: #{tpu_custom_call.1} parent=11 // pred_check
          %p512 = pneg %p326
        $region54: #{tpu_custom_call.1} parent=11 // pred_check_branch
          %514 = sbr.rel (%p512) target = $region56
        $region55: #{tpu_custom_call.1} parent=11 // pred_region
          _
        $region56: #{tpu_custom_call.1} parent=11 // pred_fallthru
          _
        // Predicated region
        $region57: #{tpu_custom_call.1} parent=11 // pred_check
          %p515 = pneg %p347
        $region58: #{tpu_custom_call.1} parent=11 // pred_check_branch
          %517 = sbr.rel (%p515) target = $region60
        $region59: #{tpu_custom_call.1} parent=11 // pred_region
          _
        $region60: #{tpu_custom_call.1} parent=11 // pred_fallthru
          _
        // Predicated region
        $region61: #{tpu_custom_call.1} parent=11 // pred_check
          %p518 = pneg %p368
        $region62: #{tpu_custom_call.1} parent=11 // pred_check_branch
          %520 = sbr.rel (%p518) target = $region64
        $region63: #{tpu_custom_call.1} parent=11 // pred_region
          _
        $region64: #{tpu_custom_call.1} parent=11 // pred_fallthru
          _
        // Predicated region
        $region65: #{tpu_custom_call.1} parent=11 // pred_check
          %p521 = pneg %p389
        $region66: #{tpu_custom_call.1} parent=11 // pred_check_branch
          %523 = sbr.rel (%p521) target = $region68
        $region67: #{tpu_custom_call.1} parent=11 // pred_region
          _
        $region68: #{tpu_custom_call.1} parent=11 // pred_fallthru
          _
      $region12: #{tpu_custom_call.1} parent=5 // pred_fallthru
        _
      %p524 = scmp.lt.s32.totalorder %s31, 2
      // Predicated region
      $region69: #{tpu_custom_call.1} parent=5 // pred_check
        %p525 = pneg %p524
      $region70: #{tpu_custom_call.1} parent=5 // pred_check_branch
        %527 = sbr.rel (%p525) target = $region72
      $region71: #{tpu_custom_call.1} parent=5 // pred_region
        // Predicated region
        $region73: #{tpu_custom_call.1} parent=71 // pred_check
          %p528 = pneg %p63
        $region74: #{tpu_custom_call.1} parent=71 // pred_check_branch
          %530 = sbr.rel (%p528) target = $region76
        $region75: #{tpu_custom_call.1} parent=71 // pred_region
          %p531 = scmp.lt.s32.totalorder %s38, 1
          %s532 = scalar_select %p531, %s38, 1
          %s533 = smul.addr %s532, 8
          %s534 = scalar_lea.vmem %s0, %s533
        $region76: #{tpu_custom_call.1} parent=71 // pred_fallthru
          _
        // Predicated region
        $region77: #{tpu_custom_call.1} parent=71 // pred_check
          %p535 = pneg %p89
        $region78: #{tpu_custom_call.1} parent=71 // pred_check_branch
          %537 = sbr.rel (%p535) target = $region80
        $region79: #{tpu_custom_call.1} parent=71 // pred_region
          %s538 = sand.u32 %s79, 1
          %s539 = scalar_lea.sflag [#allocation5], %s538
          %s540 = sand.u32 %s79, 1
          %s541 = scalar_lea.vmem [#allocation4], %s540
          %s543 = ssub.s32 16, 16
          %544 = vsyncadd %s539, %s543
          %s545 = smul.addr %s38, 16
          %s546 = scalar_lea.hbm %s1, %s545
          %s548 = sshll.u32 %s541, 4
          %s549 = int_to_ptr.vmem [resolvable:$true] %s548
          %551 = dma.hbm_to_vmem [thread:$0]  %s546, 16, %s549, %s539
        $region80: #{tpu_custom_call.1} parent=71 // pred_fallthru
          _
      $region72: #{tpu_custom_call.1} parent=5 // pred_fallthru
        _
      %p552 = scmp.le.s32.totalorder 1, %s31
      %p553 = scmp.lt.s32.totalorder %s31, 3
      %p554 = pnand %p552, %p553
      %p555 = pneg %p554
      // Predicated region
      $region81: #{tpu_custom_call.1} parent=5 // pred_check
        _
      $region82: #{tpu_custom_call.1} parent=5 // pred_check_branch
        %557 = sbr.rel (%p554) target = $region84
      $region83: #{tpu_custom_call.1} parent=5 // pred_region
        %s558 = ssub.s32 %s31, 1
        %s559 = sand.u32 %s82, 1
        %s560 = scalar_lea.sflag [#allocation5], %s559
        %s561 = sand.u32 %s82, 1
        %s562 = scalar_lea.vmem [#allocation4], %s561
        // Predicated region
        $region85: #{tpu_custom_call.1} parent=83 // pred_check
          %p563 = pneg %p95
        $region86: #{tpu_custom_call.1} parent=83 // pred_check_branch
          %565 = sbr.rel (%p563) target = $region88
        $region87: #{tpu_custom_call.1} parent=83 // pred_region
          %566 = dma.done %s560, 16
        $region88: #{tpu_custom_call.1} parent=83 // pred_fallthru
          _
        // Predicated region
        $region89: #{tpu_custom_call.1} parent=83 // pred_check
          %p567 = pneg %p116
        $region90: #{tpu_custom_call.1} parent=83 // pred_check_branch
          %569 = sbr.rel (%p567) target = $region92
        $region91: #{tpu_custom_call.1} parent=83 // pred_region
          %570 = dma.done [#allocation8], 16
        $region92: #{tpu_custom_call.1} parent=83 // pred_fallthru
          _
        // Predicated region
        $region93: #{tpu_custom_call.1} parent=83 // pred_check
          %p571 = pneg %p137
        $region94: #{tpu_custom_call.1} parent=83 // pred_check_branch
          %573 = sbr.rel (%p571) target = $region96
        $region95: #{tpu_custom_call.1} parent=83 // pred_region
          %574 = dma.done [#allocation8], 16
        $region96: #{tpu_custom_call.1} parent=83 // pred_fallthru
          _
        // Predicated region
        $region97: #{tpu_custom_call.1} parent=83 // pred_check
          %p575 = pneg %p179
        $region98: #{tpu_custom_call.1} parent=83 // pred_check_branch
          %577 = sbr.rel (%p575) target = $region100
        $region99: #{tpu_custom_call.1} parent=83 // pred_region
          %578 = dma.done [#allocation11], 16
        $region100: #{tpu_custom_call.1} parent=83 // pred_fallthru
          _
        // Predicated region
        $region101: #{tpu_custom_call.1} parent=83 // pred_check
          %p579 = pneg %p221
        $region102: #{tpu_custom_call.1} parent=83 // pred_check_branch
          %581 = sbr.rel (%p579) target = $region104
        $region103: #{tpu_custom_call.1} parent=83 // pred_region
          %582 = dma.done [#allocation11], 16
        $region104: #{tpu_custom_call.1} parent=83 // pred_fallthru
          _
        // Predicated region
        $region105: #{tpu_custom_call.1} parent=83 // pred_check
          %p583 = pneg %p242
        $region106: #{tpu_custom_call.1} parent=83 // pred_check_branch
          %585 = sbr.rel (%p583) target = $region108
        $region107: #{tpu_custom_call.1} parent=83 // pred_region
          %586 = dma.done [#allocation14], 256
        $region108: #{tpu_custom_call.1} parent=83 // pred_fallthru
          _
        // Predicated region
        $region109: #{tpu_custom_call.1} parent=83 // pred_check
          %p587 = pneg %p263
        $region110: #{tpu_custom_call.1} parent=83 // pred_check_branch
          %589 = sbr.rel (%p587) target = $region112
        $region111: #{tpu_custom_call.1} parent=83 // pred_region
          %590 = dma.done [#allocation14], 16
        $region112: #{tpu_custom_call.1} parent=83 // pred_fallthru
          _
        %p591 = scmp.lt.s32.totalorder %s40, 1
        %s592 = scalar_select %p591, %s40, 1
        %s593 = smul.addr %s592, 8
        %s594 = scalar_lea.vmem %s0, %s593
        %p595 = pneg %p69
        %p596 = pneg %p66
        %s597 = sand.u32 %s82, 1
        %s598 = scalar_lea.sflag [#allocation5], %s597
        %s599 = sand.u32 %s82, 1
        %s600 = scalar_lea.vmem [#allocation4], %s599
        %p601 = pneg %p95
        %p602 = pneg %p92
        %p603 = pneg %p116
        %p604 = pneg %p113
        %p605 = pneg %p137
        %p606 = pneg %p134
        %p607 = pneg %p158
        %p608 = pneg %p155
        %p609 = pneg %p179
        %p610 = pneg %p176
        %p611 = pneg %p200
        %p612 = pneg %p197
        %p613 = pneg %p221
        %p614 = pneg %p218
        %p615 = pneg %p242
        %p616 = pneg %p239
        %p617 = pneg %p263
        %p618 = pneg %p260
        %p619 = pneg %p284
        %p620 = pneg %p281
        %p621 = pneg %p305
        %p622 = pneg %p302
        %p623 = pneg %p326
        %p624 = pneg %p323
        %p625 = pneg %p347
        %p626 = pneg %p344
        %p627 = pneg %p368
        %p628 = pneg %p365
        %p629 = pneg %p389
        %p630 = pneg %p386
        %p631 = pneg %p417
        %p632 = pneg %p414
        %s633 = sand.u32 %s404, 1
        %s634 = scalar_lea.sflag [#allocation6], %s633
        %s635 = sand.u32 %s404, 1
        %s636 = smul.addr %s635, 8
        %s637 = scalar_lea.vmem [#allocation16], %s636
        %p638 = scmp.lt.s32.totalorder %s40, 1
        %s639 = scalar_select %p638, %s40, 1
        %s640 = smul.addr %s639, 8
        %s641 = scalar_lea.vmem %s0, %s640
        %p643 = scmp.eq.s32.totalorder %s41, 0
        // Predicated region
        $region113: #{tpu_custom_call.1} parent=83 // pred_check
          %p644 = pneg %p643
        $region114: #{tpu_custom_call.1} parent=83 // pred_check_branch
          %646 = sbr.rel (%p644) target = $region116
        $region115: #{tpu_custom_call.1} parent=83 // pred_region
          %v647 = vld [vmem:[%s641] sm:$0xff]
          %v648 = vld [vmem:[#allocation7] sm:$0x1]
          %v649 = vld [vmem:[#allocation9] sm:$0x1]
          %vm650 = vcmask 261120
          %v651 = vsel %vm650, %v647, 0.0
          %652 = vadd.xlane.f32.xlu0 %v651
          %v653 = vpop.xlane.xlu0 %652
          %v654 = vrcp.pop 32.0
          %v655 = vmul.f32 %v653, %v654
          %v656 = vsub.f32 %v647, %v655
          %v657 = vmul.f32 %v656, %v656
          %v658 = vsel %vm650, %v657, 0.0
          %659 = vadd.xlane.f32.xlu0 %v658
          %v660 = vpop.xlane.xlu0 %659
          %v661 = vmul.f32 %v660, %v654
          %v662 = vadd.f32 %v661, 1e-06
          %v663 = vrsqrt.pop %v662
          %v664 = vmul.f32 %v656, %v663
          %v666 = vlaneseq
          %v667 = vshrl.u32 %v666, 7
          %v668 = vsub.s32 0, %v667
          %v669 = vrot.slane %v648, %v668
          %v671 = vmul.f32 %v664, %v669
          %v673 = vlaneseq
          %v674 = vshrl.u32 %v673, 7
          %v675 = vsub.s32 0, %v674
          %v676 = vrot.slane %v649, %v675
          %v678 = vadd.f32 %v671, %v676
          %v679 = vpack.c.bf16 %v678, %v678
          %v680 = vld [vmem:[%s6] sm:$0xf]
          %v681 = vld [vmem:[%s6 + $0x4] sm:$0xf]
          %v682 = vld [vmem:[%s6 + $0x8] sm:$0xf]
          %v683 = vld [vmem:[%s6 + $0xc] sm:$0xf]
          %v684 = vld [vmem:[#allocation12] sm:$0x1]
          %v686 = vlaneseq
          %v687 = vshrl.u32 %v686, 7
          %v688 = vsub.s32 0, %v687
          %v689 = vrot.slane %v684, %v688
          %v695 = vunpack.c.l.b16 %v680
          %v696 = vunpack.c.l.b16 %v681
          %v697 = vunpack.c.l.b16 %v682
          %v698 = vunpack.c.l.b16 %v683
          %v699 = vpack.c.b16 %v696, %v695
          %v700 = vpack.c.b16 %v698, %v697
          %v704 = vsel %vm650, %v679, 0
          %706 = vmatprep.subr.bf16.mxu0 0
          %707 = vmatpush1.bf16.msra.mxu0 0
          %708 = vmatprep.subr.bf16.mxu0 0
          %709 = vmatpush1.bf16.msra.mxu0 0
          %710 = vmatprep.subr.bf16.mxu0 0
          %711 = vmatpush1.bf16.msra.mxu0 0
          %712 = vmatprep.subr.bf16.mxu0 0
          %713 = vmatpush1.bf16.msra.mxu0 0
          %714 = vmatprep.subr.bf16.mxu0 0
          %715 = vmatpush1.bf16.msra.mxu0 0
          %716 = vmatprep.subr.bf16.mxu0 0
          %717 = vmatpush1.bf16.msra.mxu0 0
          %718 = vmatprep.subr.bf16.mxu0 0
          %719 = vmatpush1.bf16.msra.mxu0 %v700
          %720 = vmatprep.subr.bf16.mxu0 0
          %721 = vmatpush1.bf16.msra.mxu0 %v699
          %722 = vmatprep.subr.bf16.mxu0 0
          %723 = vmatpush2.bf16.msra.mxu0 0
          %724 = vmatprep.subr.bf16.mxu0 0
          %725 = vmatpush2.bf16.msra.mxu0 0
          %726 = vmatprep.subr.bf16.mxu0 0
          %727 = vmatpush2.bf16.msra.mxu0 0
          %728 = vmatprep.subr.bf16.mxu0 0
          %729 = vmatpush2.bf16.msra.mxu0 0
          %730 = vmatprep.subr.bf16.mxu0 0
          %731 = vmatpush2.bf16.msra.mxu0 0
          %732 = vmatprep.subr.bf16.mxu0 0
          %733 = vmatpush2.bf16.msra.mxu0 0
          %734 = vmatprep.subr.bf16.mxu0 0
          %735 = vmatpush2.bf16.msra.mxu0 0
          %736 = vmatprep.subr.bf16.mxu0 0
          %737 = vmatpush2.bf16.msra.mxu0 0
          %738 = vmatprep.mubr.bf16.mxu0 0
          %739 = vmatmul.mubr.bf16.gmra.mxu0 %v704
          %v740 = vpop.f32.mrf.mxu0
          %v741 = vadd.f32 %v689, %v740
          %v742 = vpop.f32.mrf.mxu0
          %v743 = vpop.f32.mrf.mxu0
          %v744 = vpop.f32.mrf.mxu0
          %745 = vdwg.mxu0
          %v746 = vld [vmem:[#allocation13] sm:$0xf]
          %v747 = vld [vmem:[#allocation13 + $0x4] sm:$0xf]
          %v748 = vld [vmem:[#allocation13 + $0x8] sm:$0xf]
          %v749 = vld [vmem:[#allocation13 + $0xc] sm:$0xf]
          %v750 = vld [vmem:[#allocation15] sm:$0x1]
          %v752 = vlaneseq
          %v753 = vshrl.u32 %v752, 7
          %v754 = vsub.s32 0, %v753
          %v755 = vrot.slane %v750, %v754
          %v761 = vunpack.c.l.b16 %v746
          %v762 = vunpack.c.l.b16 %v747
          %v763 = vunpack.c.l.b16 %v748
          %v764 = vunpack.c.l.b16 %v749
          %v765 = vpack.c.b16 %v762, %v761
          %v766 = vpack.c.b16 %v764, %v763
          %769 = vmatprep.subr.bf16.mxu0 0
          %770 = vmatpush1.bf16.msra.mxu0 0
          %771 = vmatprep.subr.bf16.mxu0 0
          %772 = vmatpush1.bf16.msra.mxu0 0
          %773 = vmatprep.subr.bf16.mxu0 0
          %774 = vmatpush1.bf16.msra.mxu0 0
          %775 = vmatprep.subr.bf16.mxu0 0
          %776 = vmatpush1.bf16.msra.mxu0 0
          %777 = vmatprep.subr.bf16.mxu0 0
          %778 = vmatpush1.bf16.msra.mxu0 0
          %779 = vmatprep.subr.bf16.mxu0 0
          %780 = vmatpush1.bf16.msra.mxu0 0
          %781 = vmatprep.subr.bf16.mxu0 0
          %782 = vmatpush1.bf16.msra.mxu0 %v766
          %783 = vmatprep.subr.bf16.mxu0 0
          %784 = vmatpush1.bf16.msra.mxu0 %v765
          %785 = vmatprep.subr.bf16.mxu0 0
          %786 = vmatpush2.bf16.msra.mxu0 0
          %787 = vmatprep.subr.bf16.mxu0 0
          %788 = vmatpush2.bf16.msra.mxu0 0
          %789 = vmatprep.subr.bf16.mxu0 0
          %790 = vmatpush2.bf16.msra.mxu0 0
          %791 = vmatprep.subr.bf16.mxu0 0
          %792 = vmatpush2.bf16.msra.mxu0 0
          %793 = vmatprep.subr.bf16.mxu0 0
          %794 = vmatpush2.bf16.msra.mxu0 0
          %795 = vmatprep.subr.bf16.mxu0 0
          %796 = vmatpush2.bf16.msra.mxu0 0
          %797 = vmatprep.subr.bf16.mxu0 0
          %798 = vmatpush2.bf16.msra.mxu0 0
          %799 = vmatprep.subr.bf16.mxu0 0
          %800 = vmatpush2.bf16.msra.mxu0 0
          %801 = vmatprep.mubr.bf16.mxu0 0
          %802 = vmatmul.mubr.bf16.gmra.mxu0 %v704
          %v803 = vpop.f32.mrf.mxu0
          %v804 = vadd.f32 %v755, %v803
          %v805 = vpop.f32.mrf.mxu0
          %v806 = vpop.f32.mrf.mxu0
          %v807 = vpop.f32.mrf.mxu0
          %808 = vdwg.mxu0
          %v809 = vpack.c.bf16 %v741, %v741
          %vm810 = vcmask 257024
          %811 = vst.msk [vmem:[#allocation2] sm:$0xf] %vm810, %v809
          %v812 = vpack.c.bf16 %v804, %v804
          %813 = vst.msk [vmem:[#allocation3] sm:$0xf] %vm810, %v812
        $region116: #{tpu_custom_call.1} parent=83 // pred_fallthru
          _
        %s814 = smul.u32 %s41, 8
        %s815 = scalar_lea.vmem %s641, %s814
        %v816 = vld [vmem:[%s815] sm:$0xff]
        %v817 = vld [vmem:[#allocation7] sm:$0x1]
        %v818 = vld [vmem:[#allocation9] sm:$0x1]
        %vm819 = vcmask 261120
        %v820 = vsel %vm819, %v816, 0.0
        %821 = vadd.xlane.f32.xlu0 %v820
        %v822 = vpop.xlane.xlu0 %821
        %v823 = vrcp.pop 32.0
        %v824 = vmul.f32 %v822, %v823
        %v825 = vsub.f32 %v816, %v824
        %v826 = vmul.f32 %v825, %v825
        %v827 = vsel %vm819, %v826, 0.0
        %828 = vadd.xlane.f32.xlu0 %v827
        %v829 = vpop.xlane.xlu0 %828
        %v830 = vmul.f32 %v829, %v823
        %v831 = vadd.f32 %v830, 1e-06
        %v832 = vrsqrt.pop %v831
        %v833 = vmul.f32 %v825, %v832
        %v835 = vlaneseq
        %v836 = vshrl.u32 %v835, 7
        %v837 = vsub.s32 0, %v836
        %v838 = vrot.slane %v817, %v837
        %v840 = vmul.f32 %v833, %v838
        %v842 = vlaneseq
        %v843 = vshrl.u32 %v842, 7
        %v844 = vsub.s32 0, %v843
        %v845 = vrot.slane %v818, %v844
        %v847 = vadd.f32 %v840, %v845
        %v848 = vpack.c.bf16 %v847, %v847
        %v849 = vld [vmem:[%s4] sm:$0xf]
        %v850 = vld [vmem:[%s4 + $0x4] sm:$0xf]
        %v851 = vld [vmem:[%s4 + $0x8] sm:$0xf]
        %v852 = vld [vmem:[%s4 + $0xc] sm:$0xf]
        %v853 = vld [vmem:[#allocation10] sm:$0x1]
        %v855 = vlaneseq
        %v856 = vshrl.u32 %v855, 7
        %v857 = vsub.s32 0, %v856
        %v858 = vrot.slane %v853, %v857
        %v864 = vunpack.c.l.b16 %v849
        %v865 = vunpack.c.l.b16 %v850
        %v866 = vunpack.c.l.b16 %v851
        %v867 = vunpack.c.l.b16 %v852
        %v868 = vpack.c.b16 %v865, %v864
        %v869 = vpack.c.b16 %v867, %v866
        %v873 = vsel %vm819, %v848, 0
        %875 = vmatprep.subr.bf16.mxu0 0
        %876 = vmatpush1.bf16.msra.mxu0 0
        %877 = vmatprep.subr.bf16.mxu0 0
        %878 = vmatpush1.bf16.msra.mxu0 0
        %879 = vmatprep.subr.bf16.mxu0 0
        %880 = vmatpush1.bf16.msra.mxu0 0
        %881 = vmatprep.subr.bf16.mxu0 0
        %882 = vmatpush1.bf16.msra.mxu0 0
        %883 = vmatprep.subr.bf16.mxu0 0
        %884 = vmatpush1.bf16.msra.mxu0 0
        %885 = vmatprep.subr.bf16.mxu0 0
        %886 = vmatpush1.bf16.msra.mxu0 0
        %887 = vmatprep.subr.bf16.mxu0 0
        %888 = vmatpush1.bf16.msra.mxu0 %v869
        %889 = vmatprep.subr.bf16.mxu0 0
        %890 = vmatpush1.bf16.msra.mxu0 %v868
        %891 = vmatprep.subr.bf16.mxu0 0
        %892 = vmatpush2.bf16.msra.mxu0 0
        %893 = vmatprep.subr.bf16.mxu0 0
        %894 = vmatpush2.bf16.msra.mxu0 0
        %895 = vmatprep.subr.bf16.mxu0 0
        %896 = vmatpush2.bf16.msra.mxu0 0
        %897 = vmatprep.subr.bf16.mxu0 0
        %898 = vmatpush2.bf16.msra.mxu0 0
        %899 = vmatprep.subr.bf16.mxu0 0
        %900 = vmatpush2.bf16.msra.mxu0 0
        %901 = vmatprep.subr.bf16.mxu0 0
        %902 = vmatpush2.bf16.msra.mxu0 0
        %903 = vmatprep.subr.bf16.mxu0 0
        %904 = vmatpush2.bf16.msra.mxu0 0
        %905 = vmatprep.subr.bf16.mxu0 0
        %906 = vmatpush2.bf16.msra.mxu0 0
        %907 = vmatprep.mubr.bf16.mxu0 0
        %908 = vmatmul.mubr.bf16.gmra.mxu0 %v873
        %v909 = vpop.f32.mrf.mxu0
        %v910 = vadd.f32 %v858, %v909
        %v911 = vpop.f32.mrf.mxu0
        %v912 = vpop.f32.mrf.mxu0
        %v913 = vpop.f32.mrf.mxu0
        %914 = vdwg.mxu0
        %v915 = vpack.c.bf16 %v910, %v910
        %v916 = vld [vmem:[%s562] sm:$0x1]
        %vm917 = vcmp.eq.f32.partialorder %v916, 0.0
        %v918 = vsel %vm917, -1e+09, 0.0
        %v919 = vld [vmem:[#allocation2] sm:$0xf]
        %v920 = vld [vmem:[#allocation3] sm:$0xf]
        %v922 = vlaneseq
        %v923 = vshrl.u32 %v922, 7
        %v924 = vsub.s32 0, %v923
        %v925 = vrot.slane %v918, %v924
        %vm927 = vcmask 64512
        %v929 = vsel %vm927, %v915, 0
        %v932 = vsel %vm927, %v919, 0
        %934 = vmatprep.subr.bf16.mxu0 0
        %935 = vmatpush1.bf16.xpose.msra.mxu0 0
        %936 = vmatprep.subr.bf16.mxu0 0
        %937 = vmatpush1.bf16.xpose.msra.mxu0 0
        %938 = vmatprep.subr.bf16.mxu0 0
        %939 = vmatpush1.bf16.xpose.msra.mxu0 0
        %940 = vmatprep.subr.bf16.mxu0 0
        %941 = vmatpush1.bf16.xpose.msra.mxu0 0
        %942 = vmatprep.subr.bf16.mxu0 0
        %943 = vmatpush1.bf16.xpose.msra.mxu0 0
        %944 = vmatprep.subr.bf16.mxu0 0
        %945 = vmatpush1.bf16.xpose.msra.mxu0 0
        %946 = vmatprep.subr.bf16.mxu0 0
        %947 = vmatpush1.bf16.xpose.msra.mxu0 0
        %948 = vmatprep.subr.bf16.mxu0 0
        %949 = vmatpush1.bf16.xpose.msra.mxu0 %v932
        %950 = vmatprep.subr.bf16.mxu0 0
        %951 = vmatpush2.bf16.xpose.msra.mxu0 0
        %952 = vmatprep.subr.bf16.mxu0 0
        %953 = vmatpush2.bf16.xpose.msra.mxu0 0
        %954 = vmatprep.subr.bf16.mxu0 0
        %955 = vmatpush2.bf16.xpose.msra.mxu0 0
        %956 = vmatprep.subr.bf16.mxu0 0
        %957 = vmatpush2.bf16.xpose.msra.mxu0 0
        %958 = vmatprep.subr.bf16.mxu0 0
        %959 = vmatpush2.bf16.xpose.msra.mxu0 0
        %960 = vmatprep.subr.bf16.mxu0 0
        %961 = vmatpush2.bf16.xpose.msra.mxu0 0
        %962 = vmatprep.subr.bf16.mxu0 0
        %963 = vmatpush2.bf16.xpose.msra.mxu0 0
        %964 = vmatprep.subr.bf16.mxu0 0
        %965 = vmatpush2.bf16.xpose.msra.mxu0 0
        %966 = vmatprep.mubr.bf16.mxu0 0
        %967 = vmatmul.mubr.bf16.gmra.mxu0 %v929
        %v968 = vpop.f32.mrf.mxu0
        %v969 = vadd.f32 %v925, %v968
        %v970 = vpop.f32.mrf.mxu0
        %v971 = vpop.f32.mrf.mxu0
        %v972 = vpop.f32.mrf.mxu0
        %973 = vdwg.mxu0
        %v974 = vsel %vm927, %v969, -inf
        %975 = vmax.xlane.f32.xlu0 %v974
        %v976 = vpop.xlane.xlu0 %975
        %v977 = vsub.f32 %v969, %v976
        %v978 = vmul.f32 %v977, 1.442695
        %v979 = vpow.pop %v978
        %v980 = vsel %vm927, %v979, 0.0
        %981 = vadd.xlane.f32.xlu0 %v980
        %v982 = vpop.xlane.xlu0 %981
        %v983 = vrcp.pop %v982
        %v984 = vmul.f32 %v979, %v983
        %v985 = vpack.c.bf16 %v984, %v984
        %v987 = vsel %vm927, %v985, 0
        %vm989 = vcmask 1043456
        %v991 = vsel %vm989, %v920, 0
        %993 = vmatprep.subr.bf16.mxu0 0
        %994 = vmatpush1.bf16.msra.mxu0 0
        %995 = vmatprep.subr.bf16.mxu0 0
        %996 = vmatpush1.bf16.msra.mxu0 0
        %997 = vmatprep.subr.bf16.mxu0 0
        %998 = vmatpush1.bf16.msra.mxu0 0
        %999 = vmatprep.subr.bf16.mxu0 0
        %1000 = vmatpush1.bf16.msra.mxu0 0
        %1001 = vmatprep.subr.bf16.mxu0 0
        %1002 = vmatpush1.bf16.msra.mxu0 0
        %1003 = vmatprep.subr.bf16.mxu0 0
        %1004 = vmatpush1.bf16.msra.mxu0 0
        %1005 = vmatprep.subr.bf16.mxu0 0
        %1006 = vmatpush1.bf16.msra.mxu0 0
        %1007 = vmatprep.subr.bf16.mxu0 0
        %1008 = vmatpush1.bf16.msra.mxu0 %v991
        %1009 = vmatprep.subr.bf16.mxu0 0
        %1010 = vmatpush2.bf16.msra.mxu0 0
        %1011 = vmatprep.subr.bf16.mxu0 0
        %1012 = vmatpush2.bf16.msra.mxu0 0
        %1013 = vmatprep.subr.bf16.mxu0 0
        %1014 = vmatpush2.bf16.msra.mxu0 0
        %1015 = vmatprep.subr.bf16.mxu0 0
        %1016 = vmatpush2.bf16.msra.mxu0 0
        %1017 = vmatprep.subr.bf16.mxu0 0
        %1018 = vmatpush2.bf16.msra.mxu0 0
        %1019 = vmatprep.subr.bf16.mxu0 0
        %1020 = vmatpush2.bf16.msra.mxu0 0
        %1021 = vmatprep.subr.bf16.mxu0 0
        %1022 = vmatpush2.bf16.msra.mxu0 0
        %1023 = vmatprep.subr.bf16.mxu0 0
        %1024 = vmatpush2.bf16.msra.mxu0 0
        %1025 = vmatprep.mubr.bf16.mxu0 0
        %1026 = vmatmul.mubr.bf16.gmra.mxu0 %v987
        %v1027 = vpop.f32.mrf.mxu0
        %v1028 = vadd.f32 0.0, %v1027
        %v1029 = vpop.f32.mrf.mxu0
        %v1030 = vpop.f32.mrf.mxu0
        %v1031 = vpop.f32.mrf.mxu0
        %1032 = vdwg.mxu0
        %1034 = vrot.lane.b32.xlu0 %v915, 120
        %v1035 = vpop.permute.xlu0 %1034
        %v1037 = vunpack.c.l.b16 %v919
        %v1038 = vpack.c.b16 %v1037, %v1037
        %1039 = vrot.lane.b32.xlu0 %v1038, 120
        %v1040 = vpop.permute.xlu0 %1039
        %v1042 = vsel %vm927, %v1035, 0
        %v1045 = vsel %vm927, %v1040, 0
        %1047 = vmatprep.subr.bf16.mxu0 0
        %1048 = vmatpush1.bf16.xpose.msra.mxu0 0
        %1049 = vmatprep.subr.bf16.mxu0 0
        %1050 = vmatpush1.bf16.xpose.msra.mxu0 0
        %1051 = vmatprep.subr.bf16.mxu0 0
        %1052 = vmatpush1.bf16.xpose.msra.mxu0 0
        %1053 = vmatprep.subr.bf16.mxu0 0
        %1054 = vmatpush1.bf16.xpose.msra.mxu0 0
        %1055 = vmatprep.subr.bf16.mxu0 0
        %1056 = vmatpush1.bf16.xpose.msra.mxu0 0
        %1057 = vmatprep.subr.bf16.mxu0 0
        %1058 = vmatpush1.bf16.xpose.msra.mxu0 0
        %1059 = vmatprep.subr.bf16.mxu0 0
        %1060 = vmatpush1.bf16.xpose.msra.mxu0 0
        %1061 = vmatprep.subr.bf16.mxu0 0
        %1062 = vmatpush1.bf16.xpose.msra.mxu0 %v1045
        %1063 = vmatprep.subr.bf16.mxu0 0
        %1064 = vmatpush2.bf16.xpose.msra.mxu0 0
        %1065 = vmatprep.subr.bf16.mxu0 0
        %1066 = vmatpush2.bf16.xpose.msra.mxu0 0
        %1067 = vmatprep.subr.bf16.mxu0 0
        %1068 = vmatpush2.bf16.xpose.msra.mxu0 0
        %1069 = vmatprep.subr.bf16.mxu0 0
        %1070 = vmatpush2.bf16.xpose.msra.mxu0 0
        %1071 = vmatprep.subr.bf16.mxu0 0
        %1072 = vmatpush2.bf16.xpose.msra.mxu0 0
        %1073 = vmatprep.subr.bf16.mxu0 0
        %1074 = vmatpush2.bf16.xpose.msra.mxu0 0
        %1075 = vmatprep.subr.bf16.mxu0 0
        %1076 = vmatpush2.bf16.xpose.msra.mxu0 0
        %1077 = vmatprep.subr.bf16.mxu0 0
        %1078 = vmatpush2.bf16.xpose.msra.mxu0 0
        %1079 = vmatprep.mubr.bf16.mxu0 0
        %1080 = vmatmul.mubr.bf16.gmra.mxu0 %v1042
        %v1081 = vpop.f32.mrf.mxu0
        %v1082 = vadd.f32 %v925, %v1081
        %v1083 = vpop.f32.mrf.mxu0
        %v1084 = vpop.f32.mrf.mxu0
        %v1085 = vpop.f32.mrf.mxu0
        %1086 = vdwg.mxu0
        %v1087 = vsel %vm927, %v1082, -inf
        %1088 = vmax.xlane.f32.xlu0 %v1087
        %v1089 = vpop.xlane.xlu0 %1088
        %v1090 = vsub.f32 %v1082, %v1089
        %v1091 = vmul.f32 %v1090, 1.442695
        %v1092 = vpow.pop %v1091
        %v1093 = vsel %vm927, %v1092, 0.0
        %1094 = vadd.xlane.f32.xlu0 %v1093
        %v1095 = vpop.xlane.xlu0 %1094
        %v1096 = vrcp.pop %v1095
        %v1097 = vmul.f32 %v1092, %v1096
        %v1098 = vpack.c.bf16 %v1097, %v1097
        %v1100 = vunpack.c.l.b16 %v920
        %v1101 = vpack.c.b16 %v1100, %v1100
        %1102 = vrot.lane.b32.xlu0 %v1101, 120
        %v1103 = vpop.permute.xlu0 %1102
        %v1105 = vsel %vm927, %v1098, 0
        %v1108 = vsel %vm989, %v1103, 0
        %1110 = vmatprep.subr.bf16.mxu0 0
        %1111 = vmatpush1.bf16.msra.mxu0 0
        %1112 = vmatprep.subr.bf16.mxu0 0
        %1113 = vmatpush1.bf16.msra.mxu0 0
        %1114 = vmatprep.subr.bf16.mxu0 0
        %1115 = vmatpush1.bf16.msra.mxu0 0
        %1116 = vmatprep.subr.bf16.mxu0 0
        %1117 = vmatpush1.bf16.msra.mxu0 0
        %1118 = vmatprep.subr.bf16.mxu0 0
        %1119 = vmatpush1.bf16.msra.mxu0 0
        %1120 = vmatprep.subr.bf16.mxu0 0
        %1121 = vmatpush1.bf16.msra.mxu0 0
        %1122 = vmatprep.subr.bf16.mxu0 0
        %1123 = vmatpush1.bf16.msra.mxu0 0
        %1124 = vmatprep.subr.bf16.mxu0 0
        %1125 = vmatpush1.bf16.msra.mxu0 %v1108
        %1126 = vmatprep.subr.bf16.mxu0 0
        %1127 = vmatpush2.bf16.msra.mxu0 0
        %1128 = vmatprep.subr.bf16.mxu0 0
        %1129 = vmatpush2.bf16.msra.mxu0 0
        %1130 = vmatprep.subr.bf16.mxu0 0
        %1131 = vmatpush2.bf16.msra.mxu0 0
        %1132 = vmatprep.subr.bf16.mxu0 0
        %1133 = vmatpush2.bf16.msra.mxu0 0
        %1134 = vmatprep.subr.bf16.mxu0 0
        %1135 = vmatpush2.bf16.msra.mxu0 0
        %1136 = vmatprep.subr.bf16.mxu0 0
        %1137 = vmatpush2.bf16.msra.mxu0 0
        %1138 = vmatprep.subr.bf16.mxu0 0
        %1139 = vmatpush2.bf16.msra.mxu0 0
        %1140 = vmatprep.subr.bf16.mxu0 0
        %1141 = vmatpush2.bf16.msra.mxu0 0
        %1142 = vmatprep.mubr.bf16.mxu0 0
        %1143 = vmatmul.mubr.bf16.gmra.mxu0 %v1105
        %v1144 = vpop.f32.mrf.mxu0
        %v1145 = vadd.f32 0.0, %v1144
        %v1146 = vpop.f32.mrf.mxu0
        %v1147 = vpop.f32.mrf.mxu0
        %v1148 = vpop.f32.mrf.mxu0
        %1149 = vdwg.mxu0
        %1150 = vrot.lane.b32.xlu0 %v915, 112
        %v1151 = vpop.permute.xlu0 %1150
        %1152 = vrot.lane.b32.xlu0 %v1038, 112
        %v1153 = vpop.permute.xlu0 %1152
        %v1155 = vsel %vm927, %v1151, 0
        %v1158 = vsel %vm927, %v1153, 0
        %1160 = vmatprep.subr.bf16.mxu0 0
        %1161 = vmatpush1.bf16.xpose.msra.mxu0 0
        %1162 = vmatprep.subr.bf16.mxu0 0
        %1163 = vmatpush1.bf16.xpose.msra.mxu0 0
        %1164 = vmatprep.subr.bf16.mxu0 0
        %1165 = vmatpush1.bf16.xpose.msra.mxu0 0
        %1166 = vmatprep.subr.bf16.mxu0 0
        %1167 = vmatpush1.bf16.xpose.msra.mxu0 0
        %1168 = vmatprep.subr.bf16.mxu0 0
        %1169 = vmatpush1.bf16.xpose.msra.mxu0 0
        %1170 = vmatprep.subr.bf16.mxu0 0
        %1171 = vmatpush1.bf16.xpose.msra.mxu0 0
        %1172 = vmatprep.subr.bf16.mxu0 0
        %1173 = vmatpush1.bf16.xpose.msra.mxu0 0
        %1174 = vmatprep.subr.bf16.mxu0 0
        %1175 = vmatpush1.bf16.xpose.msra.mxu0 %v1158
        %1176 = vmatprep.subr.bf16.mxu0 0
        %1177 = vmatpush2.bf16.xpose.msra.mxu0 0
        %1178 = vmatprep.subr.bf16.mxu0 0
        %1179 = vmatpush2.bf16.xpose.msra.mxu0 0
        %1180 = vmatprep.subr.bf16.mxu0 0
        %1181 = vmatpush2.bf16.xpose.msra.mxu0 0
        %1182 = vmatprep.subr.bf16.mxu0 0
        %1183 = vmatpush2.bf16.xpose.msra.mxu0 0
        %1184 = vmatprep.subr.bf16.mxu0 0
        %1185 = vmatpush2.bf16.xpose.msra.mxu0 0
        %1186 = vmatprep.subr.bf16.mxu0 0
        %1187 = vmatpush2.bf16.xpose.msra.mxu0 0
        %1188 = vmatprep.subr.bf16.mxu0 0
        %1189 = vmatpush2.bf16.xpose.msra.mxu0 0
        %1190 = vmatprep.subr.bf16.mxu0 0
        %1191 = vmatpush2.bf16.xpose.msra.mxu0 0
        %1192 = vmatprep.mubr.bf16.mxu0 0
        %1193 = vmatmul.mubr.bf16.gmra.mxu0 %v1155
        %v1194 = vpop.f32.mrf.mxu0
        %v1195 = vadd.f32 %v925, %v1194
        %v1196 = vpop.f32.mrf.mxu0
        %v1197 = vpop.f32.mrf.mxu0
        %v1198 = vpop.f32.mrf.mxu0
        %1199 = vdwg.mxu0
        %v1200 = vsel %vm927, %v1195, -inf
        %1201 = vmax.xlane.f32.xlu0 %v1200
        %v1202 = vpop.xlane.xlu0 %1201
        %v1203 = vsub.f32 %v1195, %v1202
        %v1204 = vmul.f32 %v1203, 1.442695
        %v1205 = vpow.pop %v1204
        %v1206 = vsel %vm927, %v1205, 0.0
        %1207 = vadd.xlane.f32.xlu0 %v1206
        %v1208 = vpop.xlane.xlu0 %1207
        %v1209 = vrcp.pop %v1208
        %v1210 = vmul.f32 %v1205, %v1209
        %v1211 = vpack.c.bf16 %v1210, %v1210
        %1212 = vrot.lane.b32.xlu0 %v1101, 112
        %v1213 = vpop.permute.xlu0 %1212
        %v1215 = vsel %vm927, %v1211, 0
        %v1218 = vsel %vm989, %v1213, 0
        %1220 = vmatprep.subr.bf16.mxu0 0
        %1221 = vmatpush1.bf16.msra.mxu0 0
        %1222 = vmatprep.subr.bf16.mxu0 0
        %1223 = vmatpush1.bf16.msra.mxu0 0
        %1224 = vmatprep.subr.bf16.mxu0 0
        %1225 = vmatpush1.bf16.msra.mxu0 0
        %1226 = vmatprep.subr.bf16.mxu0 0
        %1227 = vmatpush1.bf16.msra.mxu0 0
        %1228 = vmatprep.subr.bf16.mxu0 0
        %1229 = vmatpush1.bf16.msra.mxu0 0
        %1230 = vmatprep.subr.bf16.mxu0 0
        %1231 = vmatpush1.bf16.msra.mxu0 0
        %1232 = vmatprep.subr.bf16.mxu0 0
        %1233 = vmatpush1.bf16.msra.mxu0 0
        %1234 = vmatprep.subr.bf16.mxu0 0
        %1235 = vmatpush1.bf16.msra.mxu0 %v1218
        %1236 = vmatprep.subr.bf16.mxu0 0
        %1237 = vmatpush2.bf16.msra.mxu0 0
        %1238 = vmatprep.subr.bf16.mxu0 0
        %1239 = vmatpush2.bf16.msra.mxu0 0
        %1240 = vmatprep.subr.bf16.mxu0 0
        %1241 = vmatpush2.bf16.msra.mxu0 0
        %1242 = vmatprep.subr.bf16.mxu0 0
        %1243 = vmatpush2.bf16.msra.mxu0 0
        %1244 = vmatprep.subr.bf16.mxu0 0
        %1245 = vmatpush2.bf16.msra.mxu0 0
        %1246 = vmatprep.subr.bf16.mxu0 0
        %1247 = vmatpush2.bf16.msra.mxu0 0
        %1248 = vmatprep.subr.bf16.mxu0 0
        %1249 = vmatpush2.bf16.msra.mxu0 0
        %1250 = vmatprep.subr.bf16.mxu0 0
        %1251 = vmatpush2.bf16.msra.mxu0 0
        %1252 = vmatprep.mubr.bf16.mxu0 0
        %1253 = vmatmul.mubr.bf16.gmra.mxu0 %v1215
        %v1254 = vpop.f32.mrf.mxu0
        %v1255 = vadd.f32 0.0, %v1254
        %v1256 = vpop.f32.mrf.mxu0
        %v1257 = vpop.f32.mrf.mxu0
        %v1258 = vpop.f32.mrf.mxu0
        %1259 = vdwg.mxu0
        %1260 = vrot.lane.b32.xlu0 %v915, 104
        %v1261 = vpop.permute.xlu0 %1260
        %1262 = vrot.lane.b32.xlu0 %v1038, 104
        %v1263 = vpop.permute.xlu0 %1262
        %v1265 = vsel %vm927, %v1261, 0
        %v1268 = vsel %vm927, %v1263, 0
        %1270 = vmatprep.subr.bf16.mxu0 0
        %1271 = vmatpush1.bf16.xpose.msra.mxu0 0
        %1272 = vmatprep.subr.bf16.mxu0 0
        %1273 = vmatpush1.bf16.xpose.msra.mxu0 0
        %1274 = vmatprep.subr.bf16.mxu0 0
        %1275 = vmatpush1.bf16.xpose.msra.mxu0 0
        %1276 = vmatprep.subr.bf16.mxu0 0
        %1277 = vmatpush1.bf16.xpose.msra.mxu0 0
        %1278 = vmatprep.subr.bf16.mxu0 0
        %1279 = vmatpush1.bf16.xpose.msra.mxu0 0
        %1280 = vmatprep.subr.bf16.mxu0 0
        %1281 = vmatpush1.bf16.xpose.msra.mxu0 0
        %1282 = vmatprep.subr.bf16.mxu0 0
        %1283 = vmatpush1.bf16.xpose.msra.mxu0 0
        %1284 = vmatprep.subr.bf16.mxu0 0
        %1285 = vmatpush1.bf16.xpose.msra.mxu0 %v1268
        %1286 = vmatprep.subr.bf16.mxu0 0
        %1287 = vmatpush2.bf16.xpose.msra.mxu0 0
        %1288 = vmatprep.subr.bf16.mxu0 0
        %1289 = vmatpush2.bf16.xpose.msra.mxu0 0
        %1290 = vmatprep.subr.bf16.mxu0 0
        %1291 = vmatpush2.bf16.xpose.msra.mxu0 0
        %1292 = vmatprep.subr.bf16.mxu0 0
        %1293 = vmatpush2.bf16.xpose.msra.mxu0 0
        %1294 = vmatprep.subr.bf16.mxu0 0
        %1295 = vmatpush2.bf16.xpose.msra.mxu0 0
        %1296 = vmatprep.subr.bf16.mxu0 0
        %1297 = vmatpush2.bf16.xpose.msra.mxu0 0
        %1298 = vmatprep.subr.bf16.mxu0 0
        %1299 = vmatpush2.bf16.xpose.msra.mxu0 0
        %1300 = vmatprep.subr.bf16.mxu0 0
        %1301 = vmatpush2.bf16.xpose.msra.mxu0 0
        %1302 = vmatprep.mubr.bf16.mxu0 0
        %1303 = vmatmul.mubr.bf16.gmra.mxu0 %v1265
        %v1304 = vpop.f32.mrf.mxu0
        %v1305 = vadd.f32 %v925, %v1304
        %v1306 = vpop.f32.mrf.mxu0
        %v1307 = vpop.f32.mrf.mxu0
        %v1308 = vpop.f32.mrf.mxu0
        %1309 = vdwg.mxu0
        %v1310 = vsel %vm927, %v1305, -inf
        %1311 = vmax.xlane.f32.xlu0 %v1310
        %v1312 = vpop.xlane.xlu0 %1311
        %v1313 = vsub.f32 %v1305, %v1312
        %v1314 = vmul.f32 %v1313, 1.442695
        %v1315 = vpow.pop %v1314
        %v1316 = vsel %vm927, %v1315, 0.0
        %1317 = vadd.xlane.f32.xlu0 %v1316
        %v1318 = vpop.xlane.xlu0 %1317
        %v1319 = vrcp.pop %v1318
        %v1320 = vmul.f32 %v1315, %v1319
        %v1321 = vpack.c.bf16 %v1320, %v1320
        %1322 = vrot.lane.b32.xlu0 %v1101, 104
        %v1323 = vpop.permute.xlu0 %1322
        %v1325 = vsel %vm927, %v1321, 0
        %v1328 = vsel %vm989, %v1323, 0
        %1330 = vmatprep.subr.bf16.mxu0 0
        %1331 = vmatpush1.bf16.msra.mxu0 0
        %1332 = vmatprep.subr.bf16.mxu0 0
        %1333 = vmatpush1.bf16.msra.mxu0 0
        %1334 = vmatprep.subr.bf16.mxu0 0
        %1335 = vmatpush1.bf16.msra.mxu0 0
        %1336 = vmatprep.subr.bf16.mxu0 0
        %1337 = vmatpush1.bf16.msra.mxu0 0
        %1338 = vmatprep.subr.bf16.mxu0 0
        %1339 = vmatpush1.bf16.msra.mxu0 0
        %1340 = vmatprep.subr.bf16.mxu0 0
        %1341 = vmatpush1.bf16.msra.mxu0 0
        %1342 = vmatprep.subr.bf16.mxu0 0
        %1343 = vmatpush1.bf16.msra.mxu0 0
        %1344 = vmatprep.subr.bf16.mxu0 0
        %1345 = vmatpush1.bf16.msra.mxu0 %v1328
        %1346 = vmatprep.subr.bf16.mxu0 0
        %1347 = vmatpush2.bf16.msra.mxu0 0
        %1348 = vmatprep.subr.bf16.mxu0 0
        %1349 = vmatpush2.bf16.msra.mxu0 0
        %1350 = vmatprep.subr.bf16.mxu0 0
        %1351 = vmatpush2.bf16.msra.mxu0 0
        %1352 = vmatprep.subr.bf16.mxu0 0
        %1353 = vmatpush2.bf16.msra.mxu0 0
        %1354 = vmatprep.subr.bf16.mxu0 0
        %1355 = vmatpush2.bf16.msra.mxu0 0
        %1356 = vmatprep.subr.bf16.mxu0 0
        %1357 = vmatpush2.bf16.msra.mxu0 0
        %1358 = vmatprep.subr.bf16.mxu0 0
        %1359 = vmatpush2.bf16.msra.mxu0 0
        %1360 = vmatprep.subr.bf16.mxu0 0
        %1361 = vmatpush2.bf16.msra.mxu0 0
        %1362 = vmatprep.mubr.bf16.mxu0 0
        %1363 = vmatmul.mubr.bf16.gmra.mxu0 %v1325
        %v1364 = vpop.f32.mrf.mxu0
        %v1365 = vadd.f32 0.0, %v1364
        %v1366 = vpop.f32.mrf.mxu0
        %v1367 = vpop.f32.mrf.mxu0
        %v1368 = vpop.f32.mrf.mxu0
        %1369 = vdwg.mxu0
        %1371 = vrot.lane.b32.xlu0 %v1145, 8
        %v1372 = vpop.permute.xlu0 %1371
        %1375 = vrot.lane.b32.xlu0 %v1255, 16
        %v1376 = vpop.permute.xlu0 %1375
        %1379 = vrot.lane.b32.xlu0 %v1365, 24
        %v1380 = vpop.permute.xlu0 %1379
        %v1382 = vsel %vm927, %v1028, %v1372
        %vm1383 = vcmask 130048
        %v1384 = vsel %vm1383, %v1382, %v1376
        %vm1385 = vcmask 195584
        %v1386 = vsel %vm1385, %v1384, %v1380
        %v1387 = vadd.f32 %v816, %v1386
        %v1388 = vld [vmem:[%s10] sm:$0x1]
        %v1389 = vld [vmem:[%s11] sm:$0x1]
        %v1390 = vsel %vm819, %v1387, 0.0
        %1391 = vadd.xlane.f32.xlu0 %v1390
        %v1392 = vpop.xlane.xlu0 %1391
        %v1393 = vmul.f32 %v1392, %v823
        %v1394 = vsub.f32 %v1387, %v1393
        %v1395 = vmul.f32 %v1394, %v1394
        %v1396 = vsel %vm819, %v1395, 0.0
        %1397 = vadd.xlane.f32.xlu0 %v1396
        %v1398 = vpop.xlane.xlu0 %1397
        %v1399 = vmul.f32 %v1398, %v823
        %v1400 = vadd.f32 %v1399, 1e-06
        %v1401 = vrsqrt.pop %v1400
        %v1402 = vmul.f32 %v1394, %v1401
        %v1404 = vlaneseq
        %v1405 = vshrl.u32 %v1404, 7
        %v1406 = vsub.s32 0, %v1405
        %v1407 = vrot.slane %v1388, %v1406
        %v1409 = vmul.f32 %v1402, %v1407
        %v1411 = vlaneseq
        %v1412 = vshrl.u32 %v1411, 7
        %v1413 = vsub.s32 0, %v1412
        %v1414 = vrot.slane %v1389, %v1413
        %v1416 = vadd.f32 %v1409, %v1414
        %v1417 = vpack.c.bf16 %v1416, %v1416
        %v1418 = vld [vmem:[%s12] sm:$0xf]
        %v1419 = vld [vmem:[%s12 + $0x4] sm:$0xf]
        %v1420 = vld [vmem:[%s12 + $0x8] sm:$0xf]
        %v1421 = vld [vmem:[%s12 + $0xc] sm:$0xf]
        %v1422 = vld [vmem:[%s13] sm:$0x1]
        %v1424 = vlaneseq
        %v1425 = vshrl.u32 %v1424, 7
        %v1426 = vsub.s32 0, %v1425
        %v1427 = vrot.slane %v1422, %v1426
        %v1433 = vunpack.c.l.b16 %v1418
        %v1434 = vunpack.c.l.b16 %v1419
        %v1435 = vunpack.c.l.b16 %v1420
        %v1436 = vunpack.c.l.b16 %v1421
        %v1437 = vpack.c.b16 %v1434, %v1433
        %v1438 = vpack.c.b16 %v1436, %v1435
        %v1442 = vsel %vm819, %v1417, 0
        %1444 = vmatprep.subr.bf16.mxu0 0
        %1445 = vmatpush1.bf16.msra.mxu0 0
        %1446 = vmatprep.subr.bf16.mxu0 0
        %1447 = vmatpush1.bf16.msra.mxu0 0
        %1448 = vmatprep.subr.bf16.mxu0 0
        %1449 = vmatpush1.bf16.msra.mxu0 0
        %1450 = vmatprep.subr.bf16.mxu0 0
        %1451 = vmatpush1.bf16.msra.mxu0 0
        %1452 = vmatprep.subr.bf16.mxu0 0
        %1453 = vmatpush1.bf16.msra.mxu0 0
        %1454 = vmatprep.subr.bf16.mxu0 0
        %1455 = vmatpush1.bf16.msra.mxu0 0
        %1456 = vmatprep.subr.bf16.mxu0 0
        %1457 = vmatpush1.bf16.msra.mxu0 %v1438
        %1458 = vmatprep.subr.bf16.mxu0 0
        %1459 = vmatpush1.bf16.msra.mxu0 %v1437
        %1460 = vmatprep.subr.bf16.mxu0 0
        %1461 = vmatpush2.bf16.msra.mxu0 0
        %1462 = vmatprep.subr.bf16.mxu0 0
        %1463 = vmatpush2.bf16.msra.mxu0 0
        %1464 = vmatprep.subr.bf16.mxu0 0
        %1465 = vmatpush2.bf16.msra.mxu0 0
        %1466 = vmatprep.subr.bf16.mxu0 0
        %1467 = vmatpush2.bf16.msra.mxu0 0
        %1468 = vmatprep.subr.bf16.mxu0 0
        %1469 = vmatpush2.bf16.msra.mxu0 0
        %1470 = vmatprep.subr.bf16.mxu0 0
        %1471 = vmatpush2.bf16.msra.mxu0 0
        %1472 = vmatprep.subr.bf16.mxu0 0
        %1473 = vmatpush2.bf16.msra.mxu0 0
        %1474 = vmatprep.subr.bf16.mxu0 0
        %1475 = vmatpush2.bf16.msra.mxu0 0
        %1476 = vmatprep.mubr.bf16.mxu0 0
        %1477 = vmatmul.mubr.bf16.gmra.mxu0 %v1442
        %v1478 = vpop.f32.mrf.mxu0
        %v1479 = vadd.f32 %v1427, %v1478
        %v1480 = vpop.f32.mrf.mxu0
        %v1481 = vpop.f32.mrf.mxu0
        %v1482 = vpop.f32.mrf.mxu0
        %1483 = vdwg.mxu0
        %v1484 = vmax.f32 %v1479, 0.0
        %v1485 = vpack.c.bf16 %v1484, %v1484
        %v1486 = vld [vmem:[%s14] sm:$0xf]
        %v1487 = vld [vmem:[%s14 + $0x4] sm:$0xf]
        %v1488 = vld [vmem:[%s14 + $0x8] sm:$0xf]
        %v1489 = vld [vmem:[%s14 + $0xc] sm:$0xf]
        %v1490 = vld [vmem:[%s14 + $0x10] sm:$0xf]
        %v1491 = vld [vmem:[%s14 + $0x14] sm:$0xf]
        %v1492 = vld [vmem:[%s14 + $0x18] sm:$0xf]
        %v1493 = vld [vmem:[%s14 + $0x1c] sm:$0xf]
        %v1494 = vld [vmem:[%s15] sm:$0x1]
        %v1496 = vlaneseq
        %v1497 = vshrl.u32 %v1496, 7
        %v1498 = vsub.s32 0, %v1497
        %v1499 = vrot.slane %v1494, %v1498
        %v1509 = vunpack.c.l.b16 %v1486
        %v1510 = vunpack.c.l.b16 %v1487
        %v1511 = vunpack.c.l.b16 %v1488
        %v1512 = vunpack.c.l.b16 %v1489
        %v1513 = vunpack.c.l.b16 %v1490
        %v1514 = vunpack.c.l.b16 %v1491
        %v1515 = vunpack.c.l.b16 %v1492
        %v1516 = vunpack.c.l.b16 %v1493
        %v1517 = vpack.c.b16 %v1510, %v1509
        %v1518 = vpack.c.b16 %v1512, %v1511
        %v1519 = vpack.c.b16 %v1514, %v1513
        %v1520 = vpack.c.b16 %v1516, %v1515
        %vm1525 = vcmask 523264
        %v1527 = vsel %vm1525, %v1485, 0
        %1529 = vmatprep.subr.bf16.mxu0 0
        %1530 = vmatpush1.bf16.msra.mxu0 0
        %1531 = vmatprep.subr.bf16.mxu0 0
        %1532 = vmatpush1.bf16.msra.mxu0 0
        %1533 = vmatprep.subr.bf16.mxu0 0
        %1534 = vmatpush1.bf16.msra.mxu0 0
        %1535 = vmatprep.subr.bf16.mxu0 0
        %1536 = vmatpush1.bf16.msra.mxu0 0
        %1537 = vmatprep.subr.bf16.mxu0 0
        %1538 = vmatpush1.bf16.msra.mxu0 %v1520
        %1539 = vmatprep.subr.bf16.mxu0 0
        %1540 = vmatpush1.bf16.msra.mxu0 %v1519
        %1541 = vmatprep.subr.bf16.mxu0 0
        %1542 = vmatpush1.bf16.msra.mxu0 %v1518
        %1543 = vmatprep.subr.bf16.mxu0 0
        %1544 = vmatpush1.bf16.msra.mxu0 %v1517
        %1545 = vmatprep.subr.bf16.mxu0 0
        %1546 = vmatpush2.bf16.msra.mxu0 0
        %1547 = vmatprep.subr.bf16.mxu0 0
        %1548 = vmatpush2.bf16.msra.mxu0 0
        %1549 = vmatprep.subr.bf16.mxu0 0
        %1550 = vmatpush2.bf16.msra.mxu0 0
        %1551 = vmatprep.subr.bf16.mxu0 0
        %1552 = vmatpush2.bf16.msra.mxu0 0
        %1553 = vmatprep.subr.bf16.mxu0 0
        %1554 = vmatpush2.bf16.msra.mxu0 0
        %1555 = vmatprep.subr.bf16.mxu0 0
        %1556 = vmatpush2.bf16.msra.mxu0 0
        %1557 = vmatprep.subr.bf16.mxu0 0
        %1558 = vmatpush2.bf16.msra.mxu0 0
        %1559 = vmatprep.subr.bf16.mxu0 0
        %1560 = vmatpush2.bf16.msra.mxu0 0
        %1561 = vmatprep.mubr.bf16.mxu0 0
        %1562 = vmatmul.mubr.bf16.gmra.mxu0 %v1527
        %v1563 = vpop.f32.mrf.mxu0
        %v1564 = vadd.f32 %v1499, %v1563
        %v1565 = vpop.f32.mrf.mxu0
        %v1566 = vpop.f32.mrf.mxu0
        %v1567 = vpop.f32.mrf.mxu0
        %1568 = vdwg.mxu0
        %v1569 = vadd.f32 %v1387, %v1564
        %1570 = vst.msk [vmem:[%s637] sm:$0xff] %vm819, %v1569
        %s1571 = sand.u32 %s404, 1
        %s1572 = scalar_lea.sflag [#allocation6], %s1571
        %s1573 = sand.u32 %s404, 1
        %s1574 = smul.addr %s1573, 8
        %s1575 = scalar_lea.vmem [#allocation16], %s1574
        // Predicated region
        $region117: #{tpu_custom_call.1} parent=83 // pred_check
          %p1576 = pneg %p414
        $region118: #{tpu_custom_call.1} parent=83 // pred_check_branch
          %1578 = sbr.rel (%p1576) target = $region120
        $region119: #{tpu_custom_call.1} parent=83 // pred_region
          %s1580 = ssub.s32 128, 128
          %1581 = vsyncadd %s1572, %s1580
          %s1582 = sadd.s32 %s41, %s40
          %s1583 = smul.addr %s1582, 128
          %s1584 = scalar_lea.hbm %s16, %s1583
          %s1586 = sshll.u32 %s1575, 4
          %s1587 = int_to_ptr.vmem [resolvable:$true] %s1586
          %1589 = dma.vmem_to_hbm [thread:$0]  %s1587, 128, %s1584, %s1572
        $region120: #{tpu_custom_call.1} parent=83 // pred_fallthru
          _
      $region84: #{tpu_custom_call.1} parent=5 // pred_fallthru
        _
      %p1590 = scmp.le.s32.totalorder 2, %s31
      // Predicated region
      $region121: #{tpu_custom_call.1} parent=5 // pred_check
        %p1591 = pneg %p1590
      $region122: #{tpu_custom_call.1} parent=5 // pred_check_branch
        %1593 = sbr.rel (%p1591) target = $region124
      $region123: #{tpu_custom_call.1} parent=5 // pred_region
        %s1594 = ssub.s32 %s31, 2
        // Predicated region
        $region125: #{tpu_custom_call.1} parent=123 // pred_check
          %p1595 = pneg %p420
        $region126: #{tpu_custom_call.1} parent=123 // pred_check_branch
          %1597 = sbr.rel (%p1595) target = $region128
        $region127: #{tpu_custom_call.1} parent=123 // pred_region
          %s1598 = sand.u32 %s405, 1
          %s1599 = scalar_lea.sflag [#allocation6], %s1598
          %s1600 = sand.u32 %s405, 1
          %s1601 = smul.addr %s1600, 8
          %s1602 = scalar_lea.vmem [#allocation16], %s1601
          %1603 = dma.done %s1599, 128
        $region128: #{tpu_custom_call.1} parent=123 // pred_fallthru
          _
      $region124: #{tpu_custom_call.1} parent=5 // pred_fallthru
        _
    $region6: #{tpu_custom_call.1} parent=1 // loop_footer
      %s35 = sadd.s32 1, %s31
    $region7: #{tpu_custom_call.1} parent=1 // loop_footer_branch
      %30 = sbr.rel target = $region3
    $region8: #{tpu_custom_call.1} parent=1 // loop_exit
      _
    %1604 = vsyncpa [#allocation5], 1
    %s1605 = scalar_lea.sflag [#allocation5], 1
    %1606 = vsyncpa %s1605, 1
    %1607 = vsyncpa [#allocation8], 1
    %1608 = vsyncpa [#allocation11], 1
    %1609 = vsyncpa [#allocation14], 1
    %1610 = vsyncpa [#allocation6], 1
    %s1611 = scalar_lea.sflag [#allocation6], 1
    %1612 = vsyncpa %s1611, 1

// kernel: tpu_custom_call.1
$region0: #{tpu_custom_call.1}
  #allocation0 [shape = 'u32[]', space=smem, size = 0x4, offset = 0x4, fixed_abs, tag = 'smem constant byte address 0x4 - core index']
  #allocation1 [shape = 'u32[144,128]{1,0:T(1,128)}', space=vmem, size = 0x12000, scoped, tag = 'internal scratch']
  #allocation2 [shape = 'bf16[8,32]{1,0:T(8,128)(2,1)}', space=vmem, size = 0x800, scoped, tag = 'scratch operand']
  #allocation3 [shape = 'bf16[8,32]{1,0:T(8,128)(2,1)}', space=vmem, size = 0x800, scoped, tag = 'scratch operand']
  %s0 = inlined_call_operand.vmem [shape: f32[2,8,32], index: 0, kind: input, shape index: {}]
  %s1 = inlined_call_operand.hbm [shape: f32[2,1,8], index: 1, kind: input, shape index: {}]
  %s2 = inlined_call_operand.hbm [shape: f32[1,32], index: 2, kind: input, shape index: {}]
  %s3 = inlined_call_operand.hbm [shape: f32[1,32], index: 3, kind: input, shape index: {}]
  %s4 = inlined_call_operand.vmem [shape: bf16[32,32], index: 4, kind: input, shape index: {}]
  %s5 = inlined_call_operand.hbm [shape: f32[1,32], index: 5, kind: input, shape index: {}]
  %s6 = inlined_call_operand.vmem [shape: bf16[32,32], index: 6, kind: input, shape index: {}]
  %s7 = inlined_call_operand.hbm [shape: f32[1,32], index: 7, kind: input, shape index: {}]
  %s8 = inlined_call_operand.hbm [shape: bf16[32,32], index: 8, kind: input, shape index: {}]
  %s9 = inlined_call_operand.hbm [shape: f32[1,32], index: 9, kind: input, shape index: {}]
  %s10 = inlined_call_operand.vmem [shape: f32[1,32], index: 10, kind: input, shape index: {}]
  %s11 = inlined_call_operand.vmem [shape: f32[1,32], index: 11, kind: input, shape index: {}]
  %s12 = inlined_call_operand.vmem [shape: bf16[32,64], index: 12, kind: input, shape index: {}]
  %s13 = inlined_call_operand.vmem [shape: f32[1,64], index: 13, kind: input, shape index: {}]
  %s14 = inlined_call_operand.vmem [shape: bf16[64,32], index: 14, kind: input, shape index: {}]
  %s15 = inlined_call_operand.vmem [shape: f32[1,32], index: 15, kind: input, shape index: {}]
  %s16 = inlined_call_operand.hbm [shape: f32[2,8,32], index: 16, kind: output, shape index: {}]
  %s17 = sld [smem:[#allocation0]]
  $region129: #{tpu_custom_call.1} parent=0
    _
  %s19 = ssub.s32 1, %s17
  %s20 = scalar_select 0, %s19, %s17
  $region1: #{tpu_custom_call.1} parent=0
    #allocation4 [shape = 'u8[1024]{0}', space=vmem, size = 0x400, scoped, tag = 'input window, operand 1']
    #allocation5 [shape = 's32[2]{0}', space=sflag, size = 0x8, scoped, tag = 'scoped memory for tpu_custom_call.1']
    #allocation6 [shape = 's32[2]{0}', space=sflag, size = 0x8, scoped, tag = 'scoped memory for tpu_custom_call.1']
    #allocation7 [shape = 'u8[512]{0}', space=vmem, size = 0x400, scoped, tag = 'input window, operand 2, single buffered']
    #allocation8 [shape = 's32[1]{0}', space=sflag, size = 0x4, scoped, tag = 'scoped memory for tpu_custom_call.1']
    #allocation9 [shape = 'u8[512]{0}', space=vmem, size = 0x400, scoped, tag = 'input window, operand 3, single buffered']
    #allocation10 [shape = 'u8[512]{0}', space=vmem, size = 0x400, scoped, tag = 'input window, operand 5, single buffered']
    #allocation11 [shape = 's32[1]{0}', space=sflag, size = 0x4, scoped, tag = 'scoped memory for tpu_custom_call.1']
    #allocation12 [shape = 'u8[512]{0}', space=vmem, size = 0x400, scoped, tag = 'input window, operand 7, single buffered']
    #allocation13 [shape = 'u8[8192]{0}', space=vmem, size = 0x2000, scoped, tag = 'input window, operand 8, single buffered']
    #allocation14 [shape = 's32[1]{0}', space=sflag, size = 0x4, scoped, tag = 'scoped memory for tpu_custom_call.1']
    #allocation15 [shape = 'u8[512]{0}', space=vmem, size = 0x400, scoped, tag = 'input window, operand 9, single buffered']
    #allocation16 [shape = 'u8[8192]{0}', space=vmem, size = 0x2000, scoped, tag = 'output window, operand 0']
    %21 = vsyncpa [#allocation5], 0
    %s22 = scalar_lea.sflag [#allocation5], 1
    %23 = vsyncpa %s22, 0
    %24 = vsyncpa [#allocation8], 0
    %25 = vsyncpa [#allocation11], 0
    %26 = vsyncpa [#allocation14], 0
    %27 = vsyncpa [#allocation6], 0
    %s28 = scalar_lea.sflag [#allocation6], 1
    %29 = vsyncpa %s28, 0
    loop: start=0, step=1, limit=4
    $region2: #{tpu_custom_call.1} parent=1 // loop_pre_header
      _
    $region3: #{tpu_custom_call.1} parent=1 // loop_header
      %s31 = sphi 0, %s35
      %p32 = scmp.ge.s32.totalorder %s31, 4
      %s38 = sphi 0, %s50
      %s39 = sphi 0, %s46
      %s40 = sphi 0, %s38
      %s41 = sphi 0, %s39
      %s42 = sphi 0, %s40
      %s43 = sphi 0, %s41
      %s53 = sphi 0, %s55
      %s56 = sphi 0, %s53
      %s57 = sphi 0, %s56
      %s73 = sphi 0, %s57
      %s79 = sphi 0, %s81
      %s82 = sphi 0, %s79
      %s83 = sphi 0, %s82
      %s99 = sphi 0, %s83
      %s103 = sphi 0, %s103
      %s105 = sphi 0, %s103
      %s106 = sphi 0, %s105
      %s120 = sphi 0, %s106
      %s124 = sphi 0, %s124
      %s126 = sphi 0, %s124
      %s127 = sphi 0, %s126
      %s141 = sphi 0, %s127
      %s145 = sphi 0, %s145
      %s147 = sphi 0, %s145
      %s148 = sphi 0, %s147
      %s162 = sphi 0, %s148
      %s166 = sphi 0, %s166
      %s168 = sphi 0, %s166
      %s169 = sphi 0, %s168
      %s183 = sphi 0, %s169
      %s187 = sphi 0, %s187
      %s189 = sphi 0, %s187
      %s190 = sphi 0, %s189
      %s204 = sphi 0, %s190
      %s208 = sphi 0, %s208
      %s210 = sphi 0, %s208
      %s211 = sphi 0, %s210
      %s225 = sphi 0, %s211
      %s229 = sphi 0, %s229
      %s231 = sphi 0, %s229
      %s232 = sphi 0, %s231
      %s246 = sphi 0, %s232
      %s250 = sphi 0, %s250
      %s252 = sphi 0, %s250
      %s253 = sphi 0, %s252
      %s267 = sphi 0, %s253
      %s271 = sphi 0, %s271
      %s273 = sphi 0, %s271
      %s274 = sphi 0, %s273
      %s288 = sphi 0, %s274
      %s292 = sphi 0, %s292
      %s294 = sphi 0, %s292
      %s295 = sphi 0, %s294
      %s309 = sphi 0, %s295
      %s313 = sphi 0, %s313
      %s315 = sphi 0, %s313
      %s316 = sphi 0, %s315
      %s330 = sphi 0, %s316
      %s334 = sphi 0, %s334
      %s336 = sphi 0, %s334
      %s337 = sphi 0, %s336
      %s351 = sphi 0, %s337
      %s355 = sphi 0, %s355
      %s357 = sphi 0, %s355
      %s358 = sphi 0, %s357
      %s372 = sphi 0, %s358
      %s376 = sphi 0, %s376
      %s378 = sphi 0, %s376
      %s379 = sphi 0, %s378
      %s393 = sphi 0, %s379
      %s401 = sphi 0, %s403
      %s404 = sphi 0, %s401
      %s405 = sphi 0, %s404
      %s421 = sphi 0, %s405
    $region4: #{tpu_custom_call.1} parent=1 // loop_header_branch
      %34 = sbr.rel (%p32) target = $region8
    $region5: #{tpu_custom_call.1} parent=1 // loop_body
      %s36 = ssub.s32 %s31, 1
      %s37 = ssub.s32 %s31, 2
      %s44 = sadd.s32 1, %s39
      %p45 = scmp.ge.s32.totalorder %s44, 1
      %s46 = scalar_select %p45, 0, %s44
      %s47 = sadd.s32 1, %s38
      %s48 = scalar_select %p45, %s47, %s38
      %p49 = scmp.ge.s32.totalorder %s48, 2
      %s50 = scalar_select %p49, 0, %s48
      %s51 = ssub.s32 %s38, %s50
      %p52 = scmp.eq.s32.totalorder %s51, 0
      %s54 = sadd.s32 %s53, 1
      %s55 = scalar_select %p52, %s53, %s54
      %p58 = pneg %p52
      %p59 = scmp.eq.s32.totalorder %s31, 1
      %p60 = por %p58, %p59
      %p61 = scmp.ne.s32.totalorder %s53, %s56
      %p62 = scmp.eq.s32.totalorder %s31, 0
      %p63 = por %p61, %p62
      %p64 = scmp.ne.s32.totalorder %s53, %s56
      %p65 = scmp.eq.s32.totalorder %s36, 1
      %p66 = por %p64, %p65
      %p67 = scmp.ne.s32.totalorder %s56, %s57
      %p68 = scmp.eq.s32.totalorder %s36, 0
      %p69 = por %p67, %p68
      %p70 = scmp.ne.s32.totalorder %s56, %s57
      %p71 = scmp.eq.s32.totalorder %s37, 1
      %p72 = por %p70, %p71
      %p74 = scmp.ne.s32.totalorder %s57, %s73
      %p75 = scmp.eq.s32.totalorder %s37, 0
      %p76 = por %p74, %p75
      %s77 = ssub.s32 %s38, %s50
      %p78 = scmp.eq.s32.totalorder %s77, 0
      %s80 = sadd.s32 %s79, 1
      %s81 = scalar_select %p78, %s79, %s80
      %p84 = pneg %p78
      %p85 = scmp.eq.s32.totalorder %s31, 1
      %p86 = por %p84, %p85
      %p87 = scmp.ne.s32.totalorder %s79, %s82
      %p88 = scmp.eq.s32.totalorder %s31, 0
      %p89 = por %p87, %p88
      %p90 = scmp.ne.s32.totalorder %s79, %s82
      %p91 = scmp.eq.s32.totalorder %s36, 1
      %p92 = por %p90, %p91
      %p93 = scmp.ne.s32.totalorder %s82, %s83
      %p94 = scmp.eq.s32.totalorder %s36, 0
      %p95 = por %p93, %p94
      %p96 = scmp.ne.s32.totalorder %s82, %s83
      %p97 = scmp.eq.s32.totalorder %s37, 1
      %p98 = por %p96, %p97
      %p100 = scmp.ne.s32.totalorder %s83, %s99
      %p101 = scmp.eq.s32.totalorder %s37, 0
      %p102 = por %p100, %p101
      %s104 = sadd.s32 %s103, 1
      %p107 = scmp.eq.s32.totalorder %s31, 1
      %p108 = scmp.ne.s32.totalorder %s103, %s105
      %p109 = scmp.eq.s32.totalorder %s31, 0
      %p110 = por %p108, %p109
      %p111 = scmp.ne.s32.totalorder %s103, %s105
      %p112 = scmp.eq.s32.totalorder %s36, 1
      %p113 = por %p111, %p112
      %p114 = scmp.ne.s32.totalorder %s105, %s106
      %p115 = scmp.eq.s32.totalorder %s36, 0
      %p116 = por %p114, %p115
      %p117 = scmp.ne.s32.totalorder %s105, %s106
      %p118 = scmp.eq.s32.totalorder %s37, 1
      %p119 = por %p117, %p118
      %p121 = scmp.ne.s32.totalorder %s106, %s120
      %p122 = scmp.eq.s32.totalorder %s37, 0
      %p123 = por %p121, %p122
      %s125 = sadd.s32 %s124, 1
      %p128 = scmp.eq.s32.totalorder %s31, 1
      %p129 = scmp.ne.s32.totalorder %s124, %s126
      %p130 = scmp.eq.s32.totalorder %s31, 0
      %p131 = por %p129, %p130
      %p132 = scmp.ne.s32.totalorder %s124, %s126
      %p133 = scmp.eq.s32.totalorder %s36, 1
      %p134 = por %p132, %p133
      %p135 = scmp.ne.s32.totalorder %s126, %s127
      %p136 = scmp.eq.s32.totalorder %s36, 0
      %p137 = por %p135, %p136
      %p138 = scmp.ne.s32.totalorder %s126, %s127
      %p139 = scmp.eq.s32.totalorder %s37, 1
      %p140 = por %p138, %p139
      %p142 = scmp.ne.s32.totalorder %s127, %s141
      %p143 = scmp.eq.s32.totalorder %s37, 0
      %p144 = por %p142, %p143
      %s146 = sadd.s32 %s145, 1
      %p149 = scmp.eq.s32.totalorder %s31, 1
      %p150 = scmp.ne.s32.totalorder %s145, %s147
      %p151 = scmp.eq.s32.totalorder %s31, 0
      %p152 = por %p150, %p151
      %p153 = scmp.ne.s32.totalorder %s145, %s147
      %p154 = scmp.eq.s32.totalorder %s36, 1
      %p155 = por %p153, %p154
      %p156 = scmp.ne.s32.totalorder %s147, %s148
      %p157 = scmp.eq.s32.totalorder %s36, 0
      %p158 = por %p156, %p157
      %p159 = scmp.ne.s32.totalorder %s147, %s148
      %p160 = scmp.eq.s32.totalorder %s37, 1
      %p161 = por %p159, %p160
      %p163 = scmp.ne.s32.totalorder %s148, %s162
      %p164 = scmp.eq.s32.totalorder %s37, 0
      %p165 = por %p163, %p164
      %s167 = sadd.s32 %s166, 1
      %p170 = scmp.eq.s32.totalorder %s31, 1
      %p171 = scmp.ne.s32.totalorder %s166, %s168
      %p172 = scmp.eq.s32.totalorder %s31, 0
      %p173 = por %p171, %p172
      %p174 = scmp.ne.s32.totalorder %s166, %s168
      %p175 = scmp.eq.s32.totalorder %s36, 1
      %p176 = por %p174, %p175
      %p177 = scmp.ne.s32.totalorder %s168, %s169
      %p178 = scmp.eq.s32.totalorder %s36, 0
      %p179 = por %p177, %p178
      %p180 = scmp.ne.s32.totalorder %s168, %s169
      %p181 = scmp.eq.s32.totalorder %s37, 1
      %p182 = por %p180, %p181
      %p184 = scmp.ne.s32.totalorder %s169, %s183
      %p185 = scmp.eq.s32.totalorder %s37, 0
      %p186 = por %p184, %p185
      %s188 = sadd.s32 %s187, 1
      %p191 = scmp.eq.s32.totalorder %s31, 1
      %p192 = scmp.ne.s32.totalorder %s187, %s189
      %p193 = scmp.eq.s32.totalorder %s31, 0
      %p194 = por %p192, %p193
      %p195 = scmp.ne.s32.totalorder %s187, %s189
      %p196 = scmp.eq.s32.totalorder %s36, 1
      %p197 = por %p195, %p196
      %p198 = scmp.ne.s32.totalorder %s189, %s190
      %p199 = scmp.eq.s32.totalorder %s36, 0
      %p200 = por %p198, %p199
      %p201 = scmp.ne.s32.totalorder %s189, %s190
      %p202 = scmp.eq.s32.totalorder %s37, 1
      %p203 = por %p201, %p202
      %p205 = scmp.ne.s32.totalorder %s190, %s204
      %p206 = scmp.eq.s32.totalorder %s37, 0
      %p207 = por %p205, %p206
      %s209 = sadd.s32 %s208, 1
      %p212 = scmp.eq.s32.totalorder %s31, 1
      %p213 = scmp.ne.s32.totalorder %s208, %s210
      %p214 = scmp.eq.s32.totalorder %s31, 0
      %p215 = por %p213, %p214
      %p216 = scmp.ne.s32.totalorder %s208, %s210
      %p217 = scmp.eq.s32.totalorder %s36, 1
      %p218 = por %p216, %p217
      %p219 = scmp.ne.s32.totalorder %s210, %s211
      %p220 = scmp.eq.s32.totalorder %s36, 0
      %p221 = por %p219, %p220
      %p222 = scmp.ne.s32.totalorder %s210, %s211
      %p223 = scmp.eq.s32.totalorder %s37, 1
      %p224 = por %p222, %p223
      %p226 = scmp.ne.s32.totalorder %s211, %s225
      %p227 = scmp.eq.s32.totalorder %s37, 0
      %p228 = por %p226, %p227
      %s230 = sadd.s32 %s229, 1
      %p233 = scmp.eq.s32.totalorder %s31, 1
      %p234 = scmp.ne.s32.totalorder %s229, %s231
      %p235 = scmp.eq.s32.totalorder %s31, 0
      %p236 = por %p234, %p235
      %p237 = scmp.ne.s32.totalorder %s229, %s231
      %p238 = scmp.eq.s32.totalorder %s36, 1
      %p239 = por %p237, %p238
      %p240 = scmp.ne.s32.totalorder %s231, %s232
      %p241 = scmp.eq.s32.totalorder %s36, 0
      %p242 = por %p240, %p241
      %p243 = scmp.ne.s32.totalorder %s231, %s232
      %p244 = scmp.eq.s32.totalorder %s37, 1
      %p245 = por %p243, %p244
      %p247 = scmp.ne.s32.totalorder %s232, %s246
      %p248 = scmp.eq.s32.totalorder %s37, 0
      %p249 = por %p247, %p248
      %s251 = sadd.s32 %s250, 1
      %p254 = scmp.eq.s32.totalorder %s31, 1
      %p255 = scmp.ne.s32.totalorder %s250, %s252
      %p256 = scmp.eq.s32.totalorder %s31, 0
      %p257 = por %p255, %p256
      %p258 = scmp.ne.s32.totalorder %s250, %s252
      %p259 = scmp.eq.s32.totalorder %s36, 1
      %p260 = por %p258, %p259
      %p261 = scmp.ne.s32.totalorder %s252, %s253
      %p262 = scmp.eq.s32.totalorder %s36, 0
      %p263 = por %p261, %p262
      %p264 = scmp.ne.s32.totalorder %s252, %s253
      %p265 = scmp.eq.s32.totalorder %s37, 1
      %p266 = por %p264, %p265
      %p268 = scmp.ne.s32.totalorder %s253, %s267
      %p269 = scmp.eq.s32.totalorder %s37, 0
      %p270 = por %p268, %p269
      %s272 = sadd.s32 %s271, 1
      %p275 = scmp.eq.s32.totalorder %s31, 1
      %p276 = scmp.ne.s32.totalorder %s271, %s273
      %p277 = scmp.eq.s32.totalorder %s31, 0
      %p278 = por %p276, %p277
      %p279 = scmp.ne.s32.totalorder %s271, %s273
      %p280 = scmp.eq.s32.totalorder %s36, 1
      %p281 = por %p279, %p280
      %p282 = scmp.ne.s32.totalorder %s273, %s274
      %p283 = scmp.eq.s32.totalorder %s36, 0
      %p284 = por %p282, %p283
      %p285 = scmp.ne.s32.totalorder %s273, %s274
      %p286 = scmp.eq.s32.totalorder %s37, 1
      %p287 = por %p285, %p286
      %p289 = scmp.ne.s32.totalorder %s274, %s288
      %p290 = scmp.eq.s32.totalorder %s37, 0
      %p291 = por %p289, %p290
      %s293 = sadd.s32 %s292, 1
      %p296 = scmp.eq.s32.totalorder %s31, 1
      %p297 = scmp.ne.s32.totalorder %s292, %s294
      %p298 = scmp.eq.s32.totalorder %s31, 0
      %p299 = por %p297, %p298
      %p300 = scmp.ne.s32.totalorder %s292, %s294
      %p301 = scmp.eq.s32.totalorder %s36, 1
      %p302 = por %p300, %p301
      %p303 = scmp.ne.s32.totalorder %s294, %s295
      %p304 = scmp.eq.s32.totalorder %s36, 0
      %p305 = por %p303, %p304
      %p306 = scmp.ne.s32.totalorder %s294, %s295
      %p307 = scmp.eq.s32.totalorder %s37, 1
      %p308 = por %p306, %p307
      %p310 = scmp.ne.s32.totalorder %s295, %s309
      %p311 = scmp.eq.s32.totalorder %s37, 0
      %p312 = por %p310, %p311
      %s314 = sadd.s32 %s313, 1
      %p317 = scmp.eq.s32.totalorder %s31, 1
      %p318 = scmp.ne.s32.totalorder %s313, %s315
      %p319 = scmp.eq.s32.totalorder %s31, 0
      %p320 = por %p318, %p319
      %p321 = scmp.ne.s32.totalorder %s313, %s315
      %p322 = scmp.eq.s32.totalorder %s36, 1
      %p323 = por %p321, %p322
      %p324 = scmp.ne.s32.totalorder %s315, %s316
      %p325 = scmp.eq.s32.totalorder %s36, 0
      %p326 = por %p324, %p325
      %p327 = scmp.ne.s32.totalorder %s315, %s316
      %p328 = scmp.eq.s32.totalorder %s37, 1
      %p329 = por %p327, %p328
      %p331 = scmp.ne.s32.totalorder %s316, %s330
      %p332 = scmp.eq.s32.totalorder %s37, 0
      %p333 = por %p331, %p332
      %s335 = sadd.s32 %s334, 1
      %p338 = scmp.eq.s32.totalorder %s31, 1
      %p339 = scmp.ne.s32.totalorder %s334, %s336
      %p340 = scmp.eq.s32.totalorder %s31, 0
      %p341 = por %p339, %p340
      %p342 = scmp.ne.s32.totalorder %s334, %s336
      %p343 = scmp.eq.s32.totalorder %s36, 1
      %p344 = por %p342, %p343
      %p345 = scmp.ne.s32.totalorder %s336, %s337
      %p346 = scmp.eq.s32.totalorder %s36, 0
      %p347 = por %p345, %p346
      %p348 = scmp.ne.s32.totalorder %s336, %s337
      %p349 = scmp.eq.s32.totalorder %s37, 1
      %p350 = por %p348, %p349
      %p352 = scmp.ne.s32.totalorder %s337, %s351
      %p353 = scmp.eq.s32.totalorder %s37, 0
      %p354 = por %p352, %p353
      %s356 = sadd.s32 %s355, 1
      %p359 = scmp.eq.s32.totalorder %s31, 1
      %p360 = scmp.ne.s32.totalorder %s355, %s357
      %p361 = scmp.eq.s32.totalorder %s31, 0
      %p362 = por %p360, %p361
      %p363 = scmp.ne.s32.totalorder %s355, %s357
      %p364 = scmp.eq.s32.totalorder %s36, 1
      %p365 = por %p363, %p364
      %p366 = scmp.ne.s32.totalorder %s357, %s358
      %p367 = scmp.eq.s32.totalorder %s36, 0
      %p368 = por %p366, %p367
      %p369 = scmp.ne.s32.totalorder %s357, %s358
      %p370 = scmp.eq.s32.totalorder %s37, 1
      %p371 = por %p369, %p370
      %p373 = scmp.ne.s32.totalorder %s358, %s372
      %p374 = scmp.eq.s32.totalorder %s37, 0
      %p375 = por %p373, %p374
      %s377 = sadd.s32 %s376, 1
      %p380 = scmp.eq.s32.totalorder %s31, 1
      %p381 = scmp.ne.s32.totalorder %s376, %s378
      %p382 = scmp.eq.s32.totalorder %s31, 0
      %p383 = por %p381, %p382
      %p384 = scmp.ne.s32.totalorder %s376, %s378
      %p385 = scmp.eq.s32.totalorder %s36, 1
      %p386 = por %p384, %p385
      %p387 = scmp.ne.s32.totalorder %s378, %s379
      %p388 = scmp.eq.s32.totalorder %s36, 0
      %p389 = por %p387, %p388
      %p390 = scmp.ne.s32.totalorder %s378, %s379
      %p391 = scmp.eq.s32.totalorder %s37, 1
      %p392 = por %p390, %p391
      %p394 = scmp.ne.s32.totalorder %s379, %s393
      %p395 = scmp.eq.s32.totalorder %s37, 0
      %p396 = por %p394, %p395
      %s397 = ssub.s32 %s38, %s50
      %s398 = ssub.s32 %s39, %s46
      %s399 = sor.u32 %s397, %s398
      %p400 = scmp.eq.s32.totalorder %s399, 0
      %s402 = sadd.s32 %s401, 1
      %s403 = scalar_select %p400, %s401, %s402
      %p406 = pneg %p400
      %p407 = scmp.eq.s32.totalorder %s31, 1
      %p408 = por %p406, %p407
      %p409 = scmp.ne.s32.totalorder %s401, %s404
      %p410 = scmp.eq.s32.totalorder %s31, 0
      %p411 = por %p409, %p410
      %p412 = scmp.ne.s32.totalorder %s401, %s404
      %p413 = scmp.eq.s32.totalorder %s36, 1
      %p414 = por %p412, %p413
      %p415 = scmp.ne.s32.totalorder %s404, %s405
      %p416 = scmp.eq.s32.totalorder %s36, 0
      %p417 = por %p415, %p416
      %p418 = scmp.ne.s32.totalorder %s404, %s405
      %p419 = scmp.eq.s32.totalorder %s37, 1
      %p420 = por %p418, %p419
      %p422 = scmp.ne.s32.totalorder %s405, %s421
      %p423 = scmp.eq.s32.totalorder %s37, 0
      %p424 = por %p422, %p423
      %p425 = scmp.le.s32.totalorder 1, %s31
      %p426 = scmp.lt.s32.totalorder %s31, 3
      %p427 = pnand %p425, %p426
      %p428 = pneg %p427
      // Predicated region
      $region9: #{tpu_custom_call.1} parent=5 // pred_check
        _
      $region10: #{tpu_custom_call.1} parent=5 // pred_check_branch
        %430 = sbr.rel (%p427) target = $region12
      $region11: #{tpu_custom_call.1} parent=5 // pred_region
        %s431 = ssub.s32 %s31, 1
        // Predicated region
        $region13: #{tpu_custom_call.1} parent=11 // pred_check
          %p432 = pneg %p116
        $region14: #{tpu_custom_call.1} parent=11 // pred_check_branch
          %434 = sbr.rel (%p432) target = $region16
        $region15: #{tpu_custom_call.1} parent=11 // pred_region
          %s436 = ssub.s32 16, 16
          %437 = vsyncadd [#allocation8], %s436
          %s439 = sshll.u32 [#allocation7], 4
          %s440 = int_to_ptr.vmem [resolvable:$true] %s439
          %442 = dma.hbm_to_vmem [thread:$0]  %s2, 16, %s440, [#allocation8]
        $region16: #{tpu_custom_call.1} parent=11 // pred_fallthru
          _
        // Predicated region
        $region17: #{tpu_custom_call.1} parent=11 // pred_check
          %p443 = pneg %p137
        $region18: #{tpu_custom_call.1} parent=11 // pred_check_branch
          %445 = sbr.rel (%p443) target = $region20
        $region19: #{tpu_custom_call.1} parent=11 // pred_region
          %s447 = ssub.s32 16, 16
          %448 = vsyncadd [#allocation8], %s447
          %s450 = sshll.u32 [#allocation9], 4
          %s451 = int_to_ptr.vmem [resolvable:$true] %s450
          %453 = dma.hbm_to_vmem [thread:$0]  %s3, 16, %s451, [#allocation8]
        $region20: #{tpu_custom_call.1} parent=11 // pred_fallthru
          _
        // Predicated region
        $region21: #{tpu_custom_call.1} parent=11 // pred_check
          %p454 = pneg %p158
        $region22: #{tpu_custom_call.1} parent=11 // pred_check_branch
          %456 = sbr.rel (%p454) target = $region24
        $region23: #{tpu_custom_call.1} parent=11 // pred_region
          _
        $region24: #{tpu_custom_call.1} parent=11 // pred_fallthru
          _
        // Predicated region
        $region25: #{tpu_custom_call.1} parent=11 // pred_check
          %p457 = pneg %p179
        $region26: #{tpu_custom_call.1} parent=11 // pred_check_branch
          %459 = sbr.rel (%p457) target = $region28
        $region27: #{tpu_custom_call.1} parent=11 // pred_region
          %s461 = ssub.s32 16, 16
          %462 = vsyncadd [#allocation11], %s461
          %s464 = sshll.u32 [#allocation10], 4
          %s465 = int_to_ptr.vmem [resolvable:$true] %s464
          %467 = dma.hbm_to_vmem [thread:$0]  %s5, 16, %s465, [#allocation11]
        $region28: #{tpu_custom_call.1} parent=11 // pred_fallthru
          _
        // Predicated region
        $region29: #{tpu_custom_call.1} parent=11 // pred_check
          %p468 = pneg %p200
        $region30: #{tpu_custom_call.1} parent=11 // pred_check_branch
          %470 = sbr.rel (%p468) target = $region32
        $region31: #{tpu_custom_call.1} parent=11 // pred_region
          _
        $region32: #{tpu_custom_call.1} parent=11 // pred_fallthru
          _
        // Predicated region
        $region33: #{tpu_custom_call.1} parent=11 // pred_check
          %p471 = pneg %p221
        $region34: #{tpu_custom_call.1} parent=11 // pred_check_branch
          %473 = sbr.rel (%p471) target = $region36
        $region35: #{tpu_custom_call.1} parent=11 // pred_region
          %s475 = ssub.s32 16, 16
          %476 = vsyncadd [#allocation11], %s475
          %s478 = sshll.u32 [#allocation12], 4
          %s479 = int_to_ptr.vmem [resolvable:$true] %s478
          %481 = dma.hbm_to_vmem [thread:$0]  %s7, 16, %s479, [#allocation11]
        $region36: #{tpu_custom_call.1} parent=11 // pred_fallthru
          _
        // Predicated region
        $region37: #{tpu_custom_call.1} parent=11 // pred_check
          %p482 = pneg %p242
        $region38: #{tpu_custom_call.1} parent=11 // pred_check_branch
          %484 = sbr.rel (%p482) target = $region40
        $region39: #{tpu_custom_call.1} parent=11 // pred_region
          %s486 = ssub.s32 256, 256
          %487 = vsyncadd [#allocation14], %s486
          %s488 = sshll.u32 [#allocation13], 4
          %s489 = int_to_ptr.vmem [resolvable:$true] %s488
          %494 = dma.hbm_to_vmem [thread:$0]  %s8, 256, %s489, [#allocation14], 64, 64, 4
        $region40: #{tpu_custom_call.1} parent=11 // pred_fallthru
          _
        // Predicated region
        $region41: #{tpu_custom_call.1} parent=11 // pred_check
          %p495 = pneg %p263
        $region42: #{tpu_custom_call.1} parent=11 // pred_check_branch
          %497 = sbr.rel (%p495) target = $region44
        $region43: #{tpu_custom_call.1} parent=11 // pred_region
          %s499 = ssub.s32 16, 16
          %500 = vsyncadd [#allocation14], %s499
          %s502 = sshll.u32 [#allocation15], 4
          %s503 = int_to_ptr.vmem [resolvable:$true] %s502
          %505 = dma.hbm_to_vmem [thread:$0]  %s9, 16, %s503, [#allocation14]
        $region44: #{tpu_custom_call.1} parent=11 // pred_fallthru
          _
        // Predicated region
        $region45: #{tpu_custom_call.1} parent=11 // pred_check
          %p506 = pneg %p284
        $region46: #{tpu_custom_call.1} parent=11 // pred_check_branch
          %508 = sbr.rel (%p506) target = $region48
        $region47: #{tpu_custom_call.1} parent=11 // pred_region
          _
        $region48: #{tpu_custom_call.1} parent=11 // pred_fallthru
          _
        // Predicated region
        $region49: #{tpu_custom_call.1} parent=11 // pred_check
          %p509 = pneg %p305
        $region50: #{tpu_custom_call.1} parent=11 // pred_check_branch
          %511 = sbr.rel (%p509) target = $region52
        $region51: #{tpu_custom_call.1} parent=11 // pred_region
          _
        $region52: #{tpu_custom_call.1} parent=11 // pred_fallthru
          _
        // Predicated region
        $region53: #{tpu_custom_call.1} parent=11 // pred_check
          %p512 = pneg %p326
        $region54: #{tpu_custom_call.1} parent=11 // pred_check_branch
          %514 = sbr.rel (%p512) target = $region56
        $region55: #{tpu_custom_call.1} parent=11 // pred_region
          _
        $region56: #{tpu_custom_call.1} parent=11 // pred_fallthru
          _
        // Predicated region
        $region57: #{tpu_custom_call.1} parent=11 // pred_check
          %p515 = pneg %p347
        $region58: #{tpu_custom_call.1} parent=11 // pred_check_branch
          %517 = sbr.rel (%p515) target = $region60
        $region59: #{tpu_custom_call.1} parent=11 // pred_region
          _
        $region60: #{tpu_custom_call.1} parent=11 // pred_fallthru
          _
        // Predicated region
        $region61: #{tpu_custom_call.1} parent=11 // pred_check
          %p518 = pneg %p368
        $region62: #{tpu_custom_call.1} parent=11 // pred_check_branch
          %520 = sbr.rel (%p518) target = $region64
        $region63: #{tpu_custom_call.1} parent=11 // pred_region
          _
        $region64: #{tpu_custom_call.1} parent=11 // pred_fallthru
          _
        // Predicated region
        $region65: #{tpu_custom_call.1} parent=11 // pred_check
          %p521 = pneg %p389
        $region66: #{tpu_custom_call.1} parent=11 // pred_check_branch
          %523 = sbr.rel (%p521) target = $region68
        $region67: #{tpu_custom_call.1} parent=11 // pred_region
          _
        $region68: #{tpu_custom_call.1} parent=11 // pred_fallthru
          _
      $region12: #{tpu_custom_call.1} parent=5 // pred_fallthru
        _
      %p524 = scmp.lt.s32.totalorder %s31, 2
      // Predicated region
      $region69: #{tpu_custom_call.1} parent=5 // pred_check
        %p525 = pneg %p524
      $region70: #{tpu_custom_call.1} parent=5 // pred_check_branch
        %527 = sbr.rel (%p525) target = $region72
      $region71: #{tpu_custom_call.1} parent=5 // pred_region
        // Predicated region
        $region73: #{tpu_custom_call.1} parent=71 // pred_check
          %p528 = pneg %p63
        $region74: #{tpu_custom_call.1} parent=71 // pred_check_branch
          %530 = sbr.rel (%p528) target = $region76
        $region75: #{tpu_custom_call.1} parent=71 // pred_region
          %p531 = scmp.lt.s32.totalorder %s38, 1
          %s532 = scalar_select %p531, %s38, 1
          %s533 = smul.addr %s532, 8
          %s534 = scalar_lea.vmem %s0, %s533
        $region76: #{tpu_custom_call.1} parent=71 // pred_fallthru
          _
        // Predicated region
        $region77: #{tpu_custom_call.1} parent=71 // pred_check
          %p535 = pneg %p89
        $region78: #{tpu_custom_call.1} parent=71 // pred_check_branch
          %537 = sbr.rel (%p535) target = $region80
        $region79: #{tpu_custom_call.1} parent=71 // pred_region
          %s538 = sand.u32 %s79, 1
          %s539 = scalar_lea.sflag [#allocation5], %s538
          %s540 = sand.u32 %s79, 1
          %s541 = scalar_lea.vmem [#allocation4], %s540
          %s543 = ssub.s32 16, 16
          %544 = vsyncadd %s539, %s543
          %s545 = smul.addr %s38, 16
          %s546 = scalar_lea.hbm %s1, %s545
          %s548 = sshll.u32 %s541, 4
          %s549 = int_to_ptr.vmem [resolvable:$true] %s548
          %551 = dma.hbm_to_vmem [thread:$0]  %s546, 16, %s549, %s539
        $region80: #{tpu_custom_call.1} parent=71 // pred_fallthru
          _
      $region72: #{tpu_custom_call.1} parent=5 // pred_fallthru
        _
      %p552 = scmp.le.s32.totalorder 1, %s31
      %p553 = scmp.lt.s32.totalorder %s31, 3
      %p554 = pnand %p552, %p553
      %p555 = pneg %p554
      // Predicated region
      $region81: #{tpu_custom_call.1} parent=5 // pred_check
        _
      $region82: #{tpu_custom_call.1} parent=5 // pred_check_branch
        %557 = sbr.rel (%p554) target = $region84
      $region83: #{tpu_custom_call.1} parent=5 // pred_region
        %s558 = ssub.s32 %s31, 1
        %s559 = sand.u32 %s82, 1
        %s560 = scalar_lea.sflag [#allocation5], %s559
        %s561 = sand.u32 %s82, 1
        %s562 = scalar_lea.vmem [#allocation4], %s561
        // Predicated region
        $region85: #{tpu_custom_call.1} parent=83 // pred_check
          %p563 = pneg %p95
        $region86: #{tpu_custom_call.1} parent=83 // pred_check_branch
          %565 = sbr.rel (%p563) target = $region88
        $region87: #{tpu_custom_call.1} parent=83 // pred_region
          %566 = dma.done %s560, 16
        $region88: #{tpu_custom_call.1} parent=83 // pred_fallthru
          _
        // Predicated region
        $region89: #{tpu_custom_call.1} parent=83 // pred_check
          %p567 = pneg %p116
        $region90: #{tpu_custom_call.1} parent=83 // pred_check_branch
          %569 = sbr.rel (%p567) target = $region92
        $region91: #{tpu_custom_call.1} parent=83 // pred_region
          %570 = dma.done [#allocation8], 16
        $region92: #{tpu_custom_call.1} parent=83 // pred_fallthru
          _
        // Predicated region
        $region93: #{tpu_custom_call.1} parent=83 // pred_check
          %p571 = pneg %p137
        $region94: #{tpu_custom_call.1} parent=83 // pred_check_branch
          %573 = sbr.rel (%p571) target = $region96
        $region95: #{tpu_custom_call.1} parent=83 // pred_region
          %574 = dma.done [#allocation8], 16
        $region96: #{tpu_custom_call.1} parent=83 // pred_fallthru
          _
        // Predicated region
        $region97: #{tpu_custom_call.1} parent=83 // pred_check
          %p575 = pneg %p179
        $region98: #{tpu_custom_call.1} parent=83 // pred_check_branch
          %577 = sbr.rel (%p575) target = $region100
        $region99: #{tpu_custom_call.1} parent=83 // pred_region
          %578 = dma.done [#allocation11], 16
        $region100: #{tpu_custom_call.1} parent=83 // pred_fallthru
          _
        // Predicated region
        $region101: #{tpu_custom_call.1} parent=83 // pred_check
          %p579 = pneg %p221
        $region102: #{tpu_custom_call.1} parent=83 // pred_check_branch
          %581 = sbr.rel (%p579) target = $region104
        $region103: #{tpu_custom_call.1} parent=83 // pred_region
          %582 = dma.done [#allocation11], 16
        $region104: #{tpu_custom_call.1} parent=83 // pred_fallthru
          _
        // Predicated region
        $region105: #{tpu_custom_call.1} parent=83 // pred_check
          %p583 = pneg %p242
        $region106: #{tpu_custom_call.1} parent=83 // pred_check_branch
          %585 = sbr.rel (%p583) target = $region108
        $region107: #{tpu_custom_call.1} parent=83 // pred_region
          %586 = dma.done [#allocation14], 256
        $region108: #{tpu_custom_call.1} parent=83 // pred_fallthru
          _
        // Predicated region
        $region109: #{tpu_custom_call.1} parent=83 // pred_check
          %p587 = pneg %p263
        $region110: #{tpu_custom_call.1} parent=83 // pred_check_branch
          %589 = sbr.rel (%p587) target = $region112
        $region111: #{tpu_custom_call.1} parent=83 // pred_region
          %590 = dma.done [#allocation14], 16
        $region112: #{tpu_custom_call.1} parent=83 // pred_fallthru
          _
        %p591 = scmp.lt.s32.totalorder %s40, 1
        %s592 = scalar_select %p591, %s40, 1
        %s593 = smul.addr %s592, 8
        %s594 = scalar_lea.vmem %s0, %s593
        %p595 = pneg %p69
        %p596 = pneg %p66
        %s597 = sand.u32 %s82, 1
        %s598 = scalar_lea.sflag [#allocation5], %s597
        %s599 = sand.u32 %s82, 1
        %s600 = scalar_lea.vmem [#allocation4], %s599
        %p601 = pneg %p95
        %p602 = pneg %p92
        %p603 = pneg %p116
        %p604 = pneg %p113
        %p605 = pneg %p137
        %p606 = pneg %p134
        %p607 = pneg %p158
        %p608 = pneg %p155
        %p609 = pneg %p179
        %p610 = pneg %p176
        %p611 = pneg %p200
        %p612 = pneg %p197
        %p613 = pneg %p221
        %p614 = pneg %p218
        %p615 = pneg %p242
        %p616 = pneg %p239
        %p617 = pneg %p263
        %p618 = pneg %p260
        %p619 = pneg %p284
        %p620 = pneg %p281
        %p621 = pneg %p305
        %p622 = pneg %p302
        %p623 = pneg %p326
        %p624 = pneg %p323
        %p625 = pneg %p347
        %p626 = pneg %p344
        %p627 = pneg %p368
        %p628 = pneg %p365
        %p629 = pneg %p389
        %p630 = pneg %p386
        %p631 = pneg %p417
        %p632 = pneg %p414
        %s633 = sand.u32 %s404, 1
        %s634 = scalar_lea.sflag [#allocation6], %s633
        %s635 = sand.u32 %s404, 1
        %s636 = smul.addr %s635, 8
        %s637 = scalar_lea.vmem [#allocation16], %s636
        %p638 = scmp.lt.s32.totalorder %s40, 1
        %s639 = scalar_select %p638, %s40, 1
        %s640 = smul.addr %s639, 8
        %s641 = scalar_lea.vmem %s0, %s640
        %p643 = scmp.eq.s32.totalorder %s41, 0
        // Predicated region
        $region113: #{tpu_custom_call.1} parent=83 // pred_check
          %p644 = pneg %p643
        $region114: #{tpu_custom_call.1} parent=83 // pred_check_branch
          %646 = sbr.rel (%p644) target = $region116
        $region115: #{tpu_custom_call.1} parent=83 // pred_region
          %v647 = vld [vmem:[%s641] sm:$0xff]
          %v648 = vld [vmem:[#allocation7] sm:$0x1]
          %v649 = vld [vmem:[#allocation9] sm:$0x1]
          %vm650 = vcmask 261120
          %v651 = vsel %vm650, %v647, 0.0
          %652 = vadd.xlane.f32.xlu0 %v651
          %v653 = vpop.xlane.xlu0 %652
          %v654 = vrcp.pop 32.0
          %v655 = vmul.f32 %v653, %v654
          %v656 = vsub.f32 %v647, %v655
          %v657 = vmul.f32 %v656, %v656
          %v658 = vsel %vm650, %v657, 0.0
          %659 = vadd.xlane.f32.xlu0 %v658
          %v660 = vpop.xlane.xlu0 %659
          %v661 = vmul.f32 %v660, %v654
          %v662 = vadd.f32 %v661, 1e-06
          %v663 = vrsqrt.pop %v662
          %v664 = vmul.f32 %v656, %v663
          %v666 = vlaneseq
          %v667 = vshrl.u32 %v666, 7
          %v668 = vsub.s32 0, %v667
          %v669 = vrot.slane %v648, %v668
          %v671 = vmul.f32 %v664, %v669
          %v673 = vlaneseq
          %v674 = vshrl.u32 %v673, 7
          %v675 = vsub.s32 0, %v674
          %v676 = vrot.slane %v649, %v675
          %v678 = vadd.f32 %v671, %v676
          %v679 = vpack.c.bf16 %v678, %v678
          %v680 = vld [vmem:[%s6] sm:$0xf]
          %v681 = vld [vmem:[%s6 + $0x4] sm:$0xf]
          %v682 = vld [vmem:[%s6 + $0x8] sm:$0xf]
          %v683 = vld [vmem:[%s6 + $0xc] sm:$0xf]
          %v684 = vld [vmem:[#allocation12] sm:$0x1]
          %v686 = vlaneseq
          %v687 = vshrl.u32 %v686, 7
          %v688 = vsub.s32 0, %v687
          %v689 = vrot.slane %v684, %v688
          %v695 = vunpack.c.l.b16 %v680
          %v696 = vunpack.c.l.b16 %v681
          %v697 = vunpack.c.l.b16 %v682
          %v698 = vunpack.c.l.b16 %v683
          %v699 = vpack.c.b16 %v696, %v695
          %v700 = vpack.c.b16 %v698, %v697
          %v704 = vsel %vm650, %v679, 0
          %706 = vmatprep.subr.bf16.mxu0 0
          %707 = vmatpush1.bf16.msra.mxu0 0
          %708 = vmatprep.subr.bf16.mxu0 0
          %709 = vmatpush1.bf16.msra.mxu0 0
          %710 = vmatprep.subr.bf16.mxu0 0
          %711 = vmatpush1.bf16.msra.mxu0 0
          %712 = vmatprep.subr.bf16.mxu0 0
          %713 = vmatpush1.bf16.msra.mxu0 0
          %714 = vmatprep.subr.bf16.mxu0 0
          %715 = vmatpush1.bf16.msra.mxu0 0
          %716 = vmatprep.subr.bf16.mxu0 0
          %717 = vmatpush1.bf16.msra.mxu0 0
          %718 = vmatprep.subr.bf16.mxu0 0
          %719 = vmatpush1.bf16.msra.mxu0 %v700
          %720 = vmatprep.subr.bf16.mxu0 0
          %721 = vmatpush1.bf16.msra.mxu0 %v699
          %722 = vmatprep.subr.bf16.mxu0 0
          %723 = vmatpush2.bf16.msra.mxu0 0
          %724 = vmatprep.subr.bf16.mxu0 0
          %725 = vmatpush2.bf16.msra.mxu0 0
          %726 = vmatprep.subr.bf16.mxu0 0
          %727 = vmatpush2.bf16.msra.mxu0 0
          %728 = vmatprep.subr.bf16.mxu0 0
          %729 = vmatpush2.bf16.msra.mxu0 0
          %730 = vmatprep.subr.bf16.mxu0 0
          %731 = vmatpush2.bf16.msra.mxu0 0
          %732 = vmatprep.subr.bf16.mxu0 0
          %733 = vmatpush2.bf16.msra.mxu0 0
          %734 = vmatprep.subr.bf16.mxu0 0
          %735 = vmatpush2.bf16.msra.mxu0 0
          %736 = vmatprep.subr.bf16.mxu0 0
          %737 = vmatpush2.bf16.msra.mxu0 0
          %738 = vmatprep.mubr.bf16.mxu0 0
          %739 = vmatmul.mubr.bf16.gmra.mxu0 %v704
          %v740 = vpop.f32.mrf.mxu0
          %v741 = vadd.f32 %v689, %v740
          %v742 = vpop.f32.mrf.mxu0
          %v743 = vpop.f32.mrf.mxu0
          %v744 = vpop.f32.mrf.mxu0
          %745 = vdwg.mxu0
          %v746 = vld [vmem:[#allocation13] sm:$0xf]
          %v747 = vld [vmem:[#allocation13 + $0x4] sm:$0xf]
          %v748 = vld [vmem:[#allocation13 + $0x8] sm:$0xf]
          %v749 = vld [vmem:[#allocation13 + $0xc] sm:$0xf]
          %v750 = vld [vmem:[#allocation15] sm:$0x1]
          %v752 = vlaneseq
          %v753 = vshrl.u32 %v752, 7
          %v754 = vsub.s32 0, %v753
          %v755 = vrot.slane %v750, %v754
          %v761 = vunpack.c.l.b16 %v746
          %v762 = vunpack.c.l.b16 %v747
          %v763 = vunpack.c.l.b16 %v748
          %v764 = vunpack.c.l.b16 %v749
          %v765 = vpack.c.b16 %v762, %v761
          %v766 = vpack.c.b16 %v764, %v763
          %769 = vmatprep.subr.bf16.mxu0 0
          %770 = vmatpush1.bf16.msra.mxu0 0
          %771 = vmatprep.subr.bf16.mxu0 0
          %772 = vmatpush1.bf16.msra.mxu0 0
          %773 = vmatprep.subr.bf16.mxu0 0
          %774 = vmatpush1.bf16.msra.mxu0 0
          %775 = vmatprep.subr.bf16.mxu0 0
          %776 = vmatpush1.bf16.msra.mxu0 0
          %777 = vmatprep.subr.bf16.mxu0 0
          %778 = vmatpush1.bf16.msra.mxu0 0
          %779 = vmatprep.subr.bf16.mxu0 0
          %780 = vmatpush1.bf16.msra.mxu0 0
          %781 = vmatprep.subr.bf16.mxu0 0
          %782 = vmatpush1.bf16.msra.mxu0 %v766
          %783 = vmatprep.subr.bf16.mxu0 0
          %784 = vmatpush1.bf16.msra.mxu0 %v765
          %785 = vmatprep.subr.bf16.mxu0 0
          %786 = vmatpush2.bf16.msra.mxu0 0
          %787 = vmatprep.subr.bf16.mxu0 0
          %788 = vmatpush2.bf16.msra.mxu0 0
          %789 = vmatprep.subr.bf16.mxu0 0
          %790 = vmatpush2.bf16.msra.mxu0 0
          %791 = vmatprep.subr.bf16.mxu0 0
          %792 = vmatpush2.bf16.msra.mxu0 0
          %793 = vmatprep.subr.bf16.mxu0 0
          %794 = vmatpush2.bf16.msra.mxu0 0
          %795 = vmatprep.subr.bf16.mxu0 0
          %796 = vmatpush2.bf16.msra.mxu0 0
          %797 = vmatprep.subr.bf16.mxu0 0
          %798 = vmatpush2.bf16.msra.mxu0 0
          %799 = vmatprep.subr.bf16.mxu0 0
          %800 = vmatpush2.bf16.msra.mxu0 0
          %801 = vmatprep.mubr.bf16.mxu0 0
          %802 = vmatmul.mubr.bf16.gmra.mxu0 %v704
          %v803 = vpop.f32.mrf.mxu0
          %v804 = vadd.f32 %v755, %v803
          %v805 = vpop.f32.mrf.mxu0
          %v806 = vpop.f32.mrf.mxu0
          %v807 = vpop.f32.mrf.mxu0
          %808 = vdwg.mxu0
          %v809 = vpack.c.bf16 %v741, %v741
          %vm810 = vcmask 257024
          %811 = vst.msk [vmem:[#allocation2] sm:$0xf] %vm810, %v809
          %v812 = vpack.c.bf16 %v804, %v804
          %813 = vst.msk [vmem:[#allocation3] sm:$0xf] %vm810, %v812
        $region116: #{tpu_custom_call.1} parent=83 // pred_fallthru
          _
        %s814 = smul.u32 %s41, 8
        %s815 = scalar_lea.vmem %s641, %s814
        %v816 = vld [vmem:[%s815] sm:$0xff]
        %v817 = vld [vmem:[#allocation7] sm:$0x1]
        %v818 = vld [vmem:[#allocation9] sm:$0x1]
        %vm819 = vcmask 261120
        %v820 = vsel %vm819, %v816, 0.0
        %821 = vadd.xlane.f32.xlu0 %v820
        %v822 = vpop.xlane.xlu0 %821
        %v823 = vrcp.pop 32.0
        %v824 = vmul.f32 %v822, %v823
        %v825 = vsub.f32 %v816, %v824
        %v826 = vmul.f32 %v825, %v825
        %v827 = vsel %vm819, %v826, 0.0
        %828 = vadd.xlane.f32.xlu0 %v827
        %v829 = vpop.xlane.xlu0 %828
        %v830 = vmul.f32 %v829, %v823
        %v831 = vadd.f32 %v830, 1e-06
        %v832 = vrsqrt.pop %v831
        %v833 = vmul.f32 %v825, %v832
        %v835 = vlaneseq
        %v836 = vshrl.u32 %v835, 7
        %v837 = vsub.s32 0, %v836
        %v838 = vrot.slane %v817, %v837
        %v840 = vmul.f32 %v833, %v838
        %v842 = vlaneseq
        %v843 = vshrl.u32 %v842, 7
        %v844 = vsub.s32 0, %v843
        %v845 = vrot.slane %v818, %v844
        %v847 = vadd.f32 %v840, %v845
        %v848 = vpack.c.bf16 %v847, %v847
        %v849 = vld [vmem:[%s4] sm:$0xf]
        %v850 = vld [vmem:[%s4 + $0x4] sm:$0xf]
        %v851 = vld [vmem:[%s4 + $0x8] sm:$0xf]
        %v852 = vld [vmem:[%s4 + $0xc] sm:$0xf]
        %v853 = vld [vmem:[#allocation10] sm:$0x1]
        %v855 = vlaneseq
        %v856 = vshrl.u32 %v855, 7
        %v857 = vsub.s32 0, %v856
        %v858 = vrot.slane %v853, %v857
        %v864 = vunpack.c.l.b16 %v849
        %v865 = vunpack.c.l.b16 %v850
        %v866 = vunpack.c.l.b16 %v851
        %v867 = vunpack.c.l.b16 %v852
        %v868 = vpack.c.b16 %v865, %v864
        %v869 = vpack.c.b16 %v867, %v866
        %v873 = vsel %vm819, %v848, 0
        %875 = vmatprep.subr.bf16.mxu0 0
        %876 = vmatpush1.bf16.msra.mxu0 0
        %877 = vmatprep.subr.bf16.mxu0 0
        %878 = vmatpush1.bf16.msra.mxu0 0
        %879 = vmatprep.subr.bf16.mxu0 0
        %880 = vmatpush1.bf16.msra.mxu0 0
        %881 = vmatprep.subr.bf16.mxu0 0
        %882 = vmatpush1.bf16.msra.mxu0 0
        %883 = vmatprep.subr.bf16.mxu0 0
        %884 = vmatpush1.bf16.msra.mxu0 0
        %885 = vmatprep.subr.bf16.mxu0 0
        %886 = vmatpush1.bf16.msra.mxu0 0
        %887 = vmatprep.subr.bf16.mxu0 0
        %888 = vmatpush1.bf16.msra.mxu0 %v869
        %889 = vmatprep.subr.bf16.mxu0 0
        %890 = vmatpush1.bf16.msra.mxu0 %v868
        %891 = vmatprep.subr.bf16.mxu0 0
        %892 = vmatpush2.bf16.msra.mxu0 0
        %893 = vmatprep.subr.bf16.mxu0 0
        %894 = vmatpush2.bf16.msra.mxu0 0
        %895 = vmatprep.subr.bf16.mxu0 0
        %896 = vmatpush2.bf16.msra.mxu0 0
        %897 = vmatprep.subr.bf16.mxu0 0
        %898 = vmatpush2.bf16.msra.mxu0 0
        %899 = vmatprep.subr.bf16.mxu0 0
        %900 = vmatpush2.bf16.msra.mxu0 0
        %901 = vmatprep.subr.bf16.mxu0 0
        %902 = vmatpush2.bf16.msra.mxu0 0
        %903 = vmatprep.subr.bf16.mxu0 0
        %904 = vmatpush2.bf16.msra.mxu0 0
        %905 = vmatprep.subr.bf16.mxu0 0
        %906 = vmatpush2.bf16.msra.mxu0 0
        %907 = vmatprep.mubr.bf16.mxu0 0
        %908 = vmatmul.mubr.bf16.gmra.mxu0 %v873
        %v909 = vpop.f32.mrf.mxu0
        %v910 = vadd.f32 %v858, %v909
        %v911 = vpop.f32.mrf.mxu0
        %v912 = vpop.f32.mrf.mxu0
        %v913 = vpop.f32.mrf.mxu0
        %914 = vdwg.mxu0
        %v915 = vpack.c.bf16 %v910, %v910
        %v916 = vld [vmem:[%s562] sm:$0x1]
        %vm917 = vcmp.eq.f32.partialorder %v916, 0.0
        %v918 = vsel %vm917, -1e+09, 0.0
        %v919 = vld [vmem:[#allocation2] sm:$0xf]
        %v920 = vld [vmem:[#allocation3] sm:$0xf]
        %v922 = vlaneseq
        %v923 = vshrl.u32 %v922, 7
        %v924 = vsub.s32 0, %v923
        %v925 = vrot.slane %v918, %v924
        %vm927 = vcmask 64512
        %v929 = vsel %vm927, %v915, 0
        %v932 = vsel %vm927, %v919, 0
        %934 = vmatprep.subr.bf16.mxu0 0
        %935 = vmatpush1.bf16.xpose.msra.mxu0 0
        %936 = vmatprep.subr.bf16.mxu0 0
        %937 = vmatpush1.bf16.xpose.msra.mxu0 0
        %938 = vmatprep.subr.bf16.mxu0 0
        %939 = vmatpush1.bf16.xpose.msra.mxu0 0
        %940 = vmatprep.subr.bf16.mxu0 0
        %941 = vmatpush1.bf16.xpose.msra.mxu0 0
        %942 = vmatprep.subr.bf16.mxu0 0
        %943 = vmatpush1.bf16.xpose.msra.mxu0 0
        %944 = vmatprep.subr.bf16.mxu0 0
        %945 = vmatpush1.bf16.xpose.msra.mxu0 0
        %946 = vmatprep.subr.bf16.mxu0 0
        %947 = vmatpush1.bf16.xpose.msra.mxu0 0
        %948 = vmatprep.subr.bf16.mxu0 0
        %949 = vmatpush1.bf16.xpose.msra.mxu0 %v932
        %950 = vmatprep.subr.bf16.mxu0 0
        %951 = vmatpush2.bf16.xpose.msra.mxu0 0
        %952 = vmatprep.subr.bf16.mxu0 0
        %953 = vmatpush2.bf16.xpose.msra.mxu0 0
        %954 = vmatprep.subr.bf16.mxu0 0
        %955 = vmatpush2.bf16.xpose.msra.mxu0 0
        %956 = vmatprep.subr.bf16.mxu0 0
        %957 = vmatpush2.bf16.xpose.msra.mxu0 0
        %958 = vmatprep.subr.bf16.mxu0 0
        %959 = vmatpush2.bf16.xpose.msra.mxu0 0
        %960 = vmatprep.subr.bf16.mxu0 0
        %961 = vmatpush2.bf16.xpose.msra.mxu0 0
        %962 = vmatprep.subr.bf16.mxu0 0
        %963 = vmatpush2.bf16.xpose.msra.mxu0 0
        %964 = vmatprep.subr.bf16.mxu0 0
        %965 = vmatpush2.bf16.xpose.msra.mxu0 0
        %966 = vmatprep.mubr.bf16.mxu0 0
        %967 = vmatmul.mubr.bf16.gmra.mxu0 %v929
        %v968 = vpop.f32.mrf.mxu0
        %v969 = vadd.f32 %v925, %v968
        %v970 = vpop.f32.mrf.mxu0
        %v971 = vpop.f32.mrf.mxu0
        %v972 = vpop.f32.mrf.mxu0
        %973 = vdwg.mxu0
        %v974 = vsel %vm927, %v969, -inf
        %975 = vmax.xlane.f32.xlu0 %v974
        %v976 = vpop.xlane.xlu0 %975
        %v977 = vsub.f32 %v969, %v976
        %v978 = vmul.f32 %v977, 1.442695
        %v979 = vpow.pop %v978
        %v980 = vsel %vm927, %v979, 0.0
        %981 = vadd.xlane.f32.xlu0 %v980
        %v982 = vpop.xlane.xlu0 %981
        %v983 = vrcp.pop %v982
        %v984 = vmul.f32 %v979, %v983
        %v985 = vpack.c.bf16 %v984, %v984
        %v987 = vsel %vm927, %v985, 0
        %vm989 = vcmask 1043456
        %v991 = vsel %vm989, %v920, 0
        %993 = vmatprep.subr.bf16.mxu0 0
        %994 = vmatpush1.bf16.msra.mxu0 0
        %995 = vmatprep.subr.bf16.mxu0 0
        %996 = vmatpush1.bf16.msra.mxu0 0
        %997 = vmatprep.subr.bf16.mxu0 0
        %998 = vmatpush1.bf16.msra.mxu0 0
        %999 = vmatprep.subr.bf16.mxu0 0
        %1000 = vmatpush1.bf16.msra.mxu0 0
        %1001 = vmatprep.subr.bf16.mxu0 0
        %1002 = vmatpush1.bf16.msra.mxu0 0
        %1003 = vmatprep.subr.bf16.mxu0 0
        %1004 = vmatpush1.bf16.msra.mxu0 0
        %1005 = vmatprep.subr.bf16.mxu0 0
        %1006 = vmatpush1.bf16.msra.mxu0 0
        %1007 = vmatprep.subr.bf16.mxu0 0
        %1008 = vmatpush1.bf16.msra.mxu0 %v991
        %1009 = vmatprep.subr.bf16.mxu0 0
        %1010 = vmatpush2.bf16.msra.mxu0 0
        %1011 = vmatprep.subr.bf16.mxu0 0
        %1012 = vmatpush2.bf16.msra.mxu0 0
        %1013 = vmatprep.subr.bf16.mxu0 0
        %1014 = vmatpush2.bf16.msra.mxu0 0
        %1015 = vmatprep.subr.bf16.mxu0 0
        %1016 = vmatpush2.bf16.msra.mxu0 0
        %1017 = vmatprep.subr.bf16.mxu0 0
        %1018 = vmatpush2.bf16.msra.mxu0 0
        %1019 = vmatprep.subr.bf16.mxu0 0
        %1020 = vmatpush2.bf16.msra.mxu0 0
        %1021 = vmatprep.subr.bf16.mxu0 0
        %1022 = vmatpush2.bf16.msra.mxu0 0
        %1023 = vmatprep.subr.bf16.mxu0 0
        %1024 = vmatpush2.bf16.msra.mxu0 0
        %1025 = vmatprep.mubr.bf16.mxu0 0
        %1026 = vmatmul.mubr.bf16.gmra.mxu0 %v987
        %v1027 = vpop.f32.mrf.mxu0
        %v1028 = vadd.f32 0.0, %v1027
        %v1029 = vpop.f32.mrf.mxu0
        %v1030 = vpop.f32.mrf.mxu0
        %v1031 = vpop.f32.mrf.mxu0
        %1032 = vdwg.mxu0
        %1034 = vrot.lane.b32.xlu0 %v915, 120
        %v1035 = vpop.permute.xlu0 %1034
        %v1037 = vunpack.c.l.b16 %v919
        %v1038 = vpack.c.b16 %v1037, %v1037
        %1039 = vrot.lane.b32.xlu0 %v1038, 120
        %v1040 = vpop.permute.xlu0 %1039
        %v1042 = vsel %vm927, %v1035, 0
        %v1045 = vsel %vm927, %v1040, 0
        %1047 = vmatprep.subr.bf16.mxu0 0
        %1048 = vmatpush1.bf16.xpose.msra.mxu0 0
        %1049 = vmatprep.subr.bf16.mxu0 0
        %1050 = vmatpush1.bf16.xpose.msra.mxu0 0
        %1051 = vmatprep.subr.bf16.mxu0 0
        %1052 = vmatpush1.bf16.xpose.msra.mxu0 0
        %1053 = vmatprep.subr.bf16.mxu0 0
        %1054 = vmatpush1.bf16.xpose.msra.mxu0 0
        %1055 = vmatprep.subr.bf16.mxu0 0
        %1056 = vmatpush1.bf16.xpose.msra.mxu0 0
        %1057 = vmatprep.subr.bf16.mxu0 0
        %1058 = vmatpush1.bf16.xpose.msra.mxu0 0
        %1059 = vmatprep.subr.bf16.mxu0 0
        %1060 = vmatpush1.bf16.xpose.msra.mxu0 0
        %1061 = vmatprep.subr.bf16.mxu0 0
        %1062 = vmatpush1.bf16.xpose.msra.mxu0 %v1045
        %1063 = vmatprep.subr.bf16.mxu0 0
        %1064 = vmatpush2.bf16.xpose.msra.mxu0 0
        %1065 = vmatprep.subr.bf16.mxu0 0
        %1066 = vmatpush2.bf16.xpose.msra.mxu0 0
        %1067 = vmatprep.subr.bf16.mxu0 0
        %1068 = vmatpush2.bf16.xpose.msra.mxu0 0
        %1069 = vmatprep.subr.bf16.mxu0 0
        %1070 = vmatpush2.bf16.xpose.msra.mxu0 0
        %1071 = vmatprep.subr.bf16.mxu0 0
        %1072 = vmatpush2.bf16.xpose.msra.mxu0 0
        %1073 = vmatprep.subr.bf16.mxu0 0
        %1074 = vmatpush2.bf16.xpose.msra.mxu0 0
        %1075 = vmatprep.subr.bf16.mxu0 0
        %1076 = vmatpush2.bf16.xpose.msra.mxu0 0
        %1077 = vmatprep.subr.bf16.mxu0 0
        %1078 = vmatpush2.bf16.xpose.msra.mxu0 0
        %1079 = vmatprep.mubr.bf16.mxu0 0
        %1080 = vmatmul.mubr.bf16.gmra.mxu0 %v1042
        %v1081 = vpop.f32.mrf.mxu0
        %v1082 = vadd.f32 %v925, %v1081
        %v1083 = vpop.f32.mrf.mxu0
        %v1084 = vpop.f32.mrf.mxu0
        %v1085 = vpop.f32.mrf.mxu0
        %1086 = vdwg.mxu0
        %v1087 = vsel %vm927, %v1082, -inf
        %1088 = vmax.xlane.f32.xlu0 %v1087
        %v1089 = vpop.xlane.xlu0 %1088
        %v1090 = vsub.f32 %v1082, %v1089
        %v1091 = vmul.f32 %v1090, 1.442695
        %v1092 = vpow.pop %v1091
        %v1093 = vsel %vm927, %v1092, 0.0
        %1094 = vadd.xlane.f32.xlu0 %v1093
        %v1095 = vpop.xlane.xlu0 %1094
        %v1096 = vrcp.pop %v1095
        %v1097 = vmul.f32 %v1092, %v1096
        %v1098 = vpack.c.bf16 %v1097, %v1097
        %v1100 = vunpack.c.l.b16 %v920
        %v1101 = vpack.c.b16 %v1100, %v1100
        %1102 = vrot.lane.b32.xlu0 %v1101, 120
        %v1103 = vpop.permute.xlu0 %1102
        %v1105 = vsel %vm927, %v1098, 0
        %v1108 = vsel %vm989, %v1103, 0
        %1110 = vmatprep.subr.bf16.mxu0 0
        %1111 = vmatpush1.bf16.msra.mxu0 0
        %1112 = vmatprep.subr.bf16.mxu0 0
        %1113 = vmatpush1.bf16.msra.mxu0 0
        %1114 = vmatprep.subr.bf16.mxu0 0
        %1115 = vmatpush1.bf16.msra.mxu0 0
        %1116 = vmatprep.subr.bf16.mxu0 0
        %1117 = vmatpush1.bf16.msra.mxu0 0
        %1118 = vmatprep.subr.bf16.mxu0 0
        %1119 = vmatpush1.bf16.msra.mxu0 0
        %1120 = vmatprep.subr.bf16.mxu0 0
        %1121 = vmatpush1.bf16.msra.mxu0 0
        %1122 = vmatprep.subr.bf16.mxu0 0
        %1123 = vmatpush1.bf16.msra.mxu0 0
        %1124 = vmatprep.subr.bf16.mxu0 0
        %1125 = vmatpush1.bf16.msra.mxu0 %v1108
        %1126 = vmatprep.subr.bf16.mxu0 0
        %1127 = vmatpush2.bf16.msra.mxu0 0
        %1128 = vmatprep.subr.bf16.mxu0 0
        %1129 = vmatpush2.bf16.msra.mxu0 0
        %1130 = vmatprep.subr.bf16.mxu0 0
        %1131 = vmatpush2.bf16.msra.mxu0 0
        %1132 = vmatprep.subr.bf16.mxu0 0
        %1133 = vmatpush2.bf16.msra.mxu0 0
        %1134 = vmatprep.subr.bf16.mxu0 0
        %1135 = vmatpush2.bf16.msra.mxu0 0
        %1136 = vmatprep.subr.bf16.mxu0 0
        %1137 = vmatpush2.bf16.msra.mxu0 0
        %1138 = vmatprep.subr.bf16.mxu0 0
        %1139 = vmatpush2.bf16.msra.mxu0 0
        %1140 = vmatprep.subr.bf16.mxu0 0
        %1141 = vmatpush2.bf16.msra.mxu0 0
        %1142 = vmatprep.mubr.bf16.mxu0 0
        %1143 = vmatmul.mubr.bf16.gmra.mxu0 %v1105
        %v1144 = vpop.f32.mrf.mxu0
        %v1145 = vadd.f32 0.0, %v1144
        %v1146 = vpop.f32.mrf.mxu0
        %v1147 = vpop.f32.mrf.mxu0
        %v1148 = vpop.f32.mrf.mxu0
        %1149 = vdwg.mxu0
        %1150 = vrot.lane.b32.xlu0 %v915, 112
        %v1151 = vpop.permute.xlu0 %1150
        %1152 = vrot.lane.b32.xlu0 %v1038, 112
        %v1153 = vpop.permute.xlu0 %1152
        %v1155 = vsel %vm927, %v1151, 0
        %v1158 = vsel %vm927, %v1153, 0
        %1160 = vmatprep.subr.bf16.mxu0 0
        %1161 = vmatpush1.bf16.xpose.msra.mxu0 0
        %1162 = vmatprep.subr.bf16.mxu0 0
        %1163 = vmatpush1.bf16.xpose.msra.mxu0 0
        %1164 = vmatprep.subr.bf16.mxu0 0
        %1165 = vmatpush1.bf16.xpose.msra.mxu0 0
        %1166 = vmatprep.subr.bf16.mxu0 0
        %1167 = vmatpush1.bf16.xpose.msra.mxu0 0
        %1168 = vmatprep.subr.bf16.mxu0 0
        %1169 = vmatpush1.bf16.xpose.msra.mxu0 0
        %1170 = vmatprep.subr.bf16.mxu0 0
        %1171 = vmatpush1.bf16.xpose.msra.mxu0 0
        %1172 = vmatprep.subr.bf16.mxu0 0
        %1173 = vmatpush1.bf16.xpose.msra.mxu0 0
        %1174 = vmatprep.subr.bf16.mxu0 0
        %1175 = vmatpush1.bf16.xpose.msra.mxu0 %v1158
        %1176 = vmatprep.subr.bf16.mxu0 0
        %1177 = vmatpush2.bf16.xpose.msra.mxu0 0
        %1178 = vmatprep.subr.bf16.mxu0 0
        %1179 = vmatpush2.bf16.xpose.msra.mxu0 0
        %1180 = vmatprep.subr.bf16.mxu0 0
        %1181 = vmatpush2.bf16.xpose.msra.mxu0 0
        %1182 = vmatprep.subr.bf16.mxu0 0
        %1183 = vmatpush2.bf16.xpose.msra.mxu0 0
        %1184 = vmatprep.subr.bf16.mxu0 0
        %1185 = vmatpush2.bf16.xpose.msra.mxu0 0
        %1186 = vmatprep.subr.bf16.mxu0 0
        %1187 = vmatpush2.bf16.xpose.msra.mxu0 0
        %1188 = vmatprep.subr.bf16.mxu0 0
        %1189 = vmatpush2.bf16.xpose.msra.mxu0 0
        %1190 = vmatprep.subr.bf16.mxu0 0
        %1191 = vmatpush2.bf16.xpose.msra.mxu0 0
        %1192 = vmatprep.mubr.bf16.mxu0 0
        %1193 = vmatmul.mubr.bf16.gmra.mxu0 %v1155
        %v1194 = vpop.f32.mrf.mxu0
        %v1195 = vadd.f32 %v925, %v1194
        %v1196 = vpop.f32.mrf.mxu0
        %v1197 = vpop.f32.mrf.mxu0
        %v1198 = vpop.f32.mrf.mxu0
        %1199 = vdwg.mxu0
        %v1200 = vsel %vm927, %v1195, -inf
        %1201 = vmax.xlane.f32.xlu0 %v1200
        %v1202 = vpop.xlane.xlu0 %1201
        %v1203 = vsub.f32 %v1195, %v1202
        %v1204 = vmul.f32 %v1203, 1.442695
        %v1205 = vpow.pop %v1204
        %v1206 = vsel %vm927, %v1205, 0.0
        %1207 = vadd.xlane.f32.xlu0 %v1206
        %v1208 = vpop.xlane.xlu0 %1207
        %v1209 = vrcp.pop %v1208
        %v1210 = vmul.f32 %v1205, %v1209
        %v1211 = vpack.c.bf16 %v1210, %v1210
        %1212 = vrot.lane.b32.xlu0 %v1101, 112
        %v1213 = vpop.permute.xlu0 %1212
        %v1215 = vsel %vm927, %v1211, 0
        %v1218 = vsel %vm989, %v1213, 0
        %1220 = vmatprep.subr.bf16.mxu0 0
        %1221 = vmatpush1.bf16.msra.mxu0 0
        %1222 = vmatprep.subr.bf16.mxu0 0
        %1223 = vmatpush1.bf16.msra.mxu0 0
        %1224 = vmatprep.subr.bf16.mxu0 0
        %1225 = vmatpush1.bf16.msra.mxu0 0
        %1226 = vmatprep.subr.bf16.mxu0 0
        %1227 = vmatpush1.bf16.msra.mxu0 0
        %1228 = vmatprep.subr.bf16.mxu0 0
        %1229 = vmatpush1.bf16.msra.mxu0 0
        %1230 = vmatprep.subr.bf16.mxu0 0
        %1231 = vmatpush1.bf16.msra.mxu0 0
        %1232 = vmatprep.subr.bf16.mxu0 0
        %1233 = vmatpush1.bf16.msra.mxu0 0
        %1234 = vmatprep.subr.bf16.mxu0 0
        %1235 = vmatpush1.bf16.msra.mxu0 %v1218
        %1236 = vmatprep.subr.bf16.mxu0 0
        %1237 = vmatpush2.bf16.msra.mxu0 0
        %1238 = vmatprep.subr.bf16.mxu0 0
        %1239 = vmatpush2.bf16.msra.mxu0 0
        %1240 = vmatprep.subr.bf16.mxu0 0
        %1241 = vmatpush2.bf16.msra.mxu0 0
        %1242 = vmatprep.subr.bf16.mxu0 0
        %1243 = vmatpush2.bf16.msra.mxu0 0
        %1244 = vmatprep.subr.bf16.mxu0 0
        %1245 = vmatpush2.bf16.msra.mxu0 0
        %1246 = vmatprep.subr.bf16.mxu0 0
        %1247 = vmatpush2.bf16.msra.mxu0 0
        %1248 = vmatprep.subr.bf16.mxu0 0
        %1249 = vmatpush2.bf16.msra.mxu0 0
        %1250 = vmatprep.subr.bf16.mxu0 0
        %1251 = vmatpush2.bf16.msra.mxu0 0
        %1252 = vmatprep.mubr.bf16.mxu0 0
        %1253 = vmatmul.mubr.bf16.gmra.mxu0 %v1215
        %v1254 = vpop.f32.mrf.mxu0
        %v1255 = vadd.f32 0.0, %v1254
        %v1256 = vpop.f32.mrf.mxu0
        %v1257 = vpop.f32.mrf.mxu0
        %v1258 = vpop.f32.mrf.mxu0
        %1259 = vdwg.mxu0
        %1260 = vrot.lane.b32.xlu0 %v915, 104
        %v1261 = vpop.permute.xlu0 %1260
        %1262 = vrot.lane.b32.xlu0 %v1038, 104
        %v1263 = vpop.permute.xlu0 %1262
        %v1265 = vsel %vm927, %v1261, 0
        %v1268 = vsel %vm927, %v1263, 0
        %1270 = vmatprep.subr.bf16.mxu0 0
        %1271 = vmatpush1.bf16.xpose.msra.mxu0 0
        %1272 = vmatprep.subr.bf16.mxu0 0
        %1273 = vmatpush1.bf16.xpose.msra.mxu0 0
        %1274 = vmatprep.subr.bf16.mxu0 0
        %1275 = vmatpush1.bf16.xpose.msra.mxu0 0
        %1276 = vmatprep.subr.bf16.mxu0 0
        %1277 = vmatpush1.bf16.xpose.msra.mxu0 0
        %1278 = vmatprep.subr.bf16.mxu0 0
        %1279 = vmatpush1.bf16.xpose.msra.mxu0 0
        %1280 = vmatprep.subr.bf16.mxu0 0
        %1281 = vmatpush1.bf16.xpose.msra.mxu0 0
        %1282 = vmatprep.subr.bf16.mxu0 0
        %1283 = vmatpush1.bf16.xpose.msra.mxu0 0
        %1284 = vmatprep.subr.bf16.mxu0 0
        %1285 = vmatpush1.bf16.xpose.msra.mxu0 %v1268
        %1286 = vmatprep.subr.bf16.mxu0 0
        %1287 = vmatpush2.bf16.xpose.msra.mxu0 0
        %1288 = vmatprep.subr.bf16.mxu0 0
        %1289 = vmatpush2.bf16.xpose.msra.mxu0 0
        %1290 = vmatprep.subr.bf16.mxu0 0
        %1291 = vmatpush2.bf16.xpose.msra.mxu0 0
        %1292 = vmatprep.subr.bf16.mxu0 0
        %1293 = vmatpush2.bf16.xpose.msra.mxu0 0
        %1294 = vmatprep.subr.bf16.mxu0 0
        %1295 = vmatpush2.bf16.xpose.msra.mxu0 0
        %1296 = vmatprep.subr.bf16.mxu0 0
        %1297 = vmatpush2.bf16.xpose.msra.mxu0 0
        %1298 = vmatprep.subr.bf16.mxu0 0
        %1299 = vmatpush2.bf16.xpose.msra.mxu0 0
        %1300 = vmatprep.subr.bf16.mxu0 0
        %1301 = vmatpush2.bf16.xpose.msra.mxu0 0
        %1302 = vmatprep.mubr.bf16.mxu0 0
        %1303 = vmatmul.mubr.bf16.gmra.mxu0 %v1265
        %v1304 = vpop.f32.mrf.mxu0
        %v1305 = vadd.f32 %v925, %v1304
        %v1306 = vpop.f32.mrf.mxu0
        %v1307 = vpop.f32.mrf.mxu0
        %v1308 = vpop.f32.mrf.mxu0
        %1309 = vdwg.mxu0
        %v1310 = vsel %vm927, %v1305, -inf
        %1311 = vmax.xlane.f32.xlu0 %v1310
        %v1312 = vpop.xlane.xlu0 %1311
        %v1313 = vsub.f32 %v1305, %v1312
        %v1314 = vmul.f32 %v1313, 1.442695
        %v1315 = vpow.pop %v1314
        %v1316 = vsel %vm927, %v1315, 0.0
        %1317 = vadd.xlane.f32.xlu0 %v1316
        %v1318 = vpop.xlane.xlu0 %1317
        %v1319 = vrcp.pop %v1318
        %v1320 = vmul.f32 %v1315, %v1319
        %v1321 = vpack.c.bf16 %v1320, %v1320
        %1322 = vrot.lane.b32.xlu0 %v1101, 104
        %v1323 = vpop.permute.xlu0 %1322
        %v1325 = vsel %vm927, %v1321, 0
        %v1328 = vsel %vm989, %v1323, 0
        %1330 = vmatprep.subr.bf16.mxu0 0
        %1331 = vmatpush1.bf16.msra.mxu0 0
        %1332 = vmatprep.subr.bf16.mxu0 0
        %1333 = vmatpush1.bf16.msra.mxu0 0
        %1334 = vmatprep.subr.bf16.mxu0 0
        %1335 = vmatpush1.bf16.msra.mxu0 0
        %1336 = vmatprep.subr.bf16.mxu0 0
        %1337 = vmatpush1.bf16.msra.mxu0 0
        %1338 = vmatprep.subr.bf16.mxu0 0
        %1339 = vmatpush1.bf16.msra.mxu0 0
        %1340 = vmatprep.subr.bf16.mxu0 0
        %1341 = vmatpush1.bf16.msra.mxu0 0
        %1342 = vmatprep.subr.bf16.mxu0 0
        %1343 = vmatpush1.bf16.msra.mxu0 0
        %1344 = vmatprep.subr.bf16.mxu0 0
        %1345 = vmatpush1.bf16.msra.mxu0 %v1328
        %1346 = vmatprep.subr.bf16.mxu0 0
        %1347 = vmatpush2.bf16.msra.mxu0 0
        %1348 = vmatprep.subr.bf16.mxu0 0
        %1349 = vmatpush2.bf16.msra.mxu0 0
        %1350 = vmatprep.subr.bf16.mxu0 0
        %1351 = vmatpush2.bf16.msra.mxu0 0
        %1352 = vmatprep.subr.bf16.mxu0 0
        %1353 = vmatpush2.bf16.msra.mxu0 0
        %1354 = vmatprep.subr.bf16.mxu0 0
        %1355 = vmatpush2.bf16.msra.mxu0 0
        %1356 = vmatprep.subr.bf16.mxu0 0
        %1357 = vmatpush2.bf16.msra.mxu0 0
        %1358 = vmatprep.subr.bf16.mxu0 0
        %1359 = vmatpush2.bf16.msra.mxu0 0
        %1360 = vmatprep.subr.bf16.mxu0 0
        %1361 = vmatpush2.bf16.msra.mxu0 0
        %1362 = vmatprep.mubr.bf16.mxu0 0
        %1363 = vmatmul.mubr.bf16.gmra.mxu0 %v1325
        %v1364 = vpop.f32.mrf.mxu0
        %v1365 = vadd.f32 0.0, %v1364
        %v1366 = vpop.f32.mrf.mxu0
        %v1367 = vpop.f32.mrf.mxu0
        %v1368 = vpop.f32.mrf.mxu0
        %1369 = vdwg.mxu0
        %1371 = vrot.lane.b32.xlu0 %v1145, 8
        %v1372 = vpop.permute.xlu0 %1371
        %1375 = vrot.lane.b32.xlu0 %v1255, 16
        %v1376 = vpop.permute.xlu0 %1375
        %1379 = vrot.lane.b32.xlu0 %v1365, 24
        %v1380 = vpop.permute.xlu0 %1379
        %v1382 = vsel %vm927, %v1028, %v1372
        %vm1383 = vcmask 130048
        %v1384 = vsel %vm1383, %v1382, %v1376
        %vm1385 = vcmask 195584
        %v1386 = vsel %vm1385, %v1384, %v1380
        %v1387 = vadd.f32 %v816, %v1386
        %v1388 = vld [vmem:[%s10] sm:$0x1]
        %v1389 = vld [vmem:[%s11] sm:$0x1]
        %v1390 = vsel %vm819, %v1387, 0.0
        %1391 = vadd.xlane.f32.xlu0 %v1390
        %v1392 = vpop.xlane.xlu0 %1391
        %v1393 = vmul.f32 %v1392, %v823
        %v1394 = vsub.f32 %v1387, %v1393
        %v1395 = vmul.f32 %v1394, %v1394
        %v1396 = vsel %vm819, %v1395, 0.0
        %1397 = vadd.xlane.f32.xlu0 %v1396
        %v1398 = vpop.xlane.xlu0 %1397
        %v1399 = vmul.f32 %v1398, %v823
        %v1400 = vadd.f32 %v1399, 1e-06
        %v1401 = vrsqrt.pop %v1400
        %v1402 = vmul.f32 %v1394, %v1401
        %v1404 = vlaneseq
        %v1405 = vshrl.u32 %v1404, 7
        %v1406 = vsub.s32 0, %v1405
        %v1407 = vrot.slane %v1388, %v1406
        %v1409 = vmul.f32 %v1402, %v1407
        %v1411 = vlaneseq
        %v1412 = vshrl.u32 %v1411, 7
        %v1413 = vsub.s32 0, %v1412
        %v1414 = vrot.slane %v1389, %v1413
        %v1416 = vadd.f32 %v1409, %v1414
        %v1417 = vpack.c.bf16 %v1416, %v1416
        %v1418 = vld [vmem:[%s12] sm:$0xf]
        %v1419 = vld [vmem:[%s12 + $0x4] sm:$0xf]
        %v1420 = vld [vmem:[%s12 + $0x8] sm:$0xf]
        %v1421 = vld [vmem:[%s12 + $0xc] sm:$0xf]
        %v1422 = vld [vmem:[%s13] sm:$0x1]
        %v1424 = vlaneseq
        %v1425 = vshrl.u32 %v1424, 7
        %v1426 = vsub.s32 0, %v1425
        %v1427 = vrot.slane %v1422, %v1426
        %v1433 = vunpack.c.l.b16 %v1418
        %v1434 = vunpack.c.l.b16 %v1419
        %v1435 = vunpack.c.l.b16 %v1420
        %v1436 = vunpack.c.l.b16 %v1421
        %v1437 = vpack.c.b16 %v1434, %v1433
        %v1438 = vpack.c.b16 %v1436, %v1435
        %v1442 = vsel %vm819, %v1417, 0
        %1444 = vmatprep.subr.bf16.mxu0 0
        %1445 = vmatpush1.bf16.msra.mxu0 0
        %1446 = vmatprep.subr.bf16.mxu0 0
        %1447 = vmatpush1.bf16.msra.mxu0 0
        %1448 = vmatprep.subr.bf16.mxu0 0
        %1449 = vmatpush1.bf16.msra.mxu0 0
        %1450 = vmatprep.subr.bf16.mxu0 0
        %1451 = vmatpush1.bf16.msra.mxu0 0
        %1452 = vmatprep.subr.bf16.mxu0 0
        %1453 = vmatpush1.bf16.msra.mxu0 0
        %1454 = vmatprep.subr.bf16.mxu0 0
        %1455 = vmatpush1.bf16.msra.mxu0 0
        %1456 = vmatprep.subr.bf16.mxu0 0
        %1457 = vmatpush1.bf16.msra.mxu0 %v1438
        %1458 = vmatprep.subr.bf16.mxu0 0
        %1459 = vmatpush1.bf16.msra.mxu0 %v1437
        %1460 = vmatprep.subr.bf16.mxu0 0
        %1461 = vmatpush2.bf16.msra.mxu0 0
        %1462 = vmatprep.subr.bf16.mxu0 0
        %1463 = vmatpush2.bf16.msra.mxu0 0
        %1464 = vmatprep.subr.bf16.mxu0 0
        %1465 = vmatpush2.bf16.msra.mxu0 0
        %1466 = vmatprep.subr.bf16.mxu0 0
        %1467 = vmatpush2.bf16.msra.mxu0 0
        %1468 = vmatprep.subr.bf16.mxu0 0
        %1469 = vmatpush2.bf16.msra.mxu0 0
        %1470 = vmatprep.subr.bf16.mxu0 0
        %1471 = vmatpush2.bf16.msra.mxu0 0
        %1472 = vmatprep.subr.bf16.mxu0 0
        %1473 = vmatpush2.bf16.msra.mxu0 0
        %1474 = vmatprep.subr.bf16.mxu0 0
        %1475 = vmatpush2.bf16.msra.mxu0 0
        %1476 = vmatprep.mubr.bf16.mxu0 0
        %1477 = vmatmul.mubr.bf16.gmra.mxu0 %v1442
        %v1478 = vpop.f32.mrf.mxu0
        %v1479 = vadd.f32 %v1427, %v1478
        %v1480 = vpop.f32.mrf.mxu0
        %v1481 = vpop.f32.mrf.mxu0
        %v1482 = vpop.f32.mrf.mxu0
        %1483 = vdwg.mxu0
        %v1484 = vmax.f32 %v1479, 0.0
        %v1485 = vpack.c.bf16 %v1484, %v1484
        %v1486 = vld [vmem:[%s14] sm:$0xf]
        %v1487 = vld [vmem:[%s14 + $0x4] sm:$0xf]
        %v1488 = vld [vmem:[%s14 + $0x8] sm:$0xf]
        %v1489 = vld [vmem:[%s14 + $0xc] sm:$0xf]
        %v1490 = vld [vmem:[%s14 + $0x10] sm:$0xf]
        %v1491 = vld [vmem:[%s14 + $0x14] sm:$0xf]
        %v1492 = vld [vmem:[%s14 + $0x18] sm:$0xf]
        %v1493 = vld [vmem:[%s14 + $0x1c] sm:$0xf]
        %v1494 = vld [vmem:[%s15] sm:$0x1]
        %v1496 = vlaneseq
        %v1497 = vshrl.u32 %v1496, 7
        %v1498 = vsub.s32 0, %v1497
        %v1499 = vrot.slane %v1494, %v1498
        %v1509 = vunpack.c.l.b16 %v1486
        %v1510 = vunpack.c.l.b16 %v1487
        %v1511 = vunpack.c.l.b16 %v1488
        %v1512 = vunpack.c.l.b16 %v1489
        %v1513 = vunpack.c.l.b16 %v1490
        %v1514 = vunpack.c.l.b16 %v1491
        %v1515 = vunpack.c.l.b16 %v1492
        %v1516 = vunpack.c.l.b16 %v1493
        %v1517 = vpack.c.b16 %v1510, %v1509
        %v1518 = vpack.c.b16 %v1512, %v1511
        %v1519 = vpack.c.b16 %v1514, %v1513
        %v1520 = vpack.c.b16 %v1516, %v1515
        %vm1525 = vcmask 523264
        %v1527 = vsel %vm1525, %v1485, 0
        %1529 = vmatprep.subr.bf16.mxu0 0
        %1530 = vmatpush1.bf16.msra.mxu0 0
        %1531 = vmatprep.subr.bf16.mxu0 0
        %1532 = vmatpush1.bf16.msra.mxu0 0
        %1533 = vmatprep.subr.bf16.mxu0 0
        %1534 = vmatpush1.bf16.msra.mxu0 0
        %1535 = vmatprep.subr.bf16.mxu0 0
        %1536 = vmatpush1.bf16.msra.mxu0 0
        %1537 = vmatprep.subr.bf16.mxu0 0
        %1538 = vmatpush1.bf16.msra.mxu0 %v1520
        %1539 = vmatprep.subr.bf16.mxu0 0
        %1540 = vmatpush1.bf16.msra.mxu0 %v1519
        %1541 = vmatprep.subr.bf16.mxu0 0
        %1542 = vmatpush1.bf16.msra.mxu0 %v1518
        %1543 = vmatprep.subr.bf16.mxu0 0
        %1544 = vmatpush1.bf16.msra.mxu0 %v1517
        %1545 = vmatprep.subr.bf16.mxu0 0
        %1546 = vmatpush2.bf16.msra.mxu0 0
        %1547 = vmatprep.subr.bf16.mxu0 0
        %1548 = vmatpush2.bf16.msra.mxu0 0
        %1549 = vmatprep.subr.bf16.mxu0 0
        %1550 = vmatpush2.bf16.msra.mxu0 0
        %1551 = vmatprep.subr.bf16.mxu0 0
        %1552 = vmatpush2.bf16.msra.mxu0 0
        %1553 = vmatprep.subr.bf16.mxu0 0
        %1554 = vmatpush2.bf16.msra.mxu0 0
        %1555 = vmatprep.subr.bf16.mxu0 0
        %1556 = vmatpush2.bf16.msra.mxu0 0
        %1557 = vmatprep.subr.bf16.mxu0 0
        %1558 = vmatpush2.bf16.msra.mxu0 0
        %1559 = vmatprep.subr.bf16.mxu0 0
        %1560 = vmatpush2.bf16.msra.mxu0 0
        %1561 = vmatprep.mubr.bf16.mxu0 0
        %1562 = vmatmul.mubr.bf16.gmra.mxu0 %v1527
        %v1563 = vpop.f32.mrf.mxu0
        %v1564 = vadd.f32 %v1499, %v1563
        %v1565 = vpop.f32.mrf.mxu0
        %v1566 = vpop.f32.mrf.mxu0
        %v1567 = vpop.f32.mrf.mxu0
        %1568 = vdwg.mxu0
        %v1569 = vadd.f32 %v1387, %v1564
        %1570 = vst.msk [vmem:[%s637] sm:$0xff] %vm819, %v1569
        %s1571 = sand.u32 %s404, 1
        %s1572 = scalar_lea.sflag [#allocation6], %s1571
        %s1573 = sand.u32 %s404, 1
        %s1574 = smul.addr %s1573, 8
        %s1575 = scalar_lea.vmem [#allocation16], %s1574
        // Predicated region
        $region117: #{tpu_custom_call.1} parent=83 // pred_check
          %p1576 = pneg %p414
        $region118: #{tpu_custom_call.1} parent=83 // pred_check_branch
          %1578 = sbr.rel (%p1576) target = $region120
        $region119: #{tpu_custom_call.1} parent=83 // pred_region
          %s1580 = ssub.s32 128, 128
          %1581 = vsyncadd %s1572, %s1580
          %s1582 = sadd.s32 %s41, %s40
          %s1583 = smul.addr %s1582, 128
          %s1584 = scalar_lea.hbm %s16, %s1583
          %s1586 = sshll.u32 %s1575, 4
          %s1587 = int_to_ptr.vmem [resolvable:$true] %s1586
          %1589 = dma.vmem_to_hbm [thread:$0]  %s1587, 128, %s1584, %s1572
        $region120: #{tpu_custom_call.1} parent=83 // pred_fallthru
          _
      $region84: #{tpu_custom_call.1} parent=5 // pred_fallthru
        _
      %p1590 = scmp.le.s32.totalorder 2, %s31
      // Predicated region
      $region121: #{tpu_custom_call.1} parent=5 // pred_check
        %p1591 = pneg %p1590
      $region122: #{tpu_custom_call.1} parent=5 // pred_check_branch
        %1593 = sbr.rel (%p1591) target = $region124
      $region123: #{tpu_custom_call.1} parent=5 // pred_region
        %s1594 = ssub.s32 %s31, 2
        // Predicated region
        $region125: #{tpu_custom_call.1} parent=123 // pred_check
          %p1595 = pneg %p420
        $region126: #{tpu_custom_call.1} parent=123 // pred_check_branch
          %1597 = sbr.rel (%p1595) target = $region128
        $region127: #{tpu_custom_call.1} parent=123 // pred_region
          %s1598 = sand.u32 %s405, 1
          %s1599 = scalar_lea.sflag [#allocation6], %s1598
          %s1600 = sand.u32 %s405, 1
          %s1601 = smul.addr %s1600, 8
          %s1602 = scalar_lea.vmem [#allocation16], %s1601
          %1603 = dma.done %s1599, 128
        $region128: #{tpu_custom_call.1} parent=123 // pred_fallthru
          _
      $region124: #{tpu_custom_call.1} parent=5 // pred_fallthru
        _
    $region6: #{tpu_custom_call.1} parent=1 // loop_footer
      %s35 = sadd.s32 1, %s31
    $region7: #{tpu_custom_call.1} parent=1 // loop_footer_branch
      %30 = sbr.rel target = $region3
    $region8: #{tpu_custom_call.1} parent=1 // loop_exit
      _
    %1604 = vsyncpa [#allocation5], 1
    %s1605 = scalar_lea.sflag [#allocation5], 1
    %1606 = vsyncpa %s1605, 1
    %1607 = vsyncpa [#allocation8], 1
    %1608 = vsyncpa [#allocation11], 1
    %1609 = vsyncpa [#allocation14], 1
    %1610 = vsyncpa [#allocation6], 1
    %s1611 = scalar_lea.sflag [#allocation6], 1
    %1612 = vsyncpa %s1611, 1

</llo_original>
